<compile_context>
chip_gen: v5e
topology: v5e:2x2
jax: 0.10.0
libtpu: 0.0.40
codegen_flags: <defaults>
</compile_context>

<pallas_src>
import functools
import math

import jax
import jax.numpy as jnp
from jax import lax
from jax.experimental import pallas as pl
from jax.experimental.pallas import tpu as pltpu


# ----------------------------------------------------------------------------
# Pallas kernels
# ----------------------------------------------------------------------------
def _attn_ln_kernel(*refs, causal, has_mask, heads):
    """Flash-style fused MHSA + residual add + LayerNorm.

    Grid: (batch, q-tiles, kv-tiles); kv axis is the (last, 'arbitrary')
    reduction.  Refs:
      qres : (1, tq, E)           residual (natural layout, bf16)
      q    : (1, H, tq, D)        head-major query tile (bf16)
      kv   : (1, H, tk, D)        head-major key/value source tile (bf16)
      mask : (1, 1, tk)  (only when has_mask)  nonzero = keep
      wv/wk/wq : (D, D) bf16 shared head weights (wq pre-scaled by 1/sqrt(E))
      wo   : (H, D, E) bf16   fc_out weight (in,out) split by head rows
      bo/g/b : (1, E) f32
      out  : (1, tq, E) bf16
      scratch: qp (H,tq,D) bf16, m (H,tq,1) f32, l (H,tq,1) f32, acc (H,tq,D) f32
    """
    if has_mask:
        (qres_ref, q_ref, kv_ref, mask_ref, wv_ref, wk_ref, wq_ref, wo_ref,
         bo_ref, g_ref, b_ref, out_ref, qp_s, m_s, l_s, acc_s) = refs
    else:
        (qres_ref, q_ref, kv_ref, wv_ref, wk_ref, wq_ref, wo_ref,
         bo_ref, g_ref, b_ref, out_ref, qp_s, m_s, l_s, acc_s) = refs
        mask_ref = None

    ki = pl.program_id(2)
    nk = pl.num_programs(2)
    _, _, tq, dh = q_ref.shape
    tk = kv_ref.shape[2]

    # ---- per-(n, q-tile) init: project q once, reset online-softmax state ----
    @pl.when(ki == 0)
    def _init():
        # One MXU pass with M = H*tq (free reshape: last dim untouched),
        # instead of H tiny per-head matmuls.
        q2 = q_ref[0].reshape(heads * tq, dh).astype(jnp.bfloat16)
        qp = jnp.dot(q2, wq_ref[...], preferred_element_type=jnp.float32)
        qp_s[...] = qp.reshape(heads, tq, dh).astype(jnp.bfloat16)
        m_s[...] = jnp.full(m_s.shape, -jnp.inf, m_s.dtype)
        l_s[...] = jnp.zeros(l_s.shape, l_s.dtype)
        acc_s[...] = jnp.zeros(acc_s.shape, acc_s.dtype)

    # ---- project the current K/V tile: single (H*tk, D) @ (D, D) matmuls ----
    kv2 = kv_ref[0].reshape(heads * tk, dh).astype(jnp.bfloat16)
    kp = jnp.dot(kv2, wk_ref[...], preferred_element_type=jnp.float32)
    vp = jnp.dot(kv2, wv_ref[...], preferred_element_type=jnp.float32)
    kp = kp.reshape(heads, tk, dh).astype(jnp.bfloat16)
    vp = vp.reshape(heads, tk, dh).astype(jnp.bfloat16)

    # ---- all-head energies (1/sqrt(E) already folded into wq) ---------------
    s = jnp.einsum('hqd,hkd->hqk', qp_s[...], kp,
                   preferred_element_type=jnp.float32)           # (H, tq, tk)

    neg = jnp.float32(-1e20)
    if has_mask:
        keep = mask_ref[0] != 0.0                                # (1, tk)
        s = jnp.where(keep[None, :, :], s, neg)
    if causal:
        qi = pl.program_id(1)
        row = lax.broadcasted_iota(jnp.int32, (tq, tk), 0) + qi * tq
        col = lax.broadcasted_iota(jnp.int32, (tq, tk), 1) + ki * tk
        s = jnp.where((row >= col)[None, :, :], s, neg)

    # ---- online softmax update (f32 bookkeeping) -----------------------------
    m_prev = m_s[...]
    m_new = jnp.maximum(m_prev, jnp.max(s, axis=-1, keepdims=True))
    alpha = jnp.exp(m_prev - m_new)
    p = jnp.exp(s - m_new)
    l_s[...] = alpha * l_s[...] + jnp.sum(p, axis=-1, keepdims=True)
    acc_s[...] = alpha * acc_s[...] + jnp.einsum(
        'hqk,hkd->hqd', p.astype(jnp.bfloat16), vp,
        preferred_element_type=jnp.float32)
    m_s[...] = m_new

    # ---- finalize: output projection + residual + LayerNorm ------------------
    @pl.when(ki == nk - 1)
    def _fin():
        ctx = acc_s[...] * pl.reciprocal(l_s[...], approx=True)  # (H, tq, D)
        # concat(heads) @ Wo == sum_h ctx[h] @ Wo[h*D:(h+1)*D, :]; single
        # batched contraction then a tree-reduce over h (no unrolled add chain,
        # intermediate bounded by the tq tile).
        proj = jnp.einsum('hqd,hde->hqe', ctx.astype(jnp.bfloat16), wo_ref[...],
                          preferred_element_type=jnp.float32)    # (H, tq, E)
        out = jnp.sum(proj, axis=0) + bo_ref[0]
        x = out + qres_ref[0].astype(jnp.float32)
        mean = jnp.mean(x, axis=-1, keepdims=True)
        var = jnp.mean((x - mean) ** 2, axis=-1, keepdims=True)
        y = (x - mean) * lax.rsqrt(var + 1e-5)
        out_ref[0] = (y * g_ref[0] + b_ref[0]).astype(out_ref.dtype)


def _ffn_ln_kernel(x_ref, w1_ref, b1_ref, w2_ref, b2_ref, g_ref, beta_ref,
                   out_ref, acc_ref):
    """out = LayerNorm(ReLU(x @ W1 + b1) @ W2 + b2 + x).

    Grid (row-tiles, F-tiles); F is the last, 'arbitrary' reduction axis so
    weight blocks stay (E, tf)/(tf, E) and are never whole-F resident.
    """
    fi = pl.program_id(1)
    nf = pl.num_programs(1)

    @pl.when(fi == 0)
    def _init():
        acc_ref[...] = jnp.zeros(acc_ref.shape, acc_ref.dtype)

    x = x_ref[...]                                             # (tr, E) bf16
    h = jnp.dot(x, w1_ref[...], preferred_element_type=jnp.float32) + b1_ref[0]
    h = jnp.maximum(h, 0.0)
    acc_ref[...] += jnp.dot(h.astype(jnp.bfloat16), w2_ref[...],
                            preferred_element_type=jnp.float32)

    @pl.when(fi == nf - 1)
    def _fin():
        y = acc_ref[...] + b2_ref[0] + x_ref[...].astype(jnp.float32)
        mean = jnp.mean(y, axis=-1, keepdims=True)
        var = jnp.mean((y - mean) ** 2, axis=-1, keepdims=True)
        yn = (y - mean) * lax.rsqrt(var + 1e-5)
        out_ref[...] = (yn * g_ref[0] + beta_ref[0]).astype(out_ref.dtype)


def _linear_kernel(x_ref, w_ref, b_ref, out_ref):
    out_ref[...] = (jnp.dot(x_ref[...], w_ref[...],
                            preferred_element_type=jnp.float32) + b_ref[0])


# ----------------------------------------------------------------------------
# Wrappers around pallas_call
# ----------------------------------------------------------------------------
def _row_tile(rows):
    # Review fix: large row tiles (multiple of 8, capped at 256) instead of 8.
    return min(((rows + 7) // 8) * 8, 256)


def to_heads(x, heads):
    # Layout plumbing in XLA: (N, L, E) -> (N, H, L, D) head-major.
    N, L, E = x.shape
    D = E // heads
    return x.reshape(N, L, heads, D).transpose(0, 2, 1, 3)


def attention_ln(query, kv_hd, pad_mask, attn_p, gamma, beta, *, heads, causal):
    """Fused flash-style attention + residual + LayerNorm.

    query  : (N, Lq, E) bf16 natural layout (also the residual source).
    kv_hd  : (N, H, Lk, D) head-major K/V source, or None for self-attention
             (then the head-major query array is reused -> one fewer stream).
    pad_mask : (N, 1, Lk) f32 key-padding mask (nonzero = keep) or None.
    """
    N, Lq, E = query.shape
    D = E // heads
    q_hd = to_heads(query, heads)
    if kv_hd is None:          # self-attention: alias K/V to the query stream
        kv_hd = q_hd
    Lk = kv_hd.shape[2]
    has_mask = pad_mask is not None

    # TODO(synk): ragged Lq/Lk tiles (non-divisible) fall back to full-length.
    tq = 256 if Lq % 256 == 0 else Lq
    tk = 512 if Lk % 512 == 0 else Lk
    nq, nk = Lq // tq, Lk // tk

    kern = functools.partial(_attn_ln_kernel, causal=causal, has_mask=has_mask,
                             heads=heads)

    in_specs = [
        pl.BlockSpec((1, tq, E), lambda n, qi, ki: (n, qi, 0)),            # residual
        pl.BlockSpec((1, heads, tq, D), lambda n, qi, ki: (n, 0, qi, 0)),  # q head-major
        pl.BlockSpec((1, heads, tk, D), lambda n, qi, ki: (n, 0, ki, 0)),  # k/v tile
    ]
    inputs = [query, q_hd, kv_hd]
    if has_mask:
        in_specs.append(pl.BlockSpec((1, 1, tk), lambda n, qi, ki: (n, 0, ki)))
        inputs.append(pad_mask)
    in_specs += [
        pl.BlockSpec((D, D), lambda n, qi, ki: (0, 0)),           # wv
        pl.BlockSpec((D, D), lambda n, qi, ki: (0, 0)),           # wk
        pl.BlockSpec((D, D), lambda n, qi, ki: (0, 0)),           # wq (scaled)
        pl.BlockSpec((heads, D, E), lambda n, qi, ki: (0, 0, 0)),  # wo (row-split)
        pl.BlockSpec((1, E), lambda n, qi, ki: (0, 0)),           # bo
        pl.BlockSpec((1, E), lambda n, qi, ki: (0, 0)),           # ln gamma
        pl.BlockSpec((1, E), lambda n, qi, ki: (0, 0)),           # ln beta
    ]
    inputs += [attn_p["wv"], attn_p["wk"], attn_p["wq"], attn_p["wo"],
               attn_p["bo"], gamma, beta]

    return pl.pallas_call(
        kern,
        out_shape=jax.ShapeDtypeStruct((N, Lq, E), jnp.bfloat16),
        grid=(N, nq, nk),
        in_specs=in_specs,
        out_specs=pl.BlockSpec((1, tq, E), lambda n, qi, ki: (n, qi, 0)),
        scratch_shapes=[
            pltpu.VMEM((heads, tq, D), jnp.bfloat16),   # cached projected q
            pltpu.VMEM((heads, tq, 1), jnp.float32),    # running max
            pltpu.VMEM((heads, tq, 1), jnp.float32),    # running denom
            pltpu.VMEM((heads, tq, D), jnp.float32),    # context accumulator
        ],
        compiler_params=pltpu.CompilerParams(
            dimension_semantics=("parallel", "parallel", "arbitrary"),
            # 48 MiB: safe under v7x's 64 MiB physical VMEM; v5e/v6e (128 MiB)
            # can raise this for larger tq/tk tiles.
            vmem_limit_bytes=48 * 1024 * 1024),
    )(*inputs)


def ffn_ln(x, ff_p, gamma, beta):
    """Fused FFN + residual + LayerNorm; rows parallel, hidden F reduced."""
    N, L, E = x.shape
    R = N * L
    F = ff_p["w1"].shape[1]
    tr = _row_tile(R)
    tf = 512 if F % 512 == 0 else F       # TODO(synk): ragged F tiles
    out = pl.pallas_call(
        _ffn_ln_kernel,
        out_shape=jax.ShapeDtypeStruct((R, E), jnp.bfloat16),
        grid=(pl.cdiv(R, tr), F // tf),
        in_specs=[
            pl.BlockSpec((tr, E), lambda i, f: (i, 0)),
            pl.BlockSpec((E, tf), lambda i, f: (0, f)),
            pl.BlockSpec((1, tf), lambda i, f: (0, f)),
            pl.BlockSpec((tf, E), lambda i, f: (f, 0)),
            pl.BlockSpec((1, E), lambda i, f: (0, 0)),
            pl.BlockSpec((1, E), lambda i, f: (0, 0)),
            pl.BlockSpec((1, E), lambda i, f: (0, 0)),
        ],
        out_specs=pl.BlockSpec((tr, E), lambda i, f: (i, 0)),
        scratch_shapes=[pltpu.VMEM((tr, E), jnp.float32)],
        compiler_params=pltpu.CompilerParams(
            dimension_semantics=("parallel", "arbitrary"),
            vmem_limit_bytes=48 * 1024 * 1024),
    )(x.reshape(R, E), ff_p["w1"], ff_p["b1"], ff_p["w2"], ff_p["b2"],
      gamma, beta)
    return out.reshape(N, L, E)


def linear_out(x, w_pad, b_pad, vocab):
    """Final vocab projection; vocab padded to 128 lanes, tiled rows/vocab."""
    N, L, E = x.shape
    R = N * L
    Vp = w_pad.shape[1]
    tr = _row_tile(R)
    tv = 512 if Vp % 512 == 0 else (256 if Vp % 256 == 0 else 128)
    out = pl.pallas_call(
        _linear_kernel,
        out_shape=jax.ShapeDtypeStruct((R, Vp), jnp.float32),
        grid=(pl.cdiv(R, tr), Vp // tv),
        in_specs=[
            pl.BlockSpec((tr, E), lambda i, j: (i, 0)),
            pl.BlockSpec((E, tv), lambda i, j: (0, j)),
            pl.BlockSpec((1, tv), lambda i, j: (0, j)),
        ],
        out_specs=pl.BlockSpec((tr, tv), lambda i, j: (i, j)),
        compiler_params=pltpu.CompilerParams(
            dimension_semantics=("parallel", "parallel"),
            vmem_limit_bytes=48 * 1024 * 1024),
    )(x.reshape(R, E), w_pad, b_pad)
    if Vp != vocab:
        # TODO(synk): avoid this extra HBM pass over the logits by emitting an
        # unpadded output with a partial last column block or fusing the slice
        # into the consumer.
        out = out[:, :vocab]
    return out.reshape(N, L, vocab)


# ----------------------------------------------------------------------------
# Model composition (dropout p=0 -> identity, omitted)
# ----------------------------------------------------------------------------
def transformer_block(kv_hd, query, mask, p, heads):
    # kv_hd None -> self-attention (K/V alias the query stream inside).
    x = attention_ln(query, kv_hd, mask, p["attn"], p["ln1_g"], p["ln1_b"],
                     heads=heads, causal=False)
    return ffn_ln(x, p["ff"], p["ln2_g"], p["ln2_b"])


def decode_block(x, enc_hd, src_mask, p, heads):
    # Causal self-attention: no pad mask array at all (causal-only variant).
    query = attention_ln(x, None, None, p["attn"], p["ln_g"], p["ln_b"],
                         heads=heads, causal=True)
    return transformer_block(enc_hd, query, src_mask, p["tb"], heads)


def encoder_forward(src_tokens, src_mask, p, heads):
    N, L = src_tokens.shape
    positions = jnp.arange(L)[None, :]
    # TODO(synk): embedding lookups are gather ops; kept as plain-JAX glue.
    out = (jnp.take(p["word_emb"], src_tokens, axis=0) +
           jnp.take(p["pos_emb"], positions, axis=0)).astype(jnp.bfloat16)
    for layer in p["layers"]:
        out = transformer_block(None, out, src_mask, layer, heads)
    return out


def decoder_forward(tgt_tokens, enc_out, src_mask, p, heads, vocab):
    N, L = tgt_tokens.shape
    positions = jnp.arange(L)[None, :]
    x = (jnp.take(p["word_emb"], tgt_tokens, axis=0) +
         jnp.take(p["pos_emb"], positions, axis=0)).astype(jnp.bfloat16)
    # Hoisted: one head-major transpose of enc_out reused by every layer.
    enc_hd = to_heads(enc_out, heads)
    for layer in p["layers"]:
        x = decode_block(x, enc_hd, src_mask, layer, heads)
    return linear_out(x, p["fc_w"], p["fc_b"], vocab)


def transformer_forward(src, target, prep, cfg):
    heads = cfg["heads"]
    # src padding mask: (N, 1, Ls); the causal target mask is built in-kernel.
    src_mask = (src != cfg["src_pad_idx"]).astype(jnp.float32)[:, None, :]
    enc = encoder_forward(src, src_mask, prep["encoder"], heads)
    return decoder_forward(target, enc, src_mask, prep["decoder"], heads,
                           cfg["tgt_vocab"])


# ----------------------------------------------------------------------------
# Deterministic parameter init + one-time kernel-layout preparation
# ----------------------------------------------------------------------------
def _lin(key, out_dim, in_dim, bias=True, scale=0.05):
    kw, kb = jax.random.split(key)
    w = jax.random.normal(kw, (out_dim, in_dim), jnp.float32) * scale
    b = jax.random.normal(kb, (out_dim,), jnp.float32) * 0.01 if bias else None
    return w, b


def init_attention(key, embed_size, heads):
    D = embed_size // heads
    ks = jax.random.split(key, 4)
    wv, _ = _lin(ks[0], D, D, bias=False)
    wk, _ = _lin(ks[1], D, D, bias=False)
    wq, _ = _lin(ks[2], D, D, bias=False)
    wo, bo = _lin(ks[3], embed_size, embed_size)
    return {"wv": wv, "wk": wk, "wq": wq, "wo": wo, "bo": bo}


def init_tblock(key, embed_size, heads, fexp):
    ks = jax.random.split(key, 3)
    w1, b1 = _lin(ks[1], fexp * embed_size, embed_size)
    w2, b2 = _lin(ks[2], embed_size, fexp * embed_size)
    return {"attn": init_attention(ks[0], embed_size, heads),
            "ln1_g": jnp.ones((embed_size,), jnp.float32),
            "ln1_b": jnp.zeros((embed_size,), jnp.float32),
            "ln2_g": jnp.ones((embed_size,), jnp.float32),
            "ln2_b": jnp.zeros((embed_size,), jnp.float32),
            "ff": {"w1": w1, "b1": b1, "w2": w2, "b2": b2}}


def init_decode_block(key, embed_size, heads, fexp):
    ks = jax.random.split(key, 2)
    return {"attn": init_attention(ks[0], embed_size, heads),
            "ln_g": jnp.ones((embed_size,), jnp.float32),
            "ln_b": jnp.zeros((embed_size,), jnp.float32),
            "tb": init_tblock(ks[1], embed_size, heads, fexp)}


def init_params(key, cfg):
    E, H, L, F = (cfg["embed_size"], cfg["heads"],
                  cfg["num_layers"], cfg["forward_expansion"])
    k_enc, k_dec = jax.random.split(key)
    ke = jax.random.split(k_enc, L + 2)
    kd = jax.random.split(k_dec, L + 3)
    enc = {"word_emb": jax.random.normal(ke[0], (cfg["src_vocab"], E)) * 0.05,
           "pos_emb": jax.random.normal(ke[1], (cfg["max_length"], E)) * 0.05,
           "layers": [init_tblock(ke[2 + i], E, H, F) for i in range(L)]}
    fc_w, fc_b = _lin(kd[2], cfg["tgt_vocab"], E)
    dec = {"word_emb": jax.random.normal(kd[0], (cfg["tgt_vocab"], E)) * 0.05,
           "pos_emb": jax.random.normal(kd[1], (cfg["max_length"], E)) * 0.05,
           "layers": [init_decode_block(kd[3 + i], E, H, F) for i in range(L)],
           "fc_w": fc_w, "fc_b": fc_b}
    return {"encoder": enc, "decoder": dec}


def prepare_params(params, cfg):
    """One-time conversion to kernel layout: (in,out) transposes, bf16 MXU
    operands, 1/sqrt(E) folded into wq, single (D,D) shared head weights
    (no per-head broadcast), fc_out row-split by head, vocab padded to a
    128-lane multiple."""
    E, H = cfg["embed_size"], cfg["heads"]
    D = E // H
    scale = 1.0 / math.sqrt(float(E))

    def prep_attn(a):
        return {
            "wq": (a["wq"].T * scale).astype(jnp.bfloat16),        # (D, D)
            "wk": a["wk"].T.astype(jnp.bfloat16),                  # (D, D)
            "wv": a["wv"].T.astype(jnp.bfloat16),                  # (D, D)
            "wo": a["wo"].T.reshape(H, D, E).astype(jnp.bfloat16),  # (H, D, E)
            "bo": a["bo"][None, :],
        }

    def prep_ff(f):
        return {"w1": f["w1"].T.astype(jnp.bfloat16), "b1": f["b1"][None, :],
                "w2": f["w2"].T.astype(jnp.bfloat16), "b2": f["b2"][None, :]}

    def prep_tblock(t):
        return {"attn": prep_attn(t["attn"]),
                "ln1_g": t["ln1_g"][None, :], "ln1_b": t["ln1_b"][None, :],
                "ln2_g": t["ln2_g"][None, :], "ln2_b": t["ln2_b"][None, :],
                "ff": prep_ff(t["ff"])}

    def prep_dblock(d):
        return {"attn": prep_attn(d["attn"]),
                "ln_g": d["ln_g"][None, :], "ln_b": d["ln_b"][None, :],
                "tb": prep_tblock(d["tb"])}

    enc_p, dec_p = params["encoder"], params["decoder"]
    V = cfg["tgt_vocab"]
    Vp = ((V + 127) // 128) * 128
    fc_w = jnp.zeros((E, Vp), jnp.bfloat16).at[:, :V].set(
        dec_p["fc_w"].T.astype(jnp.bfloat16))
    fc_b = jnp.zeros((1, Vp), jnp.float32).at[0, :V].set(dec_p["fc_b"])

    enc = {"word_emb": enc_p["word_emb"], "pos_emb": enc_p["pos_emb"],
           "layers": [prep_tblock(l) for l in enc_p["layers"]]}
    dec = {"word_emb": dec_p["word_emb"], "pos_emb": dec_p["pos_emb"],
           "layers": [prep_dblock(l) for l in dec_p["layers"]],
           "fc_w": fc_w, "fc_b": fc_b}
    return {"encoder": enc, "decoder": dec}


# ----------------------------------------------------------------------------
if __name__ == "__main__":
    cfg = dict(src_vocab=16, tgt_vocab=18, src_pad_idx=0, tgt_pad_idx=0,
               embed_size=32, heads=4, num_layers=2, forward_expansion=2,
               max_length=16)

    key = jax.random.PRNGKey(0)
    kp, ks, kt = jax.random.split(key, 3)
    params = init_params(kp, cfg)
    prep = prepare_params(params, cfg)

    N, Ls, Lt = 2, 8, 8
    src = jax.random.randint(ks, (N, Ls), 0, cfg["src_vocab"], dtype=jnp.int32)
    target = jax.random.randint(kt, (N, Lt), 0, cfg["tgt_vocab"], dtype=jnp.int32)

    fwd = jax.jit(functools.partial(transformer_forward, cfg=cfg))
    out = fwd(src, target, prep)
    out = jax.block_until_ready(out)
    assert out.shape == (N, Lt, cfg["tgt_vocab"])
    print("KERNEL_OK")
</pallas_src>

<mosaic_0001>
module attributes {stable_mosaic.version = 11 : i64} {
  func.func @_attn_ln_kernel(%arg0: i32, %arg1: i32, %arg2: i32, %arg3: memref<1x8x32xbf16, #tpu.memory_space<vmem>>, %arg4: memref<1x4x8x8xbf16, #tpu.memory_space<vmem>>, %arg5: memref<1x4x8x8xbf16, #tpu.memory_space<vmem>>, %arg6: memref<8x8xbf16, #tpu.memory_space<vmem>>, %arg7: memref<8x8xbf16, #tpu.memory_space<vmem>>, %arg8: memref<8x8xbf16, #tpu.memory_space<vmem>>, %arg9: memref<4x8x32xbf16, #tpu.memory_space<vmem>>, %arg10: memref<1x32xf32, #tpu.memory_space<vmem>>, %arg11: memref<1x32xf32, #tpu.memory_space<vmem>>, %arg12: memref<1x32xf32, #tpu.memory_space<vmem>>, %arg13: memref<1x8x32xbf16, #tpu.memory_space<vmem>>, %arg14: memref<4x8x8xbf16, #tpu.memory_space<vmem>>, %arg15: memref<4x8x1xf32, #tpu.memory_space<vmem>>, %arg16: memref<4x8x1xf32, #tpu.memory_space<vmem>>, %arg17: memref<4x8x8xf32, #tpu.memory_space<vmem>>) attributes {dimension_semantics = [#tpu.dimension_semantics<parallel>, #tpu.dimension_semantics<parallel>, #tpu.dimension_semantics<arbitrary>], iteration_bounds = array<i64: 2, 1, 1>, scalar_prefetch = 0 : i64, scratch_operands = 4 : i64, tpu.core_type = #tpu.core_type<tc>, window_params = [{transform_indices = @transform_0, window_bounds = array<i64: 1, 8, 32>}, {transform_indices = @transform_1, window_bounds = array<i64: 1, 4, 8, 8>}, {transform_indices = @transform_2, window_bounds = array<i64: 1, 4, 8, 8>}, {pipeline_mode = #tpu.pipeline_mode<synchronous>, transform_indices = @transform_3, window_bounds = array<i64: 8, 8>}, {pipeline_mode = #tpu.pipeline_mode<synchronous>, transform_indices = @transform_4, window_bounds = array<i64: 8, 8>}, {pipeline_mode = #tpu.pipeline_mode<synchronous>, transform_indices = @transform_5, window_bounds = array<i64: 8, 8>}, {pipeline_mode = #tpu.pipeline_mode<synchronous>, transform_indices = @transform_6, window_bounds = array<i64: 4, 8, 32>}, {pipeline_mode = #tpu.pipeline_mode<synchronous>, transform_indices = @transform_7, window_bounds = array<i64: 1, 32>}, {pipeline_mode = #tpu.pipeline_mode<synchronous>, transform_indices = @transform_8, window_bounds = array<i64: 1, 32>}, {pipeline_mode = #tpu.pipeline_mode<synchronous>, transform_indices = @transform_9, window_bounds = array<i64: 1, 32>}, {transform_indices = @transform_10, window_bounds = array<i64: 1, 8, 32>}]} {
    %c0_i32 = arith.constant 0 : i32
    %0 = arith.cmpi eq, %arg2, %c0_i32 : i32
    %1 = arith.extui %0 : i1 to i32
    %c0_i32_0 = arith.constant 0 : i32
    %2 = arith.cmpi ne, %1, %c0_i32_0 : i32
    scf.if %2 {
      %c0_38 = arith.constant 0 : index
      %c0_39 = arith.constant 0 : index
      %c0_40 = arith.constant 0 : index
      %c0_41 = arith.constant 0 : index
      %56 = vector.load %arg4[%c0_38, %c0_39, %c0_40, %c0_41] : memref<1x4x8x8xbf16, #tpu.memory_space<vmem>>, vector<1x4x8x8xbf16>
      %57 = vector.shape_cast %56 : vector<1x4x8x8xbf16> to vector<4x8x8xbf16>
      %58 = vector.shape_cast %57 : vector<4x8x8xbf16> to vector<32x8xbf16>
      %c0_42 = arith.constant 0 : index
      %c0_43 = arith.constant 0 : index
      %59 = vector.load %arg8[%c0_42, %c0_43] : memref<8x8xbf16, #tpu.memory_space<vmem>>, vector<8x8xbf16>
      %cst_44 = arith.constant dense<0.000000e+00> : vector<32x8xf32>
      %60 = tpu.matmul %58, %59, %cst_44 {dimension_numbers = #tpu.dot_dimension_numbers<[1], [0], [0], [1], [0, 0, 1, 1], [], []>} : vector<32x8xbf16>, vector<8x8xbf16>, vector<32x8xf32> -> vector<32x8xf32>
      %61 = vector.shape_cast %60 : vector<32x8xf32> to vector<4x8x8xf32>
      %62 = arith.truncf %61 : vector<4x8x8xf32> to vector<4x8x8xbf16>
      %c0_45 = arith.constant 0 : index
      %c0_46 = arith.constant 0 : index
      %c0_47 = arith.constant 0 : index
      %63 = vector.load %arg14[%c0_45, %c0_46, %c0_47] : memref<4x8x8xbf16, #tpu.memory_space<vmem>>, vector<4x8x8xbf16>
      tpu.vector_store %arg14[%c0_45, %c0_46, %c0_47], %62 {strides = array<i32>} : memref<4x8x8xbf16, #tpu.memory_space<vmem>>, vector<4x8x8xbf16>,
      %cst_48 = arith.constant 0xFF800000 : f32
      %64 = vector.broadcast %cst_48 : f32 to vector<4x8x1xf32>
      %c0_49 = arith.constant 0 : index
      %c0_50 = arith.constant 0 : index
      %c0_51 = arith.constant 0 : index
      %65 = vector.load %arg15[%c0_49, %c0_50, %c0_51] : memref<4x8x1xf32, #tpu.memory_space<vmem>>, vector<4x8x1xf32>
      tpu.vector_store %arg15[%c0_49, %c0_50, %c0_51], %64 {strides = array<i32>} : memref<4x8x1xf32, #tpu.memory_space<vmem>>, vector<4x8x1xf32>,
      %cst_52 = arith.constant 0.000000e+00 : f32
      %66 = vector.broadcast %cst_52 : f32 to vector<4x8x1xf32>
      %c0_53 = arith.constant 0 : index
      %c0_54 = arith.constant 0 : index
      %c0_55 = arith.constant 0 : index
      %67 = vector.load %arg16[%c0_53, %c0_54, %c0_55] : memref<4x8x1xf32, #tpu.memory_space<vmem>>, vector<4x8x1xf32>
      tpu.vector_store %arg16[%c0_53, %c0_54, %c0_55], %66 {strides = array<i32>} : memref<4x8x1xf32, #tpu.memory_space<vmem>>, vector<4x8x1xf32>,
      %cst_56 = arith.constant 0.000000e+00 : f32
      %68 = vector.broadcast %cst_56 : f32 to vector<4x8x8xf32>
      %c0_57 = arith.constant 0 : index
      %c0_58 = arith.constant 0 : index
      %c0_59 = arith.constant 0 : index
      %69 = vector.load %arg17[%c0_57, %c0_58, %c0_59] : memref<4x8x8xf32, #tpu.memory_space<vmem>>, vector<4x8x8xf32>
      tpu.vector_store %arg17[%c0_57, %c0_58, %c0_59], %68 {strides = array<i32>} : memref<4x8x8xf32, #tpu.memory_space<vmem>>, vector<4x8x8xf32>,
    } else {
    }
    %c0 = arith.constant 0 : index
    %c0_1 = arith.constant 0 : index
    %c0_2 = arith.constant 0 : index
    %c0_3 = arith.constant 0 : index
    %3 = vector.load %arg5[%c0, %c0_1, %c0_2, %c0_3] : memref<1x4x8x8xbf16, #tpu.memory_space<vmem>>, vector<1x4x8x8xbf16>
    %4 = vector.shape_cast %3 : vector<1x4x8x8xbf16> to vector<4x8x8xbf16>
    %5 = vector.shape_cast %4 : vector<4x8x8xbf16> to vector<32x8xbf16>
    %c0_4 = arith.constant 0 : index
    %c0_5 = arith.constant 0 : index
    %6 = vector.load %arg7[%c0_4, %c0_5] : memref<8x8xbf16, #tpu.memory_space<vmem>>, vector<8x8xbf16>
    %cst = arith.constant dense<0.000000e+00> : vector<32x8xf32>
    %7 = tpu.matmul %5, %6, %cst {dimension_numbers = #tpu.dot_dimension_numbers<[1], [0], [0], [1], [0, 0, 1, 1], [], []>} : vector<32x8xbf16>, vector<8x8xbf16>, vector<32x8xf32> -> vector<32x8xf32>
    %c0_6 = arith.constant 0 : index
    %c0_7 = arith.constant 0 : index
    %8 = vector.load %arg6[%c0_6, %c0_7] : memref<8x8xbf16, #tpu.memory_space<vmem>>, vector<8x8xbf16>
    %cst_8 = arith.constant dense<0.000000e+00> : vector<32x8xf32>
    %9 = tpu.matmul %5, %8, %cst_8 {dimension_numbers = #tpu.dot_dimension_numbers<[1], [0], [0], [1], [0, 0, 1, 1], [], []>} : vector<32x8xbf16>, vector<8x8xbf16>, vector<32x8xf32> -> vector<32x8xf32>
    %10 = vector.shape_cast %7 : vector<32x8xf32> to vector<4x8x8xf32>
    %11 = arith.truncf %10 : vector<4x8x8xf32> to vector<4x8x8xbf16>
    %12 = vector.shape_cast %9 : vector<32x8xf32> to vector<4x8x8xf32>
    %13 = arith.truncf %12 : vector<4x8x8xf32> to vector<4x8x8xbf16>
    %c0_9 = arith.constant 0 : index
    %c0_10 = arith.constant 0 : index
    %c0_11 = arith.constant 0 : index
    %14 = vector.load %arg14[%c0_9, %c0_10, %c0_11] : memref<4x8x8xbf16, #tpu.memory_space<vmem>>, vector<4x8x8xbf16>
    "tpu.trace_start"() <{level = 10 : i32, message = "hqd,hkd->hqk"}> : () -> ()
    %cst_12 = arith.constant dense<0.000000e+00> : vector<4x8x8xf32>
    %15 = tpu.matmul %14, %11, %cst_12 {dimension_numbers = #tpu.dot_dimension_numbers<[2], [2], [1], [1], [0, 0, 0, 1, 1, 1], [0], [0]>} : vector<4x8x8xbf16>, vector<4x8x8xbf16>, vector<4x8x8xf32> -> vector<4x8x8xf32>
    "tpu.trace_stop"() : () -> ()
    %16 = tpu.iota {dimensions = array<i32: 0>} : vector<8x8xi32>
    %c8_i32 = arith.constant 8 : i32
    %17 = arith.muli %arg1, %c8_i32 : i32
    %18 = vector.broadcast %17 : i32 to vector<8x8xi32>
    %19 = arith.addi %16, %18 : vector<8x8xi32>
    %20 = tpu.iota {dimensions = array<i32: 1>} : vector<8x8xi32>
    %c8_i32_13 = arith.constant 8 : i32
    %21 = arith.muli %arg2, %c8_i32_13 : i32
    %22 = vector.broadcast %21 : i32 to vector<8x8xi32>
    %23 = arith.addi %20, %22 : vector<8x8xi32>
    %24 = arith.cmpi sge, %19, %23 : vector<8x8xi32>
    %25 = vector.shape_cast %24 : vector<8x8xi1> to vector<1x8x8xi1>
    %cst_14 = arith.constant -1.000000e+20 : f32
    %26 = vector.shape_cast %25 : vector<1x8x8xi1> to vector<1x8x8xi1>
    %27 = vector.broadcast %26 : vector<1x8x8xi1> to vector<4x8x8xi1>
    %28 = vector.broadcast %cst_14 : f32 to vector<4x8x8xf32>
    %29 = arith.select %27, %15, %28 : vector<4x8x8xi1>, vector<4x8x8xf32>
    %c0_15 = arith.constant 0 : index
    %c0_16 = arith.constant 0 : index
    %c0_17 = arith.constant 0 : index
    %30 = vector.load %arg15[%c0_15, %c0_16, %c0_17] : memref<4x8x1xf32, #tpu.memory_space<vmem>>, vector<4x8x1xf32>
    %cst_18 = arith.constant dense<0xFF800000> : vector<4x8xf32>
    %31 = vector.multi_reduction <maximumf>, %29, %cst_18 [2] : vector<4x8x8xf32> to vector<4x8xf32>
    %32 = vector.shape_cast %31 : vector<4x8xf32> to vector<4x8x1xf32>
    %33 = arith.maximumf %30, %32 : vector<4x8x1xf32>
    %34 = arith.subf %30, %33 : vector<4x8x1xf32>
    %35 = math.exp %34 : vector<4x8x1xf32>
    %36 = vector.broadcast %33 : vector<4x8x1xf32> to vector<4x8x8xf32>
    %37 = arith.subf %29, %36 : vector<4x8x8xf32>
    %38 = math.exp %37 : vector<4x8x8xf32>
    %c0_19 = arith.constant 0 : index
    %c0_20 = arith.constant 0 : index
    %c0_21 = arith.constant 0 : index
    %39 = vector.load %arg16[%c0_19, %c0_20, %c0_21] : memref<4x8x1xf32, #tpu.memory_space<vmem>>, vector<4x8x1xf32>
    %40 = arith.mulf %35, %39 : vector<4x8x1xf32>
    %cst_22 = arith.constant dense<0.000000e+00> : vector<4x8xf32>
    %41 = vector.multi_reduction <add>, %38, %cst_22 [2] : vector<4x8x8xf32> to vector<4x8xf32>
    %42 = vector.shape_cast %41 : vector<4x8xf32> to vector<4x8x1xf32>
    %43 = arith.addf %40, %42 : vector<4x8x1xf32>
    %c0_23 = arith.constant 0 : index
    %c0_24 = arith.constant 0 : index
    %c0_25 = arith.constant 0 : index
    %44 = vector.load %arg16[%c0_23, %c0_24, %c0_25] : memref<4x8x1xf32, #tpu.memory_space<vmem>>, vector<4x8x1xf32>
    tpu.vector_store %arg16[%c0_23, %c0_24, %c0_25], %43 {strides = array<i32>} : memref<4x8x1xf32, #tpu.memory_space<vmem>>, vector<4x8x1xf32>,
    %c0_26 = arith.constant 0 : index
    %c0_27 = arith.constant 0 : index
    %c0_28 = arith.constant 0 : index
    %45 = vector.load %arg17[%c0_26, %c0_27, %c0_28] : memref<4x8x8xf32, #tpu.memory_space<vmem>>, vector<4x8x8xf32>
    %46 = vector.broadcast %35 : vector<4x8x1xf32> to vector<4x8x8xf32>
    %47 = arith.mulf %46, %45 : vector<4x8x8xf32>
    %48 = arith.truncf %38 : vector<4x8x8xf32> to vector<4x8x8xbf16>
    "tpu.trace_start"() <{level = 10 : i32, message = "hqk,hkd->hqd"}> : () -> ()
    %cst_29 = arith.constant dense<0.000000e+00> : vector<4x8x8xf32>
    %49 = tpu.matmul %48, %13, %cst_29 {dimension_numbers = #tpu.dot_dimension_numbers<[2], [1], [1], [2], [0, 0, 0, 1, 1, 2], [0], [0]>} : vector<4x8x8xbf16>, vector<4x8x8xbf16>, vector<4x8x8xf32> -> vector<4x8x8xf32>
    "tpu.trace_stop"() : () -> ()
    %50 = arith.addf %47, %49 : vector<4x8x8xf32>
    %c0_30 = arith.constant 0 : index
    %c0_31 = arith.constant 0 : index
    %c0_32 = arith.constant 0 : index
    %51 = vector.load %arg17[%c0_30, %c0_31, %c0_32] : memref<4x8x8xf32, #tpu.memory_space<vmem>>, vector<4x8x8xf32>
    tpu.vector_store %arg17[%c0_30, %c0_31, %c0_32], %50 {strides = array<i32>} : memref<4x8x8xf32, #tpu.memory_space<vmem>>, vector<4x8x8xf32>,
    %c0_33 = arith.constant 0 : index
    %c0_34 = arith.constant 0 : index
    %c0_35 = arith.constant 0 : index
    %52 = vector.load %arg15[%c0_33, %c0_34, %c0_35] : memref<4x8x1xf32, #tpu.memory_space<vmem>>, vector<4x8x1xf32>
    tpu.vector_store %arg15[%c0_33, %c0_34, %c0_35], %33 {strides = array<i32>} : memref<4x8x1xf32, #tpu.memory_space<vmem>>, vector<4x8x1xf32>,
    %c0_i32_36 = arith.constant 0 : i32
    %53 = arith.cmpi eq, %arg2, %c0_i32_36 : i32
    %54 = arith.extui %53 : i1 to i32
    %c0_i32_37 = arith.constant 0 : i32
    %55 = arith.cmpi ne, %54, %c0_i32_37 : i32
    scf.if %55 {
      %c0_38 = arith.constant 0 : index
      %c0_39 = arith.constant 0 : index
      %c0_40 = arith.constant 0 : index
      %56 = vector.load %arg17[%c0_38, %c0_39, %c0_40] : memref<4x8x8xf32, #tpu.memory_space<vmem>>, vector<4x8x8xf32>
      %c0_41 = arith.constant 0 : index
      %c0_42 = arith.constant 0 : index
      %c0_43 = arith.constant 0 : index
      %57 = vector.load %arg16[%c0_41, %c0_42, %c0_43] : memref<4x8x1xf32, #tpu.memory_space<vmem>>, vector<4x8x1xf32>
      %58 = tpu.reciprocal %57 {approx = true} : vector<4x8x1xf32> -> vector<4x8x1xf32>
      %59 = vector.broadcast %58 : vector<4x8x1xf32> to vector<4x8x8xf32>
      %60 = arith.mulf %56, %59 : vector<4x8x8xf32>
      %61 = arith.truncf %60 : vector<4x8x8xf32> to vector<4x8x8xbf16>
      %c0_44 = arith.constant 0 : index
      %c0_45 = arith.constant 0 : index
      %c0_46 = arith.constant 0 : index
      %62 = vector.load %arg9[%c0_44, %c0_45, %c0_46] : memref<4x8x32xbf16, #tpu.memory_space<vmem>>, vector<4x8x32xbf16>
      "tpu.trace_start"() <{level = 10 : i32, message = "hqd,hde->hqe"}> : () -> ()
      %cst_47 = arith.constant dense<0.000000e+00> : vector<4x8x32xf32>
      %63 = tpu.matmul %61, %62, %cst_47 {dimension_numbers = #tpu.dot_dimension_numbers<[2], [1], [1], [2], [0, 0, 0, 1, 1, 2], [0], [0]>} : vector<4x8x8xbf16>, vector<4x8x32xbf16>, vector<4x8x32xf32> -> vector<4x8x32xf32>
      "tpu.trace_stop"() : () -> ()
      %cst_48 = arith.constant dense<0.000000e+00> : vector<8x32xf32>
      %64 = vector.multi_reduction <add>, %63, %cst_48 [0] : vector<4x8x32xf32> to vector<8x32xf32>
      %c0_49 = arith.constant 0 : index
      %c0_50 = arith.constant 0 : index
      %65 = vector.load %arg10[%c0_49, %c0_50] : memref<1x32xf32, #tpu.memory_space<vmem>>, vector<1x32xf32>
      %66 = vector.shape_cast %65 : vector<1x32xf32> to vector<32xf32>
      %67 = vector.shape_cast %66 : vector<32xf32> to vector<1x32xf32>
      %68 = vector.broadcast %67 : vector<1x32xf32> to vector<8x32xf32>
      %69 = arith.addf %64, %68 : vector<8x32xf32>
      %c0_51 = arith.constant 0 : index
      %c0_52 = arith.constant 0 : index
      %c0_53 = arith.constant 0 : index
      %70 = vector.load %arg3[%c0_51, %c0_52, %c0_53] : memref<1x8x32xbf16, #tpu.memory_space<vmem>>, vector<1x8x32xbf16>
      %71 = vector.shape_cast %70 : vector<1x8x32xbf16> to vector<8x32xbf16>
      %72 = arith.extf %71 : vector<8x32xbf16> to vector<8x32xf32>
      %73 = arith.addf %69, %72 : vector<8x32xf32>
      %cst_54 = arith.constant dense<0.000000e+00> : vector<8xf32>
      %74 = vector.multi_reduction <add>, %73, %cst_54 [1] : vector<8x32xf32> to vector<8xf32>
      %75 = vector.shape_cast %74 : vector<8xf32> to vector<8x1xf32>
      %cst_55 = arith.constant 3.200000e+01 : f32
      %76 = vector.broadcast %cst_55 : f32 to vector<8x1xf32>
      %77 = arith.divf %75, %76 : vector<8x1xf32>
      %78 = vector.broadcast %77 : vector<8x1xf32> to vector<8x32xf32>
      %79 = arith.subf %73, %78 : vector<8x32xf32>
      %80 = arith.mulf %79, %79 : vector<8x32xf32>
      %cst_56 = arith.constant dense<0.000000e+00> : vector<8xf32>
      %81 = vector.multi_reduction <add>, %80, %cst_56 [1] : vector<8x32xf32> to vector<8xf32>
      %82 = vector.shape_cast %81 : vector<8xf32> to vector<8x1xf32>
      %cst_57 = arith.constant 3.200000e+01 : f32
      %83 = vector.broadcast %cst_57 : f32 to vector<8x1xf32>
      %84 = arith.divf %82, %83 : vector<8x1xf32>
      %85 = vector.broadcast %77 : vector<8x1xf32> to vector<8x32xf32>
      %86 = arith.subf %73, %85 : vector<8x32xf32>
      %cst_58 = arith.constant 9.99999974E-6 : f32
      %87 = vector.broadcast %cst_58 : f32 to vector<8x1xf32>
      %88 = arith.addf %84, %87 : vector<8x1xf32>
      %89 = math.rsqrt %88 : vector<8x1xf32>
      %90 = vector.broadcast %89 : vector<8x1xf32> to vector<8x32xf32>
      %91 = arith.mulf %86, %90 : vector<8x32xf32>
      %c0_59 = arith.constant 0 : index
      %c0_60 = arith.constant 0 : index
      %92 = vector.load %arg11[%c0_59, %c0_60] : memref<1x32xf32, #tpu.memory_space<vmem>>, vector<1x32xf32>
      %93 = vector.shape_cast %92 : vector<1x32xf32> to vector<32xf32>
      %94 = vector.shape_cast %93 : vector<32xf32> to vector<1x32xf32>
      %95 = vector.broadcast %94 : vector<1x32xf32> to vector<8x32xf32>
      %96 = arith.mulf %91, %95 : vector<8x32xf32>
      %c0_61 = arith.constant 0 : index
      %c0_62 = arith.constant 0 : index
      %97 = vector.load %arg12[%c0_61, %c0_62] : memref<1x32xf32, #tpu.memory_space<vmem>>, vector<1x32xf32>
      %98 = vector.shape_cast %97 : vector<1x32xf32> to vector<32xf32>
      %99 = vector.shape_cast %98 : vector<32xf32> to vector<1x32xf32>
      %100 = vector.broadcast %99 : vector<1x32xf32> to vector<8x32xf32>
      %101 = arith.addf %96, %100 : vector<8x32xf32>
      %102 = arith.truncf %101 : vector<8x32xf32> to vector<8x32xbf16>
      %c0_63 = arith.constant 0 : index
      %c0_64 = arith.constant 0 : index
      %c0_65 = arith.constant 0 : index
      %103 = vector.load %arg13[%c0_63, %c0_64, %c0_65] : memref<1x8x32xbf16, #tpu.memory_space<vmem>>, vector<1x8x32xbf16>
      %104 = vector.shape_cast %103 : vector<1x8x32xbf16> to vector<8x32xbf16>
      %105 = vector.shape_cast %102 : vector<8x32xbf16> to vector<1x8x32xbf16>
      tpu.vector_store %arg13[%c0_63, %c0_64, %c0_65], %105 {strides = array<i32>} : memref<1x8x32xbf16, #tpu.memory_space<vmem>>, vector<1x8x32xbf16>,
    } else {
    }
    return
  }
  func.func @transform_0(%arg0: i32, %arg1: i32, %arg2: i32) -> (i32, i32, i32) {
    %c0_i32 = arith.constant 0 : i32
    %c0_i32_0 = arith.constant 0 : i32
    return %arg0, %arg1, %c0_i32 : i32, i32, i32
  }
  func.func @transform_1(%arg0: i32, %arg1: i32, %arg2: i32) -> (i32, i32, i32, i32) {
    %c0_i32 = arith.constant 0 : i32
    %c0_i32_0 = arith.constant 0 : i32
    %c0_i32_1 = arith.constant 0 : i32
    return %arg0, %c0_i32, %arg1, %c0_i32_0 : i32, i32, i32, i32
  }
  func.func @transform_2(%arg0: i32, %arg1: i32, %arg2: i32) -> (i32, i32, i32, i32) {
    %c0_i32 = arith.constant 0 : i32
    %c0_i32_0 = arith.constant 0 : i32
    %c0_i32_1 = arith.constant 0 : i32
    return %arg0, %c0_i32, %arg2, %c0_i32_0 : i32, i32, i32, i32
  }
  func.func @transform_3(%arg0: i32, %arg1: i32, %arg2: i32) -> (i32, i32) {
    %c0_i32 = arith.constant 0 : i32
    %c0_i32_0 = arith.constant 0 : i32
    %c0_i32_1 = arith.constant 0 : i32
    return %c0_i32, %c0_i32_0 : i32, i32
  }
  func.func @transform_4(%arg0: i32, %arg1: i32, %arg2: i32) -> (i32, i32) {
    %c0_i32 = arith.constant 0 : i32
    %c0_i32_0 = arith.constant 0 : i32
    %c0_i32_1 = arith.constant 0 : i32
    return %c0_i32, %c0_i32_0 : i32, i32
  }
  func.func @transform_5(%arg0: i32, %arg1: i32, %arg2: i32) -> (i32, i32) {
    %c0_i32 = arith.constant 0 : i32
    %c0_i32_0 = arith.constant 0 : i32
    %c0_i32_1 = arith.constant 0 : i32
    return %c0_i32, %c0_i32_0 : i32, i32
  }
  func.func @transform_6(%arg0: i32, %arg1: i32, %arg2: i32) -> (i32, i32, i32) {
    %c0_i32 = arith.constant 0 : i32
    %c0_i32_0 = arith.constant 0 : i32
    %c0_i32_1 = arith.constant 0 : i32
    %c0_i32_2 = arith.constant 0 : i32
    return %c0_i32, %c0_i32_0, %c0_i32_1 : i32, i32, i32
  }
  func.func @transform_7(%arg0: i32, %arg1: i32, %arg2: i32) -> (i32, i32) {
    %c0_i32 = arith.constant 0 : i32
    %c0_i32_0 = arith.constant 0 : i32
    %c0_i32_1 = arith.constant 0 : i32
    return %c0_i32, %c0_i32_0 : i32, i32
  }
  func.func @transform_8(%arg0: i32, %arg1: i32, %arg2: i32) -> (i32, i32) {
    %c0_i32 = arith.constant 0 : i32
    %c0_i32_0 = arith.constant 0 : i32
    %c0_i32_1 = arith.constant 0 : i32
    return %c0_i32, %c0_i32_0 : i32, i32
  }
  func.func @transform_9(%arg0: i32, %arg1: i32, %arg2: i32) -> (i32, i32) {
    %c0_i32 = arith.constant 0 : i32
    %c0_i32_0 = arith.constant 0 : i32
    %c0_i32_1 = arith.constant 0 : i32
    return %c0_i32, %c0_i32_0 : i32, i32
  }
  func.func @transform_10(%arg0: i32, %arg1: i32, %arg2: i32) -> (i32, i32, i32) {
    %c0_i32 = arith.constant 0 : i32
    %c0_i32_0 = arith.constant 0 : i32
    return %arg0, %arg1, %c0_i32 : i32, i32, i32
  }
}

module attributes {stable_mosaic.version = 11 : i64} {
  func.func @_ffn_ln_kernel(%arg0: i32, %arg1: i32, %arg2: memref<16x32xbf16, #tpu.memory_space<vmem>>, %arg3: memref<32x64xbf16, #tpu.memory_space<vmem>>, %arg4: memref<1x64xf32, #tpu.memory_space<vmem>>, %arg5: memref<64x32xbf16, #tpu.memory_space<vmem>>, %arg6: memref<1x32xf32, #tpu.memory_space<vmem>>, %arg7: memref<1x32xf32, #tpu.memory_space<vmem>>, %arg8: memref<1x32xf32, #tpu.memory_space<vmem>>, %arg9: memref<16x32xbf16, #tpu.memory_space<vmem>>, %arg10: memref<16x32xf32, #tpu.memory_space<vmem>>) attributes {dimension_semantics = [#tpu.dimension_semantics<parallel>, #tpu.dimension_semantics<arbitrary>], iteration_bounds = array<i64: 1, 1>, scalar_prefetch = 0 : i64, scratch_operands = 1 : i64, tpu.core_type = #tpu.core_type<tc>, window_params = [{transform_indices = @transform_0, window_bounds = array<i64: 16, 32>}, {transform_indices = @transform_1, window_bounds = array<i64: 32, 64>}, {transform_indices = @transform_2, window_bounds = array<i64: 1, 64>}, {transform_indices = @transform_3, window_bounds = array<i64: 64, 32>}, {pipeline_mode = #tpu.pipeline_mode<synchronous>, transform_indices = @transform_4, window_bounds = array<i64: 1, 32>}, {pipeline_mode = #tpu.pipeline_mode<synchronous>, transform_indices = @transform_5, window_bounds = array<i64: 1, 32>}, {pipeline_mode = #tpu.pipeline_mode<synchronous>, transform_indices = @transform_6, window_bounds = array<i64: 1, 32>}, {transform_indices = @transform_7, window_bounds = array<i64: 16, 32>}]} {
    %c0_i32 = arith.constant 0 : i32
    %0 = arith.cmpi eq, %arg1, %c0_i32 : i32
    %1 = arith.extui %0 : i1 to i32
    %c0_i32_0 = arith.constant 0 : i32
    %2 = arith.cmpi ne, %1, %c0_i32_0 : i32
    scf.if %2 {
      %cst_16 = arith.constant 0.000000e+00 : f32
      %22 = vector.broadcast %cst_16 : f32 to vector<16x32xf32>
      %c0_17 = arith.constant 0 : index
      %c0_18 = arith.constant 0 : index
      %23 = vector.load %arg10[%c0_17, %c0_18] : memref<16x32xf32, #tpu.memory_space<vmem>>, vector<16x32xf32>
      tpu.vector_store %arg10[%c0_17, %c0_18], %22 {strides = array<i32>} : memref<16x32xf32, #tpu.memory_space<vmem>>, vector<16x32xf32>,
    } else {
    }
    %c0 = arith.constant 0 : index
    %c0_1 = arith.constant 0 : index
    %3 = vector.load %arg2[%c0, %c0_1] : memref<16x32xbf16, #tpu.memory_space<vmem>>, vector<16x32xbf16>
    %c0_2 = arith.constant 0 : index
    %c0_3 = arith.constant 0 : index
    %4 = vector.load %arg3[%c0_2, %c0_3] : memref<32x64xbf16, #tpu.memory_space<vmem>>, vector<32x64xbf16>
    %cst = arith.constant dense<0.000000e+00> : vector<16x64xf32>
    %5 = tpu.matmul %3, %4, %cst {dimension_numbers = #tpu.dot_dimension_numbers<[1], [0], [0], [1], [0, 0, 1, 1], [], []>} : vector<16x32xbf16>, vector<32x64xbf16>, vector<16x64xf32> -> vector<16x64xf32>
    %c0_4 = arith.constant 0 : index
    %c0_5 = arith.constant 0 : index
    %6 = vector.load %arg4[%c0_4, %c0_5] : memref<1x64xf32, #tpu.memory_space<vmem>>, vector<1x64xf32>
    %7 = vector.shape_cast %6 : vector<1x64xf32> to vector<64xf32>
    %8 = vector.shape_cast %7 : vector<64xf32> to vector<1x64xf32>
    %9 = vector.broadcast %8 : vector<1x64xf32> to vector<16x64xf32>
    %10 = arith.addf %5, %9 : vector<16x64xf32>
    %cst_6 = arith.constant 0.000000e+00 : f32
    %11 = vector.broadcast %cst_6 : f32 to vector<16x64xf32>
    %12 = arith.maximumf %10, %11 : vector<16x64xf32>
    %c0_7 = arith.constant 0 : index
    %c0_8 = arith.constant 0 : index
    %13 = vector.load %arg10[%c0_7, %c0_8] : memref<16x32xf32, #tpu.memory_space<vmem>>, vector<16x32xf32>
    %14 = arith.truncf %12 : vector<16x64xf32> to vector<16x64xbf16>
    %c0_9 = arith.constant 0 : index
    %c0_10 = arith.constant 0 : index
    %15 = vector.load %arg5[%c0_9, %c0_10] : memref<64x32xbf16, #tpu.memory_space<vmem>>, vector<64x32xbf16>
    %cst_11 = arith.constant dense<0.000000e+00> : vector<16x32xf32>
    %16 = tpu.matmul %14, %15, %cst_11 {dimension_numbers = #tpu.dot_dimension_numbers<[1], [0], [0], [1], [0, 0, 1, 1], [], []>} : vector<16x64xbf16>, vector<64x32xbf16>, vector<16x32xf32> -> vector<16x32xf32>
    %17 = arith.addf %13, %16 : vector<16x32xf32>
    %c0_12 = arith.constant 0 : index
    %c0_13 = arith.constant 0 : index
    %18 = vector.load %arg10[%c0_12, %c0_13] : memref<16x32xf32, #tpu.memory_space<vmem>>, vector<16x32xf32>
    tpu.vector_store %arg10[%c0_12, %c0_13], %17 {strides = array<i32>} : memref<16x32xf32, #tpu.memory_space<vmem>>, vector<16x32xf32>,
    %c0_i32_14 = arith.constant 0 : i32
    %19 = arith.cmpi eq, %arg1, %c0_i32_14 : i32
    %20 = arith.extui %19 : i1 to i32
    %c0_i32_15 = arith.constant 0 : i32
    %21 = arith.cmpi ne, %20, %c0_i32_15 : i32
    scf.if %21 {
      %c0_16 = arith.constant 0 : index
      %c0_17 = arith.constant 0 : index
      %22 = vector.load %arg10[%c0_16, %c0_17] : memref<16x32xf32, #tpu.memory_space<vmem>>, vector<16x32xf32>
      %c0_18 = arith.constant 0 : index
      %c0_19 = arith.constant 0 : index
      %23 = vector.load %arg6[%c0_18, %c0_19] : memref<1x32xf32, #tpu.memory_space<vmem>>, vector<1x32xf32>
      %24 = vector.shape_cast %23 : vector<1x32xf32> to vector<32xf32>
      %25 = vector.shape_cast %24 : vector<32xf32> to vector<1x32xf32>
      %26 = vector.broadcast %25 : vector<1x32xf32> to vector<16x32xf32>
      %27 = arith.addf %22, %26 : vector<16x32xf32>
      %c0_20 = arith.constant 0 : index
      %c0_21 = arith.constant 0 : index
      %28 = vector.load %arg2[%c0_20, %c0_21] : memref<16x32xbf16, #tpu.memory_space<vmem>>, vector<16x32xbf16>
      %29 = arith.extf %28 : vector<16x32xbf16> to vector<16x32xf32>
      %30 = arith.addf %27, %29 : vector<16x32xf32>
      %cst_22 = arith.constant dense<0.000000e+00> : vector<16xf32>
      %31 = vector.multi_reduction <add>, %30, %cst_22 [1] : vector<16x32xf32> to vector<16xf32>
      %32 = vector.shape_cast %31 : vector<16xf32> to vector<16x1xf32>
      %cst_23 = arith.constant 3.200000e+01 : f32
      %33 = vector.broadcast %cst_23 : f32 to vector<16x1xf32>
      %34 = arith.divf %32, %33 : vector<16x1xf32>
      %35 = vector.broadcast %34 : vector<16x1xf32> to vector<16x32xf32>
      %36 = arith.subf %30, %35 : vector<16x32xf32>
      %37 = arith.mulf %36, %36 : vector<16x32xf32>
      %cst_24 = arith.constant dense<0.000000e+00> : vector<16xf32>
      %38 = vector.multi_reduction <add>, %37, %cst_24 [1] : vector<16x32xf32> to vector<16xf32>
      %39 = vector.shape_cast %38 : vector<16xf32> to vector<16x1xf32>
      %cst_25 = arith.constant 3.200000e+01 : f32
      %40 = vector.broadcast %cst_25 : f32 to vector<16x1xf32>
      %41 = arith.divf %39, %40 : vector<16x1xf32>
      %42 = vector.broadcast %34 : vector<16x1xf32> to vector<16x32xf32>
      %43 = arith.subf %30, %42 : vector<16x32xf32>
      %cst_26 = arith.constant 9.99999974E-6 : f32
      %44 = vector.broadcast %cst_26 : f32 to vector<16x1xf32>
      %45 = arith.addf %41, %44 : vector<16x1xf32>
      %46 = math.rsqrt %45 : vector<16x1xf32>
      %47 = vector.broadcast %46 : vector<16x1xf32> to vector<16x32xf32>
      %48 = arith.mulf %43, %47 : vector<16x32xf32>
      %c0_27 = arith.constant 0 : index
      %c0_28 = arith.constant 0 : index
      %49 = vector.load %arg7[%c0_27, %c0_28] : memref<1x32xf32, #tpu.memory_space<vmem>>, vector<1x32xf32>
      %50 = vector.shape_cast %49 : vector<1x32xf32> to vector<32xf32>
      %51 = vector.shape_cast %50 : vector<32xf32> to vector<1x32xf32>
      %52 = vector.broadcast %51 : vector<1x32xf32> to vector<16x32xf32>
      %53 = arith.mulf %48, %52 : vector<16x32xf32>
      %c0_29 = arith.constant 0 : index
      %c0_30 = arith.constant 0 : index
      %54 = vector.load %arg8[%c0_29, %c0_30] : memref<1x32xf32, #tpu.memory_space<vmem>>, vector<1x32xf32>
      %55 = vector.shape_cast %54 : vector<1x32xf32> to vector<32xf32>
      %56 = vector.shape_cast %55 : vector<32xf32> to vector<1x32xf32>
      %57 = vector.broadcast %56 : vector<1x32xf32> to vector<16x32xf32>
      %58 = arith.addf %53, %57 : vector<16x32xf32>
      %59 = arith.truncf %58 : vector<16x32xf32> to vector<16x32xbf16>
      %c0_31 = arith.constant 0 : index
      %c0_32 = arith.constant 0 : index
      %60 = vector.load %arg9[%c0_31, %c0_32] : memref<16x32xbf16, #tpu.memory_space<vmem>>, vector<16x32xbf16>
      tpu.vector_store %arg9[%c0_31, %c0_32], %59 {strides = array<i32>} : memref<16x32xbf16, #tpu.memory_space<vmem>>, vector<16x32xbf16>,
    } else {
    }
    return
  }
  func.func @transform_0(%arg0: i32, %arg1: i32) -> (i32, i32) {
    %c0_i32 = arith.constant 0 : i32
    %c0_i32_0 = arith.constant 0 : i32
    return %arg0, %c0_i32 : i32, i32
  }
  func.func @transform_1(%arg0: i32, %arg1: i32) -> (i32, i32) {
    %c0_i32 = arith.constant 0 : i32
    %c0_i32_0 = arith.constant 0 : i32
    return %c0_i32, %arg1 : i32, i32
  }
  func.func @transform_2(%arg0: i32, %arg1: i32) -> (i32, i32) {
    %c0_i32 = arith.constant 0 : i32
    %c0_i32_0 = arith.constant 0 : i32
    return %c0_i32, %arg1 : i32, i32
  }
  func.func @transform_3(%arg0: i32, %arg1: i32) -> (i32, i32) {
    %c0_i32 = arith.constant 0 : i32
    %c0_i32_0 = arith.constant 0 : i32
    return %arg1, %c0_i32 : i32, i32
  }
  func.func @transform_4(%arg0: i32, %arg1: i32) -> (i32, i32) {
    %c0_i32 = arith.constant 0 : i32
    %c0_i32_0 = arith.constant 0 : i32
    %c0_i32_1 = arith.constant 0 : i32
    return %c0_i32, %c0_i32_0 : i32, i32
  }
  func.func @transform_5(%arg0: i32, %arg1: i32) -> (i32, i32) {
    %c0_i32 = arith.constant 0 : i32
    %c0_i32_0 = arith.constant 0 : i32
    %c0_i32_1 = arith.constant 0 : i32
    return %c0_i32, %c0_i32_0 : i32, i32
  }
  func.func @transform_6(%arg0: i32, %arg1: i32) -> (i32, i32) {
    %c0_i32 = arith.constant 0 : i32
    %c0_i32_0 = arith.constant 0 : i32
    %c0_i32_1 = arith.constant 0 : i32
    return %c0_i32, %c0_i32_0 : i32, i32
  }
  func.func @transform_7(%arg0: i32, %arg1: i32) -> (i32, i32) {
    %c0_i32 = arith.constant 0 : i32
    %c0_i32_0 = arith.constant 0 : i32
    return %arg0, %c0_i32 : i32, i32
  }
}

module attributes {stable_mosaic.version = 11 : i64} {
  func.func @_attn_ln_kernel(%arg0: i32, %arg1: i32, %arg2: i32, %arg3: memref<1x8x32xbf16, #tpu.memory_space<vmem>>, %arg4: memref<1x4x8x8xbf16, #tpu.memory_space<vmem>>, %arg5: memref<1x4x8x8xbf16, #tpu.memory_space<vmem>>, %arg6: memref<1x1x8xf32, #tpu.memory_space<vmem>>, %arg7: memref<8x8xbf16, #tpu.memory_space<vmem>>, %arg8: memref<8x8xbf16, #tpu.memory_space<vmem>>, %arg9: memref<8x8xbf16, #tpu.memory_space<vmem>>, %arg10: memref<4x8x32xbf16, #tpu.memory_space<vmem>>, %arg11: memref<1x32xf32, #tpu.memory_space<vmem>>, %arg12: memref<1x32xf32, #tpu.memory_space<vmem>>, %arg13: memref<1x32xf32, #tpu.memory_space<vmem>>, %arg14: memref<1x8x32xbf16, #tpu.memory_space<vmem>>, %arg15: memref<4x8x8xbf16, #tpu.memory_space<vmem>>, %arg16: memref<4x8x1xf32, #tpu.memory_space<vmem>>, %arg17: memref<4x8x1xf32, #tpu.memory_space<vmem>>, %arg18: memref<4x8x8xf32, #tpu.memory_space<vmem>>) attributes {dimension_semantics = [#tpu.dimension_semantics<parallel>, #tpu.dimension_semantics<parallel>, #tpu.dimension_semantics<arbitrary>], iteration_bounds = array<i64: 2, 1, 1>, scalar_prefetch = 0 : i64, scratch_operands = 4 : i64, tpu.core_type = #tpu.core_type<tc>, window_params = [{transform_indices = @transform_0, window_bounds = array<i64: 1, 8, 32>}, {transform_indices = @transform_1, window_bounds = array<i64: 1, 4, 8, 8>}, {transform_indices = @transform_2, window_bounds = array<i64: 1, 4, 8, 8>}, {transform_indices = @transform_3, window_bounds = array<i64: 1, 1, 8>}, {pipeline_mode = #tpu.pipeline_mode<synchronous>, transform_indices = @transform_4, window_bounds = array<i64: 8, 8>}, {pipeline_mode = #tpu.pipeline_mode<synchronous>, transform_indices = @transform_5, window_bounds = array<i64: 8, 8>}, {pipeline_mode = #tpu.pipeline_mode<synchronous>, transform_indices = @transform_6, window_bounds = array<i64: 8, 8>}, {pipeline_mode = #tpu.pipeline_mode<synchronous>, transform_indices = @transform_7, window_bounds = array<i64: 4, 8, 32>}, {pipeline_mode = #tpu.pipeline_mode<synchronous>, transform_indices = @transform_8, window_bounds = array<i64: 1, 32>}, {pipeline_mode = #tpu.pipeline_mode<synchronous>, transform_indices = @transform_9, window_bounds = array<i64: 1, 32>}, {pipeline_mode = #tpu.pipeline_mode<synchronous>, transform_indices = @transform_10, window_bounds = array<i64: 1, 32>}, {transform_indices = @transform_11, window_bounds = array<i64: 1, 8, 32>}]} {
    %c0_i32 = arith.constant 0 : i32
    %0 = arith.cmpi eq, %arg2, %c0_i32 : i32
    %1 = arith.extui %0 : i1 to i32
    %c0_i32_0 = arith.constant 0 : i32
    %2 = arith.cmpi ne, %1, %c0_i32_0 : i32
    scf.if %2 {
      %c0_41 = arith.constant 0 : index
      %c0_42 = arith.constant 0 : index
      %c0_43 = arith.constant 0 : index
      %c0_44 = arith.constant 0 : index
      %51 = vector.load %arg4[%c0_41, %c0_42, %c0_43, %c0_44] : memref<1x4x8x8xbf16, #tpu.memory_space<vmem>>, vector<1x4x8x8xbf16>
      %52 = vector.shape_cast %51 : vector<1x4x8x8xbf16> to vector<4x8x8xbf16>
      %53 = vector.shape_cast %52 : vector<4x8x8xbf16> to vector<32x8xbf16>
      %c0_45 = arith.constant 0 : index
      %c0_46 = arith.constant 0 : index
      %54 = vector.load %arg9[%c0_45, %c0_46] : memref<8x8xbf16, #tpu.memory_space<vmem>>, vector<8x8xbf16>
      %cst_47 = arith.constant dense<0.000000e+00> : vector<32x8xf32>
      %55 = tpu.matmul %53, %54, %cst_47 {dimension_numbers = #tpu.dot_dimension_numbers<[1], [0], [0], [1], [0, 0, 1, 1], [], []>} : vector<32x8xbf16>, vector<8x8xbf16>, vector<32x8xf32> -> vector<32x8xf32>
      %56 = vector.shape_cast %55 : vector<32x8xf32> to vector<4x8x8xf32>
      %57 = arith.truncf %56 : vector<4x8x8xf32> to vector<4x8x8xbf16>
      %c0_48 = arith.constant 0 : index
      %c0_49 = arith.constant 0 : index
      %c0_50 = arith.constant 0 : index
      %58 = vector.load %arg15[%c0_48, %c0_49, %c0_50] : memref<4x8x8xbf16, #tpu.memory_space<vmem>>, vector<4x8x8xbf16>
      tpu.vector_store %arg15[%c0_48, %c0_49, %c0_50], %57 {strides = array<i32>} : memref<4x8x8xbf16, #tpu.memory_space<vmem>>, vector<4x8x8xbf16>,
      %cst_51 = arith.constant 0xFF800000 : f32
      %59 = vector.broadcast %cst_51 : f32 to vector<4x8x1xf32>
      %c0_52 = arith.constant 0 : index
      %c0_53 = arith.constant 0 : index
      %c0_54 = arith.constant 0 : index
      %60 = vector.load %arg16[%c0_52, %c0_53, %c0_54] : memref<4x8x1xf32, #tpu.memory_space<vmem>>, vector<4x8x1xf32>
      tpu.vector_store %arg16[%c0_52, %c0_53, %c0_54], %59 {strides = array<i32>} : memref<4x8x1xf32, #tpu.memory_space<vmem>>, vector<4x8x1xf32>,
      %cst_55 = arith.constant 0.000000e+00 : f32
      %61 = vector.broadcast %cst_55 : f32 to vector<4x8x1xf32>
      %c0_56 = arith.constant 0 : index
      %c0_57 = arith.constant 0 : index
      %c0_58 = arith.constant 0 : index
      %62 = vector.load %arg17[%c0_56, %c0_57, %c0_58] : memref<4x8x1xf32, #tpu.memory_space<vmem>>, vector<4x8x1xf32>
      tpu.vector_store %arg17[%c0_56, %c0_57, %c0_58], %61 {strides = array<i32>} : memref<4x8x1xf32, #tpu.memory_space<vmem>>, vector<4x8x1xf32>,
      %cst_59 = arith.constant 0.000000e+00 : f32
      %63 = vector.broadcast %cst_59 : f32 to vector<4x8x8xf32>
      %c0_60 = arith.constant 0 : index
      %c0_61 = arith.constant 0 : index
      %c0_62 = arith.constant 0 : index
      %64 = vector.load %arg18[%c0_60, %c0_61, %c0_62] : memref<4x8x8xf32, #tpu.memory_space<vmem>>, vector<4x8x8xf32>
      tpu.vector_store %arg18[%c0_60, %c0_61, %c0_62], %63 {strides = array<i32>} : memref<4x8x8xf32, #tpu.memory_space<vmem>>, vector<4x8x8xf32>,
    } else {
    }
    %c0 = arith.constant 0 : index
    %c0_1 = arith.constant 0 : index
    %c0_2 = arith.constant 0 : index
    %c0_3 = arith.constant 0 : index
    %3 = vector.load %arg5[%c0, %c0_1, %c0_2, %c0_3] : memref<1x4x8x8xbf16, #tpu.memory_space<vmem>>, vector<1x4x8x8xbf16>
    %4 = vector.shape_cast %3 : vector<1x4x8x8xbf16> to vector<4x8x8xbf16>
    %5 = vector.shape_cast %4 : vector<4x8x8xbf16> to vector<32x8xbf16>
    %c0_4 = arith.constant 0 : index
    %c0_5 = arith.constant 0 : index
    %6 = vector.load %arg8[%c0_4, %c0_5] : memref<8x8xbf16, #tpu.memory_space<vmem>>, vector<8x8xbf16>
    %cst = arith.constant dense<0.000000e+00> : vector<32x8xf32>
    %7 = tpu.matmul %5, %6, %cst {dimension_numbers = #tpu.dot_dimension_numbers<[1], [0], [0], [1], [0, 0, 1, 1], [], []>} : vector<32x8xbf16>, vector<8x8xbf16>, vector<32x8xf32> -> vector<32x8xf32>
    %c0_6 = arith.constant 0 : index
    %c0_7 = arith.constant 0 : index
    %8 = vector.load %arg7[%c0_6, %c0_7] : memref<8x8xbf16, #tpu.memory_space<vmem>>, vector<8x8xbf16>
    %cst_8 = arith.constant dense<0.000000e+00> : vector<32x8xf32>
    %9 = tpu.matmul %5, %8, %cst_8 {dimension_numbers = #tpu.dot_dimension_numbers<[1], [0], [0], [1], [0, 0, 1, 1], [], []>} : vector<32x8xbf16>, vector<8x8xbf16>, vector<32x8xf32> -> vector<32x8xf32>
    %10 = vector.shape_cast %7 : vector<32x8xf32> to vector<4x8x8xf32>
    %11 = arith.truncf %10 : vector<4x8x8xf32> to vector<4x8x8xbf16>
    %12 = vector.shape_cast %9 : vector<32x8xf32> to vector<4x8x8xf32>
    %13 = arith.truncf %12 : vector<4x8x8xf32> to vector<4x8x8xbf16>
    %c0_9 = arith.constant 0 : index
    %c0_10 = arith.constant 0 : index
    %c0_11 = arith.constant 0 : index
    %14 = vector.load %arg15[%c0_9, %c0_10, %c0_11] : memref<4x8x8xbf16, #tpu.memory_space<vmem>>, vector<4x8x8xbf16>
    "tpu.trace_start"() <{level = 10 : i32, message = "hqd,hkd->hqk"}> : () -> ()
    %cst_12 = arith.constant dense<0.000000e+00> : vector<4x8x8xf32>
    %15 = tpu.matmul %14, %11, %cst_12 {dimension_numbers = #tpu.dot_dimension_numbers<[2], [2], [1], [1], [0, 0, 0, 1, 1, 1], [0], [0]>} : vector<4x8x8xbf16>, vector<4x8x8xbf16>, vector<4x8x8xf32> -> vector<4x8x8xf32>
    "tpu.trace_stop"() : () -> ()
    %c0_13 = arith.constant 0 : index
    %c0_14 = arith.constant 0 : index
    %c0_15 = arith.constant 0 : index
    %16 = vector.load %arg6[%c0_13, %c0_14, %c0_15] : memref<1x1x8xf32, #tpu.memory_space<vmem>>, vector<1x1x8xf32>
    %17 = vector.shape_cast %16 : vector<1x1x8xf32> to vector<1x8xf32>
    %cst_16 = arith.constant 0.000000e+00 : f32
    %18 = vector.broadcast %cst_16 : f32 to vector<1x8xf32>
    %19 = arith.cmpf one, %17, %18 : vector<1x8xf32>
    %20 = vector.shape_cast %19 : vector<1x8xi1> to vector<1x1x8xi1>
    %cst_17 = arith.constant -1.000000e+20 : f32
    %21 = vector.shape_cast %20 : vector<1x1x8xi1> to vector<1x1x8xi1>
    %22 = vector.broadcast %21 : vector<1x1x8xi1> to vector<4x8x8xi1>
    %23 = vector.broadcast %cst_17 : f32 to vector<4x8x8xf32>
    %24 = arith.select %22, %15, %23 : vector<4x8x8xi1>, vector<4x8x8xf32>
    %c0_18 = arith.constant 0 : index
    %c0_19 = arith.constant 0 : index
    %c0_20 = arith.constant 0 : index
    %25 = vector.load %arg16[%c0_18, %c0_19, %c0_20] : memref<4x8x1xf32, #tpu.memory_space<vmem>>, vector<4x8x1xf32>
    %cst_21 = arith.constant dense<0xFF800000> : vector<4x8xf32>
    %26 = vector.multi_reduction <maximumf>, %24, %cst_21 [2] : vector<4x8x8xf32> to vector<4x8xf32>
    %27 = vector.shape_cast %26 : vector<4x8xf32> to vector<4x8x1xf32>
    %28 = arith.maximumf %25, %27 : vector<4x8x1xf32>
    %29 = arith.subf %25, %28 : vector<4x8x1xf32>
    %30 = math.exp %29 : vector<4x8x1xf32>
    %31 = vector.broadcast %28 : vector<4x8x1xf32> to vector<4x8x8xf32>
    %32 = arith.subf %24, %31 : vector<4x8x8xf32>
    %33 = math.exp %32 : vector<4x8x8xf32>
    %c0_22 = arith.constant 0 : index
    %c0_23 = arith.constant 0 : index
    %c0_24 = arith.constant 0 : index
    %34 = vector.load %arg17[%c0_22, %c0_23, %c0_24] : memref<4x8x1xf32, #tpu.memory_space<vmem>>, vector<4x8x1xf32>
    %35 = arith.mulf %30, %34 : vector<4x8x1xf32>
    %cst_25 = arith.constant dense<0.000000e+00> : vector<4x8xf32>
    %36 = vector.multi_reduction <add>, %33, %cst_25 [2] : vector<4x8x8xf32> to vector<4x8xf32>
    %37 = vector.shape_cast %36 : vector<4x8xf32> to vector<4x8x1xf32>
    %38 = arith.addf %35, %37 : vector<4x8x1xf32>
    %c0_26 = arith.constant 0 : index
    %c0_27 = arith.constant 0 : index
    %c0_28 = arith.constant 0 : index
    %39 = vector.load %arg17[%c0_26, %c0_27, %c0_28] : memref<4x8x1xf32, #tpu.memory_space<vmem>>, vector<4x8x1xf32>
    tpu.vector_store %arg17[%c0_26, %c0_27, %c0_28], %38 {strides = array<i32>} : memref<4x8x1xf32, #tpu.memory_space<vmem>>, vector<4x8x1xf32>,
    %c0_29 = arith.constant 0 : index
    %c0_30 = arith.constant 0 : index
    %c0_31 = arith.constant 0 : index
    %40 = vector.load %arg18[%c0_29, %c0_30, %c0_31] : memref<4x8x8xf32, #tpu.memory_space<vmem>>, vector<4x8x8xf32>
    %41 = vector.broadcast %30 : vector<4x8x1xf32> to vector<4x8x8xf32>
    %42 = arith.mulf %41, %40 : vector<4x8x8xf32>
    %43 = arith.truncf %33 : vector<4x8x8xf32> to vector<4x8x8xbf16>
    "tpu.trace_start"() <{level = 10 : i32, message = "hqk,hkd->hqd"}> : () -> ()
    %cst_32 = arith.constant dense<0.000000e+00> : vector<4x8x8xf32>
    %44 = tpu.matmul %43, %13, %cst_32 {dimension_numbers = #tpu.dot_dimension_numbers<[2], [1], [1], [2], [0, 0, 0, 1, 1, 2], [0], [0]>} : vector<4x8x8xbf16>, vector<4x8x8xbf16>, vector<4x8x8xf32> -> vector<4x8x8xf32>
    "tpu.trace_stop"() : () -> ()
    %45 = arith.addf %42, %44 : vector<4x8x8xf32>
    %c0_33 = arith.constant 0 : index
    %c0_34 = arith.constant 0 : index
    %c0_35 = arith.constant 0 : index
    %46 = vector.load %arg18[%c0_33, %c0_34, %c0_35] : memref<4x8x8xf32, #tpu.memory_space<vmem>>, vector<4x8x8xf32>
    tpu.vector_store %arg18[%c0_33, %c0_34, %c0_35], %45 {strides = array<i32>} : memref<4x8x8xf32, #tpu.memory_space<vmem>>, vector<4x8x8xf32>,
    %c0_36 = arith.constant 0 : index
    %c0_37 = arith.constant 0 : index
    %c0_38 = arith.constant 0 : index
    %47 = vector.load %arg16[%c0_36, %c0_37, %c0_38] : memref<4x8x1xf32, #tpu.memory_space<vmem>>, vector<4x8x1xf32>
    tpu.vector_store %arg16[%c0_36, %c0_37, %c0_38], %28 {strides = array<i32>} : memref<4x8x1xf32, #tpu.memory_space<vmem>>, vector<4x8x1xf32>,
    %c0_i32_39 = arith.constant 0 : i32
    %48 = arith.cmpi eq, %arg2, %c0_i32_39 : i32
    %49 = arith.extui %48 : i1 to i32
    %c0_i32_40 = arith.constant 0 : i32
    %50 = arith.cmpi ne, %49, %c0_i32_40 : i32
    scf.if %50 {
      %c0_41 = arith.constant 0 : index
      %c0_42 = arith.constant 0 : index
      %c0_43 = arith.constant 0 : index
      %51 = vector.load %arg18[%c0_41, %c0_42, %c0_43] : memref<4x8x8xf32, #tpu.memory_space<vmem>>, vector<4x8x8xf32>
      %c0_44 = arith.constant 0 : index
      %c0_45 = arith.constant 0 : index
      %c0_46 = arith.constant 0 : index
      %52 = vector.load %arg17[%c0_44, %c0_45, %c0_46] : memref<4x8x1xf32, #tpu.memory_space<vmem>>, vector<4x8x1xf32>
      %53 = tpu.reciprocal %52 {approx = true} : vector<4x8x1xf32> -> vector<4x8x1xf32>
      %54 = vector.broadcast %53 : vector<4x8x1xf32> to vector<4x8x8xf32>
      %55 = arith.mulf %51, %54 : vector<4x8x8xf32>
      %56 = arith.truncf %55 : vector<4x8x8xf32> to vector<4x8x8xbf16>
      %c0_47 = arith.constant 0 : index
      %c0_48 = arith.constant 0 : index
      %c0_49 = arith.constant 0 : index
      %57 = vector.load %arg10[%c0_47, %c0_48, %c0_49] : memref<4x8x32xbf16, #tpu.memory_space<vmem>>, vector<4x8x32xbf16>
      "tpu.trace_start"() <{level = 10 : i32, message = "hqd,hde->hqe"}> : () -> ()
      %cst_50 = arith.constant dense<0.000000e+00> : vector<4x8x32xf32>
      %58 = tpu.matmul %56, %57, %cst_50 {dimension_numbers = #tpu.dot_dimension_numbers<[2], [1], [1], [2], [0, 0, 0, 1, 1, 2], [0], [0]>} : vector<4x8x8xbf16>, vector<4x8x32xbf16>, vector<4x8x32xf32> -> vector<4x8x32xf32>
      "tpu.trace_stop"() : () -> ()
      %cst_51 = arith.constant dense<0.000000e+00> : vector<8x32xf32>
      %59 = vector.multi_reduction <add>, %58, %cst_51 [0] : vector<4x8x32xf32> to vector<8x32xf32>
      %c0_52 = arith.constant 0 : index
      %c0_53 = arith.constant 0 : index
      %60 = vector.load %arg11[%c0_52, %c0_53] : memref<1x32xf32, #tpu.memory_space<vmem>>, vector<1x32xf32>
      %61 = vector.shape_cast %60 : vector<1x32xf32> to vector<32xf32>
      %62 = vector.shape_cast %61 : vector<32xf32> to vector<1x32xf32>
      %63 = vector.broadcast %62 : vector<1x32xf32> to vector<8x32xf32>
      %64 = arith.addf %59, %63 : vector<8x32xf32>
      %c0_54 = arith.constant 0 : index
      %c0_55 = arith.constant 0 : index
      %c0_56 = arith.constant 0 : index
      %65 = vector.load %arg3[%c0_54, %c0_55, %c0_56] : memref<1x8x32xbf16, #tpu.memory_space<vmem>>, vector<1x8x32xbf16>
      %66 = vector.shape_cast %65 : vector<1x8x32xbf16> to vector<8x32xbf16>
      %67 = arith.extf %66 : vector<8x32xbf16> to vector<8x32xf32>
      %68 = arith.addf %64, %67 : vector<8x32xf32>
      %cst_57 = arith.constant dense<0.000000e+00> : vector<8xf32>
      %69 = vector.multi_reduction <add>, %68, %cst_57 [1] : vector<8x32xf32> to vector<8xf32>
      %70 = vector.shape_cast %69 : vector<8xf32> to vector<8x1xf32>
      %cst_58 = arith.constant 3.200000e+01 : f32
      %71 = vector.broadcast %cst_58 : f32 to vector<8x1xf32>
      %72 = arith.divf %70, %71 : vector<8x1xf32>
      %73 = vector.broadcast %72 : vector<8x1xf32> to vector<8x32xf32>
      %74 = arith.subf %68, %73 : vector<8x32xf32>
      %75 = arith.mulf %74, %74 : vector<8x32xf32>
      %cst_59 = arith.constant dense<0.000000e+00> : vector<8xf32>
      %76 = vector.multi_reduction <add>, %75, %cst_59 [1] : vector<8x32xf32> to vector<8xf32>
      %77 = vector.shape_cast %76 : vector<8xf32> to vector<8x1xf32>
      %cst_60 = arith.constant 3.200000e+01 : f32
      %78 = vector.broadcast %cst_60 : f32 to vector<8x1xf32>
      %79 = arith.divf %77, %78 : vector<8x1xf32>
      %80 = vector.broadcast %72 : vector<8x1xf32> to vector<8x32xf32>
      %81 = arith.subf %68, %80 : vector<8x32xf32>
      %cst_61 = arith.constant 9.99999974E-6 : f32
      %82 = vector.broadcast %cst_61 : f32 to vector<8x1xf32>
      %83 = arith.addf %79, %82 : vector<8x1xf32>
      %84 = math.rsqrt %83 : vector<8x1xf32>
      %85 = vector.broadcast %84 : vector<8x1xf32> to vector<8x32xf32>
      %86 = arith.mulf %81, %85 : vector<8x32xf32>
      %c0_62 = arith.constant 0 : index
      %c0_63 = arith.constant 0 : index
      %87 = vector.load %arg12[%c0_62, %c0_63] : memref<1x32xf32, #tpu.memory_space<vmem>>, vector<1x32xf32>
      %88 = vector.shape_cast %87 : vector<1x32xf32> to vector<32xf32>
      %89 = vector.shape_cast %88 : vector<32xf32> to vector<1x32xf32>
      %90 = vector.broadcast %89 : vector<1x32xf32> to vector<8x32xf32>
      %91 = arith.mulf %86, %90 : vector<8x32xf32>
      %c0_64 = arith.constant 0 : index
      %c0_65 = arith.constant 0 : index
      %92 = vector.load %arg13[%c0_64, %c0_65] : memref<1x32xf32, #tpu.memory_space<vmem>>, vector<1x32xf32>
      %93 = vector.shape_cast %92 : vector<1x32xf32> to vector<32xf32>
      %94 = vector.shape_cast %93 : vector<32xf32> to vector<1x32xf32>
      %95 = vector.broadcast %94 : vector<1x32xf32> to vector<8x32xf32>
      %96 = arith.addf %91, %95 : vector<8x32xf32>
      %97 = arith.truncf %96 : vector<8x32xf32> to vector<8x32xbf16>
      %c0_66 = arith.constant 0 : index
      %c0_67 = arith.constant 0 : index
      %c0_68 = arith.constant 0 : index
      %98 = vector.load %arg14[%c0_66, %c0_67, %c0_68] : memref<1x8x32xbf16, #tpu.memory_space<vmem>>, vector<1x8x32xbf16>
      %99 = vector.shape_cast %98 : vector<1x8x32xbf16> to vector<8x32xbf16>
      %100 = vector.shape_cast %97 : vector<8x32xbf16> to vector<1x8x32xbf16>
      tpu.vector_store %arg14[%c0_66, %c0_67, %c0_68], %100 {strides = array<i32>} : memref<1x8x32xbf16, #tpu.memory_space<vmem>>, vector<1x8x32xbf16>,
    } else {
    }
    return
  }
  func.func @transform_0(%arg0: i32, %arg1: i32, %arg2: i32) -> (i32, i32, i32) {
    %c0_i32 = arith.constant 0 : i32
    %c0_i32_0 = arith.constant 0 : i32
    return %arg0, %arg1, %c0_i32 : i32, i32, i32
  }
  func.func @transform_1(%arg0: i32, %arg1: i32, %arg2: i32) -> (i32, i32, i32, i32) {
    %c0_i32 = arith.constant 0 : i32
    %c0_i32_0 = arith.constant 0 : i32
    %c0_i32_1 = arith.constant 0 : i32
    return %arg0, %c0_i32, %arg1, %c0_i32_0 : i32, i32, i32, i32
  }
  func.func @transform_2(%arg0: i32, %arg1: i32, %arg2: i32) -> (i32, i32, i32, i32) {
    %c0_i32 = arith.constant 0 : i32
    %c0_i32_0 = arith.constant 0 : i32
    %c0_i32_1 = arith.constant 0 : i32
    return %arg0, %c0_i32, %arg2, %c0_i32_0 : i32, i32, i32, i32
  }
  func.func @transform_3(%arg0: i32, %arg1: i32, %arg2: i32) -> (i32, i32, i32) {
    %c0_i32 = arith.constant 0 : i32
    %c0_i32_0 = arith.constant 0 : i32
    return %arg0, %c0_i32, %arg2 : i32, i32, i32
  }
  func.func @transform_4(%arg0: i32, %arg1: i32, %arg2: i32) -> (i32, i32) {
    %c0_i32 = arith.constant 0 : i32
    %c0_i32_0 = arith.constant 0 : i32
    %c0_i32_1 = arith.constant 0 : i32
    return %c0_i32, %c0_i32_0 : i32, i32
  }
  func.func @transform_5(%arg0: i32, %arg1: i32, %arg2: i32) -> (i32, i32) {
    %c0_i32 = arith.constant 0 : i32
    %c0_i32_0 = arith.constant 0 : i32
    %c0_i32_1 = arith.constant 0 : i32
    return %c0_i32, %c0_i32_0 : i32, i32
  }
  func.func @transform_6(%arg0: i32, %arg1: i32, %arg2: i32) -> (i32, i32) {
    %c0_i32 = arith.constant 0 : i32
    %c0_i32_0 = arith.constant 0 : i32
    %c0_i32_1 = arith.constant 0 : i32
    return %c0_i32, %c0_i32_0 : i32, i32
  }
  func.func @transform_7(%arg0: i32, %arg1: i32, %arg2: i32) -> (i32, i32, i32) {
    %c0_i32 = arith.constant 0 : i32
    %c0_i32_0 = arith.constant 0 : i32
    %c0_i32_1 = arith.constant 0 : i32
    %c0_i32_2 = arith.constant 0 : i32
    return %c0_i32, %c0_i32_0, %c0_i32_1 : i32, i32, i32
  }
  func.func @transform_8(%arg0: i32, %arg1: i32, %arg2: i32) -> (i32, i32) {
    %c0_i32 = arith.constant 0 : i32
    %c0_i32_0 = arith.constant 0 : i32
    %c0_i32_1 = arith.constant 0 : i32
    return %c0_i32, %c0_i32_0 : i32, i32
  }
  func.func @transform_9(%arg0: i32, %arg1: i32, %arg2: i32) -> (i32, i32) {
    %c0_i32 = arith.constant 0 : i32
    %c0_i32_0 = arith.constant 0 : i32
    %c0_i32_1 = arith.constant 0 : i32
    return %c0_i32, %c0_i32_0 : i32, i32
  }
  func.func @transform_10(%arg0: i32, %arg1: i32, %arg2: i32) -> (i32, i32) {
    %c0_i32 = arith.constant 0 : i32
    %c0_i32_0 = arith.constant 0 : i32
    %c0_i32_1 = arith.constant 0 : i32
    return %c0_i32, %c0_i32_0 : i32, i32
  }
  func.func @transform_11(%arg0: i32, %arg1: i32, %arg2: i32) -> (i32, i32, i32) {
    %c0_i32 = arith.constant 0 : i32
    %c0_i32_0 = arith.constant 0 : i32
    return %arg0, %arg1, %c0_i32 : i32, i32, i32
  }
}

module attributes {stable_mosaic.version = 11 : i64} {
  func.func @_linear_kernel(%arg0: i32, %arg1: i32, %arg2: memref<16x32xbf16, #tpu.memory_space<vmem>>, %arg3: memref<32x128xbf16, #tpu.memory_space<vmem>>, %arg4: memref<1x128xf32, #tpu.memory_space<vmem>>, %arg5: memref<16x128xf32, #tpu.memory_space<vmem>>) attributes {dimension_semantics = [#tpu.dimension_semantics<parallel>, #tpu.dimension_semantics<parallel>], iteration_bounds = array<i64: 1, 1>, scalar_prefetch = 0 : i64, scratch_operands = 0 : i64, tpu.core_type = #tpu.core_type<tc>, window_params = [{transform_indices = @transform_0, window_bounds = array<i64: 16, 32>}, {transform_indices = @transform_1, window_bounds = array<i64: 32, 128>}, {transform_indices = @transform_2, window_bounds = array<i64: 1, 128>}, {transform_indices = @transform_3, window_bounds = array<i64: 16, 128>}]} {
    %c0 = arith.constant 0 : index
    %c0_0 = arith.constant 0 : index
    %0 = vector.load %arg2[%c0, %c0_0] : memref<16x32xbf16, #tpu.memory_space<vmem>>, vector<16x32xbf16>
    %c0_1 = arith.constant 0 : index
    %c0_2 = arith.constant 0 : index
    %1 = vector.load %arg3[%c0_1, %c0_2] : memref<32x128xbf16, #tpu.memory_space<vmem>>, vector<32x128xbf16>
    %cst = arith.constant dense<0.000000e+00> : vector<16x128xf32>
    %2 = tpu.matmul %0, %1, %cst {dimension_numbers = #tpu.dot_dimension_numbers<[1], [0], [0], [1], [0, 0, 1, 1], [], []>} : vector<16x32xbf16>, vector<32x128xbf16>, vector<16x128xf32> -> vector<16x128xf32>
    %c0_3 = arith.constant 0 : index
    %c0_4 = arith.constant 0 : index
    %3 = vector.load %arg4[%c0_3, %c0_4] : memref<1x128xf32, #tpu.memory_space<vmem>>, vector<1x128xf32>
    %4 = vector.shape_cast %3 : vector<1x128xf32> to vector<128xf32>
    %5 = vector.shape_cast %4 : vector<128xf32> to vector<1x128xf32>
    %6 = vector.broadcast %5 : vector<1x128xf32> to vector<16x128xf32>
    %7 = arith.addf %2, %6 : vector<16x128xf32>
    %c0_5 = arith.constant 0 : index
    %c0_6 = arith.constant 0 : index
    %8 = vector.load %arg5[%c0_5, %c0_6] : memref<16x128xf32, #tpu.memory_space<vmem>>, vector<16x128xf32>
    tpu.vector_store %arg5[%c0_5, %c0_6], %7 {strides = array<i32>} : memref<16x128xf32, #tpu.memory_space<vmem>>, vector<16x128xf32>,
    return
  }
  func.func @transform_0(%arg0: i32, %arg1: i32) -> (i32, i32) {
    %c0_i32 = arith.constant 0 : i32
    %c0_i32_0 = arith.constant 0 : i32
    return %arg0, %c0_i32 : i32, i32
  }
  func.func @transform_1(%arg0: i32, %arg1: i32) -> (i32, i32) {
    %c0_i32 = arith.constant 0 : i32
    %c0_i32_0 = arith.constant 0 : i32
    return %c0_i32, %arg1 : i32, i32
  }
  func.func @transform_2(%arg0: i32, %arg1: i32) -> (i32, i32) {
    %c0_i32 = arith.constant 0 : i32
    %c0_i32_0 = arith.constant 0 : i32
    return %c0_i32, %arg1 : i32, i32
  }
  func.func @transform_3(%arg0: i32, %arg1: i32) -> (i32, i32) {
    %c0_i32 = arith.constant 0 : i32
    return %arg0, %arg1 : i32, i32
  }
}

</mosaic_0001>

<llo_original>
// kernel: transformer_forward.21
$region0: #{transformer_forward.21}
  #allocation0 [shape = 'u32[]', space=smem, size = 0x4, offset = 0x4, fixed_abs, tag = 'smem constant byte address 0x4 - core index']
  #allocation1 [shape = 'u32[72,128]{1,0:T(1,128)}', space=vmem, size = 0x9000, scoped, tag = 'internal scratch']
  %s0 = inlined_call_operand.vmem [shape: bf16[16,32], index: 0, kind: input, shape index: {}]
  %s1 = inlined_call_operand.vmem [shape: bf16[32,128], index: 1, kind: input, shape index: {}]
  %s2 = inlined_call_operand.vmem [shape: f32[1,128], index: 2, kind: input, shape index: {}]
  %s3 = inlined_call_operand.vmem [shape: f32[16,128], index: 3, kind: output, shape index: {}]
  %s4 = sld [smem:[#allocation0]]
  $region22: #{transformer_forward.21} parent=0
    _
  %s6 = ssub.s32 1, %s4
  %s7 = scalar_select 0, %s6, %s4
  // Predicated region
  $region2: #{transformer_forward.21} parent=0 // pred_check
    _
  $region3: #{transformer_forward.21} parent=0 // pred_check_branch
    %9 = sbr.rel (0) target = $region5
  $region4: #{transformer_forward.21} parent=0 // pred_region
    _
  $region5: #{transformer_forward.21} parent=0 // pred_fallthru
    _
  // Predicated region
  $region6: #{transformer_forward.21} parent=0 // pred_check
    _
  $region7: #{transformer_forward.21} parent=0 // pred_check_branch
    %11 = sbr.rel (0) target = $region9
  $region8: #{transformer_forward.21} parent=0 // pred_region
    _
  $region9: #{transformer_forward.21} parent=0 // pred_fallthru
    _
  // Predicated region
  $region10: #{transformer_forward.21} parent=0 // pred_check
    _
  $region11: #{transformer_forward.21} parent=0 // pred_check_branch
    %13 = sbr.rel (0) target = $region13
  $region12: #{transformer_forward.21} parent=0 // pred_region
    _
  $region13: #{transformer_forward.21} parent=0 // pred_fallthru
    _
  %v15 = vld [vmem:[%s0] sm:$0xf]
  %v16 = vld [vmem:[%s0 + $0x4] sm:$0xf]
  %v17 = vld [vmem:[%s1] sm:$0xf]
  %v18 = vld [vmem:[%s1 + $0x4] sm:$0xf]
  %v19 = vld [vmem:[%s1 + $0x8] sm:$0xf]
  %v20 = vld [vmem:[%s1 + $0xc] sm:$0xf]
  %v21 = vld [vmem:[%s2] sm:$0x1]
  %v23 = vperm.slane %v21, 0
  %v27 = vunpack.c.l.b16 %v15
  %v28 = vunpack.c.l.b16 %v16
  %v29 = vpack.c.b16 %v28, %v27
  %v34 = vunpack.c.l.b16 %v17
  %v35 = vunpack.c.l.b16 %v18
  %v36 = vunpack.c.l.b16 %v19
  %v37 = vunpack.c.l.b16 %v20
  %v38 = vpack.c.b16 %v35, %v34
  %v39 = vpack.c.b16 %v37, %v36
  %vm42 = vcmask 261120
  %v44 = vsel %vm42, %v29, 0
  %46 = vmatpush.bf16.msra.mxu0 0
  %47 = vmatpush.bf16.msra.mxu0 0
  %48 = vmatpush.bf16.msra.mxu0 0
  %49 = vmatpush.bf16.msra.mxu0 0
  %50 = vmatpush.bf16.msra.mxu0 0
  %51 = vmatpush.bf16.msra.mxu0 0
  %52 = vmatpush.bf16.msra.mxu0 %v39
  %53 = vmatpush.bf16.msra.mxu0 %v38
  %54 = vmatmul.bf16.gmra.mxu0 %v44
  %v55 = vpop.f32.mrf.mxu0
  %v56 = vadd.f32 %v23, %v55
  %v57 = vpop.f32.mrf.mxu0
  %v58 = vadd.f32 %v23, %v57
  %59 = vdwg.mxu0
  %60 = vst [vmem:[%s3] sm:$0xff] %v56
  %61 = vst [vmem:[%s3 + $0x8] sm:$0xff] %v58
  // Predicated region
  $region14: #{transformer_forward.21} parent=0 // pred_check
    _
  $region15: #{transformer_forward.21} parent=0 // pred_check_branch
    %63 = sbr.rel (0) target = $region17
  $region16: #{transformer_forward.21} parent=0 // pred_region
    _
  $region17: #{transformer_forward.21} parent=0 // pred_fallthru
    _
  // Predicated region
  $region18: #{transformer_forward.21} parent=0 // pred_check
    _
  $region19: #{transformer_forward.21} parent=0 // pred_check_branch
    %65 = sbr.rel (0) target = $region21
  $region20: #{transformer_forward.21} parent=0 // pred_region
    _
  $region21: #{transformer_forward.21} parent=0 // pred_fallthru
    _

// kernel: transformer_forward.12
$region0: #{transformer_forward.12}
  #allocation0 [shape = 'u32[]', space=smem, size = 0x4, offset = 0x4, fixed_abs, tag = 'smem constant byte address 0x4 - core index']
  #allocation1 [shape = 'u32[72,128]{1,0:T(1,128)}', space=vmem, size = 0x9000, scoped, tag = 'internal scratch']
  #allocation2 [shape = 'f32[16,32]{1,0:T(8,128)}', space=vmem, size = 0x2000, scoped, tag = 'scratch operand']
  %s0 = inlined_call_operand.vmem [shape: bf16[16,32], index: 0, kind: input, shape index: {}]
  %s1 = inlined_call_operand.vmem [shape: bf16[32,64], index: 1, kind: input, shape index: {}]
  %s2 = inlined_call_operand.vmem [shape: f32[1,64], index: 2, kind: input, shape index: {}]
  %s3 = inlined_call_operand.vmem [shape: bf16[64,32], index: 3, kind: input, shape index: {}]
  %s4 = inlined_call_operand.vmem [shape: f32[1,32], index: 4, kind: input, shape index: {}]
  %s5 = inlined_call_operand.vmem [shape: f32[1,32], index: 5, kind: input, shape index: {}]
  %s6 = inlined_call_operand.vmem [shape: f32[1,32], index: 6, kind: input, shape index: {}]
  %s7 = inlined_call_operand.vmem [shape: bf16[16,32], index: 7, kind: output, shape index: {}]
  %s8 = sld [smem:[#allocation0]]
  $region46: #{transformer_forward.12} parent=0
    _
  %s10 = ssub.s32 1, %s8
  %s11 = scalar_select 0, %s10, %s8
  // Predicated region
  $region2: #{transformer_forward.12} parent=0 // pred_check
    _
  $region3: #{transformer_forward.12} parent=0 // pred_check_branch
    %13 = sbr.rel (0) target = $region5
  $region4: #{transformer_forward.12} parent=0 // pred_region
    _
  $region5: #{transformer_forward.12} parent=0 // pred_fallthru
    _
  // Predicated region
  $region6: #{transformer_forward.12} parent=0 // pred_check
    _
  $region7: #{transformer_forward.12} parent=0 // pred_check_branch
    %15 = sbr.rel (0) target = $region9
  $region8: #{transformer_forward.12} parent=0 // pred_region
    _
  $region9: #{transformer_forward.12} parent=0 // pred_fallthru
    _
  // Predicated region
  $region10: #{transformer_forward.12} parent=0 // pred_check
    _
  $region11: #{transformer_forward.12} parent=0 // pred_check_branch
    %17 = sbr.rel (0) target = $region13
  $region12: #{transformer_forward.12} parent=0 // pred_region
    _
  $region13: #{transformer_forward.12} parent=0 // pred_fallthru
    _
  // Predicated region
  $region14: #{transformer_forward.12} parent=0 // pred_check
    _
  $region15: #{transformer_forward.12} parent=0 // pred_check_branch
    %19 = sbr.rel (0) target = $region17
  $region16: #{transformer_forward.12} parent=0 // pred_region
    _
  $region17: #{transformer_forward.12} parent=0 // pred_fallthru
    _
  // Predicated region
  $region18: #{transformer_forward.12} parent=0 // pred_check
    _
  $region19: #{transformer_forward.12} parent=0 // pred_check_branch
    %21 = sbr.rel (0) target = $region21
  $region20: #{transformer_forward.12} parent=0 // pred_region
    _
  $region21: #{transformer_forward.12} parent=0 // pred_fallthru
    _
  // Predicated region
  $region22: #{transformer_forward.12} parent=0 // pred_check
    _
  $region23: #{transformer_forward.12} parent=0 // pred_check_branch
    %23 = sbr.rel (0) target = $region25
  $region24: #{transformer_forward.12} parent=0 // pred_region
    _
  $region25: #{transformer_forward.12} parent=0 // pred_fallthru
    _
  // Predicated region
  $region26: #{transformer_forward.12} parent=0 // pred_check
    _
  $region27: #{transformer_forward.12} parent=0 // pred_check_branch
    %25 = sbr.rel (0) target = $region29
  $region28: #{transformer_forward.12} parent=0 // pred_region
    _
  $region29: #{transformer_forward.12} parent=0 // pred_fallthru
    _
  %p27 = scmp.eq.s32.totalorder 0, 0
  // Predicated region
  $region30: #{transformer_forward.12} parent=0 // pred_check
    %p28 = pneg %p27
  $region31: #{transformer_forward.12} parent=0 // pred_check_branch
    %30 = sbr.rel (%p28) target = $region33
  $region32: #{transformer_forward.12} parent=0 // pred_region
    %vm31 = vcmask 261120
    %32 = vst.msk [vmem:[#allocation2] sm:$0xff] %vm31, 0.0
    %33 = vst.msk [vmem:[#allocation2 + $0x8] sm:$0xff] %vm31, 0.0
  $region33: #{transformer_forward.12} parent=0 // pred_fallthru
    _
  %v34 = vld [vmem:[%s0] sm:$0xf]
  %v35 = vld [vmem:[%s0 + $0x4] sm:$0xf]
  %v36 = vld [vmem:[%s1] sm:$0xf]
  %v37 = vld [vmem:[%s1 + $0x4] sm:$0xf]
  %v38 = vld [vmem:[%s1 + $0x8] sm:$0xf]
  %v39 = vld [vmem:[%s1 + $0xc] sm:$0xf]
  %v40 = vld [vmem:[%s2] sm:$0x1]
  %v42 = vperm.slane %v40, 0
  %v46 = vunpack.c.l.b16 %v34
  %v47 = vunpack.c.l.b16 %v35
  %v48 = vpack.c.b16 %v47, %v46
  %v53 = vunpack.c.l.b16 %v36
  %v54 = vunpack.c.l.b16 %v37
  %v55 = vunpack.c.l.b16 %v38
  %v56 = vunpack.c.l.b16 %v39
  %v57 = vpack.c.b16 %v54, %v53
  %v58 = vpack.c.b16 %v56, %v55
  %vm61 = vcmask 261120
  %v63 = vsel %vm61, %v48, 0
  %65 = vmatpush.bf16.msra.mxu0 0
  %66 = vmatpush.bf16.msra.mxu0 0
  %67 = vmatpush.bf16.msra.mxu0 0
  %68 = vmatpush.bf16.msra.mxu0 0
  %69 = vmatpush.bf16.msra.mxu0 0
  %70 = vmatpush.bf16.msra.mxu0 0
  %71 = vmatpush.bf16.msra.mxu0 %v58
  %72 = vmatpush.bf16.msra.mxu0 %v57
  %73 = vmatmul.bf16.gmra.mxu0 %v63
  %v74 = vpop.f32.mrf.mxu0
  %v75 = vadd.f32 %v42, %v74
  %v76 = vpop.f32.mrf.mxu0
  %v77 = vadd.f32 %v42, %v76
  %78 = vdwg.mxu0
  %v79 = vmax.f32 %v75, 0.0
  %v80 = vmax.f32 %v77, 0.0
  %v81 = vld [vmem:[#allocation2] sm:$0xff]
  %v82 = vld [vmem:[#allocation2 + $0x8] sm:$0xff]
  %v83 = vpack.c.bf16 %v80, %v79
  %v84 = vld [vmem:[%s3] sm:$0xf]
  %v85 = vld [vmem:[%s3 + $0x4] sm:$0xf]
  %v86 = vld [vmem:[%s3 + $0x8] sm:$0xf]
  %v87 = vld [vmem:[%s3 + $0xc] sm:$0xf]
  %v88 = vld [vmem:[%s3 + $0x10] sm:$0xf]
  %v89 = vld [vmem:[%s3 + $0x14] sm:$0xf]
  %v90 = vld [vmem:[%s3 + $0x18] sm:$0xf]
  %v91 = vld [vmem:[%s3 + $0x1c] sm:$0xf]
  %v100 = vunpack.c.l.b16 %v84
  %v101 = vunpack.c.l.b16 %v85
  %v102 = vunpack.c.l.b16 %v86
  %v103 = vunpack.c.l.b16 %v87
  %v104 = vunpack.c.l.b16 %v88
  %v105 = vunpack.c.l.b16 %v89
  %v106 = vunpack.c.l.b16 %v90
  %v107 = vunpack.c.l.b16 %v91
  %v108 = vpack.c.b16 %v101, %v100
  %v109 = vpack.c.b16 %v103, %v102
  %v110 = vpack.c.b16 %v105, %v104
  %v111 = vpack.c.b16 %v107, %v106
  %vm116 = vcmask 523264
  %v118 = vsel %vm116, %v83, 0
  %120 = vmatpush.bf16.msra.mxu0 0
  %121 = vmatpush.bf16.msra.mxu0 0
  %122 = vmatpush.bf16.msra.mxu0 0
  %123 = vmatpush.bf16.msra.mxu0 0
  %124 = vmatpush.bf16.msra.mxu0 %v111
  %125 = vmatpush.bf16.msra.mxu0 %v110
  %126 = vmatpush.bf16.msra.mxu0 %v109
  %127 = vmatpush.bf16.msra.mxu0 %v108
  %128 = vmatmul.bf16.gmra.mxu0 %v118
  %v129 = vpop.f32.mrf.mxu0
  %v130 = vadd.f32 0.0, %v129
  %v131 = vpop.f32.mrf.mxu0
  %v132 = vadd.f32 0.0, %v131
  %133 = vdwg.mxu0
  %v134 = vadd.f32 %v81, %v130
  %v135 = vadd.f32 %v82, %v132
  %136 = vst.msk [vmem:[#allocation2] sm:$0xff] %vm61, %v134
  %137 = vst.msk [vmem:[#allocation2 + $0x8] sm:$0xff] %vm61, %v135
  // Predicated region
  $region34: #{transformer_forward.12} parent=0 // pred_check
    %p138 = pneg %p27
  $region35: #{transformer_forward.12} parent=0 // pred_check_branch
    %140 = sbr.rel (%p138) target = $region37
  $region36: #{transformer_forward.12} parent=0 // pred_region
    %v141 = vld [vmem:[#allocation2] sm:$0xff]
    %v142 = vld [vmem:[#allocation2 + $0x8] sm:$0xff]
    %v143 = vld [vmem:[%s4] sm:$0x1]
    %v145 = vperm.slane %v143, 0
    %v147 = vadd.f32 %v141, %v145
    %v148 = vadd.f32 %v142, %v145
    %v149 = vld [vmem:[%s0] sm:$0xf]
    %v150 = vld [vmem:[%s0 + $0x4] sm:$0xf]
    %v151 = vunpack.c.l.bf16 %v149
    %v152 = vunpack.c.l.bf16 %v150
    %v153 = vadd.f32 %v147, %v151
    %v154 = vadd.f32 %v148, %v152
    %v155 = vsel %vm61, %v153, 0.0
    %156 = vadd.xlane.f32.xlu0 %v155
    %v157 = vpop.xlane.xlu0 %156
    %v158 = vsel %vm61, %v154, 0.0
    %159 = vadd.xlane.f32.xlu0 %v158
    %v160 = vpop.xlane.xlu0 %159
    %v161 = vrcp.pop 32.0
    %v162 = vmul.f32 32.0, %v161
    %v163 = vsub.f32 1.0, %v162
    %v164 = vmul.f32 %v161, %v163
    %v165 = vadd.f32 %v161, %v164
    %vm166 = vweird.f32 %v161
    %v167 = vsel %vm166, %v161, %v165
    %v168 = vmul.f32 %v157, %v167
    %v169 = vmul.f32 %v160, %v167
    %v170 = vsub.f32 %v153, %v168
    %v171 = vsub.f32 %v154, %v169
    %v172 = vmul.f32 %v170, %v170
    %v173 = vmul.f32 %v171, %v171
    %v174 = vsel %vm61, %v172, 0.0
    %175 = vadd.xlane.f32.xlu0 %v174
    %v176 = vpop.xlane.xlu0 %175
    %v177 = vsel %vm61, %v173, 0.0
    %178 = vadd.xlane.f32.xlu0 %v177
    %v179 = vpop.xlane.xlu0 %178
    %v180 = vmul.f32 %v176, %v167
    %v181 = vmul.f32 %v179, %v167
    %v182 = vadd.f32 %v180, 1e-05
    %v183 = vadd.f32 %v181, 1e-05
    %v184 = vrsqrt.pop %v182
    %v185 = vmul.f32 %v184, %v182
    %v186 = vmul.f32 %v185, %v184
    %v187 = vmul.f32 0.5, %v186
    %v188 = vsub.f32 1.5, %v187
    %v189 = vmul.f32 %v184, %v188
    %vm190 = vweird.f32 %v182
    %vm191 = vweird.f32 %v184
    %vm192 = vmor %vm190, %vm191
    %v193 = vsel %vm192, %v184, %v189
    %v194 = vrsqrt.pop %v183
    %v195 = vmul.f32 %v194, %v183
    %v196 = vmul.f32 %v195, %v194
    %v197 = vmul.f32 0.5, %v196
    %v198 = vsub.f32 1.5, %v197
    %v199 = vmul.f32 %v194, %v198
    %vm200 = vweird.f32 %v183
    %vm201 = vweird.f32 %v194
    %vm202 = vmor %vm200, %vm201
    %v203 = vsel %vm202, %v194, %v199
    %v204 = vmul.f32 %v170, %v193
    %v205 = vmul.f32 %v171, %v203
    %v206 = vld [vmem:[%s5] sm:$0x1]
    %v208 = vperm.slane %v206, 0
    %v210 = vmul.f32 %v204, %v208
    %v211 = vmul.f32 %v205, %v208
    %v212 = vld [vmem:[%s6] sm:$0x1]
    %v214 = vperm.slane %v212, 0
    %v216 = vadd.f32 %v210, %v214
    %v217 = vadd.f32 %v211, %v214
    %v218 = vpack.c.bf16 %v216, %v216
    %v219 = vpack.c.bf16 %v217, %v217
    %vm220 = vcmask 257024
    %221 = vst.msk [vmem:[%s7] sm:$0xf] %vm220, %v218
    %222 = vst.msk [vmem:[%s7 + $0x4] sm:$0xf] %vm220, %v219
  $region37: #{transformer_forward.12} parent=0 // pred_fallthru
    _
  // Predicated region
  $region38: #{transformer_forward.12} parent=0 // pred_check
    _
  $region39: #{transformer_forward.12} parent=0 // pred_check_branch
    %224 = sbr.rel (0) target = $region41
  $region40: #{transformer_forward.12} parent=0 // pred_region
    _
  $region41: #{transformer_forward.12} parent=0 // pred_fallthru
    _
  // Predicated region
  $region42: #{transformer_forward.12} parent=0 // pred_check
    _
  $region43: #{transformer_forward.12} parent=0 // pred_check_branch
    %226 = sbr.rel (0) target = $region45
  $region44: #{transformer_forward.12} parent=0 // pred_region
    _
  $region45: #{transformer_forward.12} parent=0 // pred_fallthru
    _

// kernel: transformer_forward.15
$region0: #{transformer_forward.15}
  #allocation0 [shape = 'u32[]', space=smem, size = 0x4, offset = 0x4, fixed_abs, tag = 'smem constant byte address 0x4 - core index']
  #allocation1 [shape = 'u32[72,128]{1,0:T(1,128)}', space=vmem, size = 0x9000, scoped, tag = 'internal scratch']
  #allocation2 [shape = 'bf16[4,8,8]{2,1,0:T(8,128)(2,1)}', space=vmem, size = 0x2000, scoped, tag = 'scratch operand']
  #allocation3 [shape = 'f32[4,8,1]{2,1,0:T(8,128)}', space=vmem, size = 0x4000, scoped, tag = 'scratch operand']
  #allocation4 [shape = 'f32[4,8,1]{2,1,0:T(8,128)}', space=vmem, size = 0x4000, scoped, tag = 'scratch operand']
  #allocation5 [shape = 'f32[4,8,8]{2,1,0:T(8,128)}', space=vmem, size = 0x4000, scoped, tag = 'scratch operand']
  %s0 = inlined_call_operand.vmem [shape: bf16[2,8,32], index: 0, kind: input, shape index: {}]
  %s1 = inlined_call_operand.vmem [shape: bf16[2,4,8,8], index: 1, kind: input, shape index: {}, may-alias: {1,2}]
  %s2 = inlined_call_operand.vmem [shape: bf16[2,4,8,8], index: 2, kind: input, shape index: {}, may-alias: {1,2}]
  %s3 = inlined_call_operand.vmem [shape: bf16[8,8], index: 3, kind: input, shape index: {}]
  %s4 = inlined_call_operand.vmem [shape: bf16[8,8], index: 4, kind: input, shape index: {}]
  %s5 = inlined_call_operand.vmem [shape: bf16[8,8], index: 5, kind: input, shape index: {}]
  %s6 = inlined_call_operand.vmem [shape: bf16[4,8,32], index: 6, kind: input, shape index: {}]
  %s7 = inlined_call_operand.vmem [shape: f32[1,32], index: 7, kind: input, shape index: {}]
  %s8 = inlined_call_operand.vmem [shape: f32[1,32], index: 8, kind: input, shape index: {}]
  %s9 = inlined_call_operand.vmem [shape: f32[1,32], index: 9, kind: input, shape index: {}]
  %s10 = inlined_call_operand.vmem [shape: bf16[2,8,32], index: 10, kind: output, shape index: {}]
  %s11 = sld [smem:[#allocation0]]
  $region81: #{transformer_forward.15} parent=0
    _
  %s13 = ssub.s32 1, %s11
  %s14 = scalar_select 0, %s13, %s11
  loop: start=0, step=1, limit=4
  $region2: #{transformer_forward.15} parent=0 // loop_pre_header
    _
  $region3: #{transformer_forward.15} parent=0 // loop_header
    %s16 = sphi 0, %s20
    %p17 = scmp.ge.s32.totalorder %s16, 4
    %s23 = sphi 0, %s42
    %s24 = sphi 0, %s38
    %s25 = sphi 0, %s34
    %s26 = sphi 0, %s23
    %s27 = sphi 0, %s24
    %s28 = sphi 0, %s25
    %s29 = sphi 0, %s26
    %s30 = sphi 0, %s27
    %s31 = sphi 0, %s28
    %s47 = sphi 0, %s49
    %s50 = sphi 0, %s47
    %s51 = sphi 0, %s50
    %s67 = sphi 0, %s51
    %s75 = sphi 0, %s77
    %s78 = sphi 0, %s75
    %s79 = sphi 0, %s78
    %s95 = sphi 0, %s79
    %s103 = sphi 0, %s105
    %s106 = sphi 0, %s103
    %s107 = sphi 0, %s106
    %s123 = sphi 0, %s107
    %s127 = sphi 0, %s127
    %s129 = sphi 0, %s127
    %s130 = sphi 0, %s129
    %s144 = sphi 0, %s130
    %s148 = sphi 0, %s148
    %s150 = sphi 0, %s148
    %s151 = sphi 0, %s150
    %s165 = sphi 0, %s151
    %s169 = sphi 0, %s169
    %s171 = sphi 0, %s169
    %s172 = sphi 0, %s171
    %s186 = sphi 0, %s172
    %s190 = sphi 0, %s190
    %s192 = sphi 0, %s190
    %s193 = sphi 0, %s192
    %s207 = sphi 0, %s193
    %s211 = sphi 0, %s211
    %s213 = sphi 0, %s211
    %s214 = sphi 0, %s213
    %s228 = sphi 0, %s214
    %s232 = sphi 0, %s232
    %s234 = sphi 0, %s232
    %s235 = sphi 0, %s234
    %s249 = sphi 0, %s235
    %s253 = sphi 0, %s253
    %s255 = sphi 0, %s253
    %s256 = sphi 0, %s255
    %s270 = sphi 0, %s256
    %s278 = sphi 0, %s280
    %s281 = sphi 0, %s278
    %s282 = sphi 0, %s281
    %s298 = sphi 0, %s282
  $region4: #{transformer_forward.15} parent=0 // loop_header_branch
    %19 = sbr.rel (%p17) target = $region8
  $region5: #{transformer_forward.15} parent=0 // loop_body
    %s21 = ssub.s32 %s16, 1
    %s22 = ssub.s32 %s16, 2
    %s32 = sadd.s32 1, %s25
    %p33 = scmp.ge.s32.totalorder %s32, 1
    %s34 = scalar_select %p33, 0, %s32
    %s35 = sadd.s32 1, %s24
    %s36 = scalar_select %p33, %s35, %s24
    %p37 = scmp.ge.s32.totalorder %s36, 1
    %s38 = scalar_select %p37, 0, %s36
    %s39 = sadd.s32 1, %s23
    %s40 = scalar_select %p37, %s39, %s23
    %p41 = scmp.ge.s32.totalorder %s40, 2
    %s42 = scalar_select %p41, 0, %s40
    %s43 = ssub.s32 %s23, %s42
    %s44 = ssub.s32 %s24, %s38
    %s45 = sor.u32 %s43, %s44
    %p46 = scmp.eq.s32.totalorder %s45, 0
    %s48 = sadd.s32 %s47, 1
    %s49 = scalar_select %p46, %s47, %s48
    %p52 = pneg %p46
    %p53 = scmp.eq.s32.totalorder %s16, 1
    %p54 = por %p52, %p53
    %p55 = scmp.ne.s32.totalorder %s47, %s50
    %p56 = scmp.eq.s32.totalorder %s16, 0
    %p57 = por %p55, %p56
    %p58 = scmp.ne.s32.totalorder %s47, %s50
    %p59 = scmp.eq.s32.totalorder %s21, 1
    %p60 = por %p58, %p59
    %p61 = scmp.ne.s32.totalorder %s50, %s51
    %p62 = scmp.eq.s32.totalorder %s21, 0
    %p63 = por %p61, %p62
    %p64 = scmp.ne.s32.totalorder %s50, %s51
    %p65 = scmp.eq.s32.totalorder %s22, 1
    %p66 = por %p64, %p65
    %p68 = scmp.ne.s32.totalorder %s51, %s67
    %p69 = scmp.eq.s32.totalorder %s22, 0
    %p70 = por %p68, %p69
    %s71 = ssub.s32 %s23, %s42
    %s72 = ssub.s32 %s24, %s38
    %s73 = sor.u32 %s71, %s72
    %p74 = scmp.eq.s32.totalorder %s73, 0
    %s76 = sadd.s32 %s75, 1
    %s77 = scalar_select %p74, %s75, %s76
    %p80 = pneg %p74
    %p81 = scmp.eq.s32.totalorder %s16, 1
    %p82 = por %p80, %p81
    %p83 = scmp.ne.s32.totalorder %s75, %s78
    %p84 = scmp.eq.s32.totalorder %s16, 0
    %p85 = por %p83, %p84
    %p86 = scmp.ne.s32.totalorder %s75, %s78
    %p87 = scmp.eq.s32.totalorder %s21, 1
    %p88 = por %p86, %p87
    %p89 = scmp.ne.s32.totalorder %s78, %s79
    %p90 = scmp.eq.s32.totalorder %s21, 0
    %p91 = por %p89, %p90
    %p92 = scmp.ne.s32.totalorder %s78, %s79
    %p93 = scmp.eq.s32.totalorder %s22, 1
    %p94 = por %p92, %p93
    %p96 = scmp.ne.s32.totalorder %s79, %s95
    %p97 = scmp.eq.s32.totalorder %s22, 0
    %p98 = por %p96, %p97
    %s99 = ssub.s32 %s23, %s42
    %s100 = ssub.s32 %s25, %s34
    %s101 = sor.u32 %s99, %s100
    %p102 = scmp.eq.s32.totalorder %s101, 0
    %s104 = sadd.s32 %s103, 1
    %s105 = scalar_select %p102, %s103, %s104
    %p108 = pneg %p102
    %p109 = scmp.eq.s32.totalorder %s16, 1
    %p110 = por %p108, %p109
    %p111 = scmp.ne.s32.totalorder %s103, %s106
    %p112 = scmp.eq.s32.totalorder %s16, 0
    %p113 = por %p111, %p112
    %p114 = scmp.ne.s32.totalorder %s103, %s106
    %p115 = scmp.eq.s32.totalorder %s21, 1
    %p116 = por %p114, %p115
    %p117 = scmp.ne.s32.totalorder %s106, %s107
    %p118 = scmp.eq.s32.totalorder %s21, 0
    %p119 = por %p117, %p118
    %p120 = scmp.ne.s32.totalorder %s106, %s107
    %p121 = scmp.eq.s32.totalorder %s22, 1
    %p122 = por %p120, %p121
    %p124 = scmp.ne.s32.totalorder %s107, %s123
    %p125 = scmp.eq.s32.totalorder %s22, 0
    %p126 = por %p124, %p125
    %s128 = sadd.s32 %s127, 1
    %p131 = scmp.eq.s32.totalorder %s16, 1
    %p132 = scmp.ne.s32.totalorder %s127, %s129
    %p133 = scmp.eq.s32.totalorder %s16, 0
    %p134 = por %p132, %p133
    %p135 = scmp.ne.s32.totalorder %s127, %s129
    %p136 = scmp.eq.s32.totalorder %s21, 1
    %p137 = por %p135, %p136
    %p138 = scmp.ne.s32.totalorder %s129, %s130
    %p139 = scmp.eq.s32.totalorder %s21, 0
    %p140 = por %p138, %p139
    %p141 = scmp.ne.s32.totalorder %s129, %s130
    %p142 = scmp.eq.s32.totalorder %s22, 1
    %p143 = por %p141, %p142
    %p145 = scmp.ne.s32.totalorder %s130, %s144
    %p146 = scmp.eq.s32.totalorder %s22, 0
    %p147 = por %p145, %p146
    %s149 = sadd.s32 %s148, 1
    %p152 = scmp.eq.s32.totalorder %s16, 1
    %p153 = scmp.ne.s32.totalorder %s148, %s150
    %p154 = scmp.eq.s32.totalorder %s16, 0
    %p155 = por %p153, %p154
    %p156 = scmp.ne.s32.totalorder %s148, %s150
    %p157 = scmp.eq.s32.totalorder %s21, 1
    %p158 = por %p156, %p157
    %p159 = scmp.ne.s32.totalorder %s150, %s151
    %p160 = scmp.eq.s32.totalorder %s21, 0
    %p161 = por %p159, %p160
    %p162 = scmp.ne.s32.totalorder %s150, %s151
    %p163 = scmp.eq.s32.totalorder %s22, 1
    %p164 = por %p162, %p163
    %p166 = scmp.ne.s32.totalorder %s151, %s165
    %p167 = scmp.eq.s32.totalorder %s22, 0
    %p168 = por %p166, %p167
    %s170 = sadd.s32 %s169, 1
    %p173 = scmp.eq.s32.totalorder %s16, 1
    %p174 = scmp.ne.s32.totalorder %s169, %s171
    %p175 = scmp.eq.s32.totalorder %s16, 0
    %p176 = por %p174, %p175
    %p177 = scmp.ne.s32.totalorder %s169, %s171
    %p178 = scmp.eq.s32.totalorder %s21, 1
    %p179 = por %p177, %p178
    %p180 = scmp.ne.s32.totalorder %s171, %s172
    %p181 = scmp.eq.s32.totalorder %s21, 0
    %p182 = por %p180, %p181
    %p183 = scmp.ne.s32.totalorder %s171, %s172
    %p184 = scmp.eq.s32.totalorder %s22, 1
    %p185 = por %p183, %p184
    %p187 = scmp.ne.s32.totalorder %s172, %s186
    %p188 = scmp.eq.s32.totalorder %s22, 0
    %p189 = por %p187, %p188
    %s191 = sadd.s32 %s190, 1
    %p194 = scmp.eq.s32.totalorder %s16, 1
    %p195 = scmp.ne.s32.totalorder %s190, %s192
    %p196 = scmp.eq.s32.totalorder %s16, 0
    %p197 = por %p195, %p196
    %p198 = scmp.ne.s32.totalorder %s190, %s192
    %p199 = scmp.eq.s32.totalorder %s21, 1
    %p200 = por %p198, %p199
    %p201 = scmp.ne.s32.totalorder %s192, %s193
    %p202 = scmp.eq.s32.totalorder %s21, 0
    %p203 = por %p201, %p202
    %p204 = scmp.ne.s32.totalorder %s192, %s193
    %p205 = scmp.eq.s32.totalorder %s22, 1
    %p206 = por %p204, %p205
    %p208 = scmp.ne.s32.totalorder %s193, %s207
    %p209 = scmp.eq.s32.totalorder %s22, 0
    %p210 = por %p208, %p209
    %s212 = sadd.s32 %s211, 1
    %p215 = scmp.eq.s32.totalorder %s16, 1
    %p216 = scmp.ne.s32.totalorder %s211, %s213
    %p217 = scmp.eq.s32.totalorder %s16, 0
    %p218 = por %p216, %p217
    %p219 = scmp.ne.s32.totalorder %s211, %s213
    %p220 = scmp.eq.s32.totalorder %s21, 1
    %p221 = por %p219, %p220
    %p222 = scmp.ne.s32.totalorder %s213, %s214
    %p223 = scmp.eq.s32.totalorder %s21, 0
    %p224 = por %p222, %p223
    %p225 = scmp.ne.s32.totalorder %s213, %s214
    %p226 = scmp.eq.s32.totalorder %s22, 1
    %p227 = por %p225, %p226
    %p229 = scmp.ne.s32.totalorder %s214, %s228
    %p230 = scmp.eq.s32.totalorder %s22, 0
    %p231 = por %p229, %p230
    %s233 = sadd.s32 %s232, 1
    %p236 = scmp.eq.s32.totalorder %s16, 1
    %p237 = scmp.ne.s32.totalorder %s232, %s234
    %p238 = scmp.eq.s32.totalorder %s16, 0
    %p239 = por %p237, %p238
    %p240 = scmp.ne.s32.totalorder %s232, %s234
    %p241 = scmp.eq.s32.totalorder %s21, 1
    %p242 = por %p240, %p241
    %p243 = scmp.ne.s32.totalorder %s234, %s235
    %p244 = scmp.eq.s32.totalorder %s21, 0
    %p245 = por %p243, %p244
    %p246 = scmp.ne.s32.totalorder %s234, %s235
    %p247 = scmp.eq.s32.totalorder %s22, 1
    %p248 = por %p246, %p247
    %p250 = scmp.ne.s32.totalorder %s235, %s249
    %p251 = scmp.eq.s32.totalorder %s22, 0
    %p252 = por %p250, %p251
    %s254 = sadd.s32 %s253, 1
    %p257 = scmp.eq.s32.totalorder %s16, 1
    %p258 = scmp.ne.s32.totalorder %s253, %s255
    %p259 = scmp.eq.s32.totalorder %s16, 0
    %p260 = por %p258, %p259
    %p261 = scmp.ne.s32.totalorder %s253, %s255
    %p262 = scmp.eq.s32.totalorder %s21, 1
    %p263 = por %p261, %p262
    %p264 = scmp.ne.s32.totalorder %s255, %s256
    %p265 = scmp.eq.s32.totalorder %s21, 0
    %p266 = por %p264, %p265
    %p267 = scmp.ne.s32.totalorder %s255, %s256
    %p268 = scmp.eq.s32.totalorder %s22, 1
    %p269 = por %p267, %p268
    %p271 = scmp.ne.s32.totalorder %s256, %s270
    %p272 = scmp.eq.s32.totalorder %s22, 0
    %p273 = por %p271, %p272
    %s274 = ssub.s32 %s23, %s42
    %s275 = ssub.s32 %s24, %s38
    %s276 = sor.u32 %s274, %s275
    %p277 = scmp.eq.s32.totalorder %s276, 0
    %s279 = sadd.s32 %s278, 1
    %s280 = scalar_select %p277, %s278, %s279
    %p283 = pneg %p277
    %p284 = scmp.eq.s32.totalorder %s16, 1
    %p285 = por %p283, %p284
    %p286 = scmp.ne.s32.totalorder %s278, %s281
    %p287 = scmp.eq.s32.totalorder %s16, 0
    %p288 = por %p286, %p287
    %p289 = scmp.ne.s32.totalorder %s278, %s281
    %p290 = scmp.eq.s32.totalorder %s21, 1
    %p291 = por %p289, %p290
    %p292 = scmp.ne.s32.totalorder %s281, %s282
    %p293 = scmp.eq.s32.totalorder %s21, 0
    %p294 = por %p292, %p293
    %p295 = scmp.ne.s32.totalorder %s281, %s282
    %p296 = scmp.eq.s32.totalorder %s22, 1
    %p297 = por %p295, %p296
    %p299 = scmp.ne.s32.totalorder %s282, %s298
    %p300 = scmp.eq.s32.totalorder %s22, 0
    %p301 = por %p299, %p300
    %p302 = scmp.le.s32.totalorder 1, %s16
    %p303 = scmp.lt.s32.totalorder %s16, 3
    %p304 = pnand %p302, %p303
    %p305 = pneg %p304
    // Predicated region
    $region9: #{transformer_forward.15} parent=5 // pred_check
      _
    $region10: #{transformer_forward.15} parent=5 // pred_check_branch
      %307 = sbr.rel (%p304) target = $region12
    $region11: #{transformer_forward.15} parent=5 // pred_region
      %s308 = ssub.s32 %s16, 1
      // Predicated region
      $region13: #{transformer_forward.15} parent=11 // pred_check
        %p309 = pneg %p140
      $region14: #{transformer_forward.15} parent=11 // pred_check_branch
        %311 = sbr.rel (%p309) target = $region16
      $region15: #{transformer_forward.15} parent=11 // pred_region
        _
      $region16: #{transformer_forward.15} parent=11 // pred_fallthru
        _
      // Predicated region
      $region17: #{transformer_forward.15} parent=11 // pred_check
        %p312 = pneg %p161
      $region18: #{transformer_forward.15} parent=11 // pred_check_branch
        %314 = sbr.rel (%p312) target = $region20
      $region19: #{transformer_forward.15} parent=11 // pred_region
        _
      $region20: #{transformer_forward.15} parent=11 // pred_fallthru
        _
      // Predicated region
      $region21: #{transformer_forward.15} parent=11 // pred_check
        %p315 = pneg %p182
      $region22: #{transformer_forward.15} parent=11 // pred_check_branch
        %317 = sbr.rel (%p315) target = $region24
      $region23: #{transformer_forward.15} parent=11 // pred_region
        _
      $region24: #{transformer_forward.15} parent=11 // pred_fallthru
        _
      // Predicated region
      $region25: #{transformer_forward.15} parent=11 // pred_check
        %p318 = pneg %p203
      $region26: #{transformer_forward.15} parent=11 // pred_check_branch
        %320 = sbr.rel (%p318) target = $region28
      $region27: #{transformer_forward.15} parent=11 // pred_region
        _
      $region28: #{transformer_forward.15} parent=11 // pred_fallthru
        _
      // Predicated region
      $region29: #{transformer_forward.15} parent=11 // pred_check
        %p321 = pneg %p224
      $region30: #{transformer_forward.15} parent=11 // pred_check_branch
        %323 = sbr.rel (%p321) target = $region32
      $region31: #{transformer_forward.15} parent=11 // pred_region
        _
      $region32: #{transformer_forward.15} parent=11 // pred_fallthru
        _
      // Predicated region
      $region33: #{transformer_forward.15} parent=11 // pred_check
        %p324 = pneg %p245
      $region34: #{transformer_forward.15} parent=11 // pred_check_branch
        %326 = sbr.rel (%p324) target = $region36
      $region35: #{transformer_forward.15} parent=11 // pred_region
        _
      $region36: #{transformer_forward.15} parent=11 // pred_fallthru
        _
      // Predicated region
      $region37: #{transformer_forward.15} parent=11 // pred_check
        %p327 = pneg %p266
      $region38: #{transformer_forward.15} parent=11 // pred_check_branch
        %329 = sbr.rel (%p327) target = $region40
      $region39: #{transformer_forward.15} parent=11 // pred_region
        _
      $region40: #{transformer_forward.15} parent=11 // pred_fallthru
        _
    $region12: #{transformer_forward.15} parent=5 // pred_fallthru
      _
    %p330 = scmp.lt.s32.totalorder %s16, 2
    // Predicated region
    $region41: #{transformer_forward.15} parent=5 // pred_check
      %p331 = pneg %p330
    $region42: #{transformer_forward.15} parent=5 // pred_check_branch
      %333 = sbr.rel (%p331) target = $region44
    $region43: #{transformer_forward.15} parent=5 // pred_region
      // Predicated region
      $region45: #{transformer_forward.15} parent=43 // pred_check
        %p334 = pneg %p57
      $region46: #{transformer_forward.15} parent=43 // pred_check_branch
        %336 = sbr.rel (%p334) target = $region48
      $region47: #{transformer_forward.15} parent=43 // pred_region
        %p337 = scmp.lt.s32.totalorder %s23, 1
        %s338 = scalar_select %p337, %s23, 1
        %p339 = scmp.lt.s32.totalorder %s24, 0
        %s340 = scalar_select %p339, %s24, 0
        %s341 = sadd.s32 %s340, %s338
        %s342 = smul.addr %s341, 4
        %s343 = scalar_lea.vmem %s0, %s342
      $region48: #{transformer_forward.15} parent=43 // pred_fallthru
        _
      // Predicated region
      $region49: #{transformer_forward.15} parent=43 // pred_check
        %p344 = pneg %p85
      $region50: #{transformer_forward.15} parent=43 // pred_check_branch
        %346 = sbr.rel (%p344) target = $region52
      $region51: #{transformer_forward.15} parent=43 // pred_region
        %p347 = scmp.lt.s32.totalorder %s23, 1
        %s348 = scalar_select %p347, %s23, 1
        %p349 = scmp.lt.s32.totalorder %s24, 0
        %s350 = scalar_select %p349, %s24, 0
        %s351 = smul.addr %s348, 4
        %s352 = sadd.s32 %s350, %s351
        %s353 = smul.addr %s352, 4
        %s354 = scalar_lea.vmem %s1, %s353
      $region52: #{transformer_forward.15} parent=43 // pred_fallthru
        _
      // Predicated region
      $region53: #{transformer_forward.15} parent=43 // pred_check
        %p355 = pneg %p113
      $region54: #{transformer_forward.15} parent=43 // pred_check_branch
        %357 = sbr.rel (%p355) target = $region56
      $region55: #{transformer_forward.15} parent=43 // pred_region
        %p358 = scmp.lt.s32.totalorder %s23, 1
        %s359 = scalar_select %p358, %s23, 1
        %p360 = scmp.lt.s32.totalorder %s25, 0
        %s361 = scalar_select %p360, %s25, 0
        %s362 = smul.addr %s359, 4
        %s363 = sadd.s32 %s361, %s362
        %s364 = smul.addr %s363, 4
        %s365 = scalar_lea.vmem %s2, %s364
      $region56: #{transformer_forward.15} parent=43 // pred_fallthru
        _
    $region44: #{transformer_forward.15} parent=5 // pred_fallthru
      _
    %p366 = scmp.le.s32.totalorder 1, %s16
    %p367 = scmp.lt.s32.totalorder %s16, 3
    %p368 = pnand %p366, %p367
    %p369 = pneg %p368
    // Predicated region
    $region57: #{transformer_forward.15} parent=5 // pred_check
      _
    $region58: #{transformer_forward.15} parent=5 // pred_check_branch
      %371 = sbr.rel (%p368) target = $region60
    $region59: #{transformer_forward.15} parent=5 // pred_region
      %s372 = ssub.s32 %s16, 1
      %p373 = scmp.lt.s32.totalorder %s26, 1
      %s374 = scalar_select %p373, %s26, 1
      %p375 = scmp.lt.s32.totalorder %s27, 0
      %s376 = scalar_select %p375, %s27, 0
      %s377 = sadd.s32 %s376, %s374
      %s378 = smul.addr %s377, 4
      %s379 = scalar_lea.vmem %s0, %s378
      %p380 = pneg %p63
      %p381 = pneg %p60
      %p382 = scmp.lt.s32.totalorder %s26, 1
      %s383 = scalar_select %p382, %s26, 1
      %p384 = scmp.lt.s32.totalorder %s27, 0
      %s385 = scalar_select %p384, %s27, 0
      %s386 = smul.addr %s383, 4
      %s387 = sadd.s32 %s385, %s386
      %s388 = smul.addr %s387, 4
      %s389 = scalar_lea.vmem %s1, %s388
      %p390 = pneg %p91
      %p391 = pneg %p88
      %p392 = scmp.lt.s32.totalorder %s26, 1
      %s393 = scalar_select %p392, %s26, 1
      %p394 = scmp.lt.s32.totalorder %s28, 0
      %s395 = scalar_select %p394, %s28, 0
      %s396 = smul.addr %s393, 4
      %s397 = sadd.s32 %s395, %s396
      %s398 = smul.addr %s397, 4
      %s399 = scalar_lea.vmem %s2, %s398
      %p400 = pneg %p119
      %p401 = pneg %p116
      %p402 = pneg %p140
      %p403 = pneg %p137
      %p404 = pneg %p161
      %p405 = pneg %p158
      %p406 = pneg %p182
      %p407 = pneg %p179
      %p408 = pneg %p203
      %p409 = pneg %p200
      %p410 = pneg %p224
      %p411 = pneg %p221
      %p412 = pneg %p245
      %p413 = pneg %p242
      %p414 = pneg %p266
      %p415 = pneg %p263
      %p416 = pneg %p294
      %p417 = pneg %p291
      %p418 = scmp.lt.s32.totalorder %s26, 1
      %s419 = scalar_select %p418, %s26, 1
      %p420 = scmp.lt.s32.totalorder %s27, 0
      %s421 = scalar_select %p420, %s27, 0
      %s422 = sadd.s32 %s421, %s419
      %s423 = smul.addr %s422, 4
      %s424 = scalar_lea.vmem %s10, %s423
      %p425 = scmp.lt.s32.totalorder %s26, 1
      %s426 = scalar_select %p425, %s26, 1
      %p427 = scmp.lt.s32.totalorder %s27, 0
      %s428 = scalar_select %p427, %s27, 0
      %s429 = sadd.s32 %s428, %s426
      %s430 = smul.addr %s429, 4
      %s431 = scalar_lea.vmem %s0, %s430
      %p432 = scmp.lt.s32.totalorder %s26, 1
      %s433 = scalar_select %p432, %s26, 1
      %p434 = scmp.lt.s32.totalorder %s27, 0
      %s435 = scalar_select %p434, %s27, 0
      %s436 = smul.addr %s433, 4
      %s437 = sadd.s32 %s435, %s436
      %s438 = smul.addr %s437, 4
      %s439 = scalar_lea.vmem %s1, %s438
      %p440 = scmp.lt.s32.totalorder %s26, 1
      %s441 = scalar_select %p440, %s26, 1
      %p442 = scmp.lt.s32.totalorder %s28, 0
      %s443 = scalar_select %p442, %s28, 0
      %s444 = smul.addr %s441, 4
      %s445 = sadd.s32 %s443, %s444
      %s446 = smul.addr %s445, 4
      %s447 = scalar_lea.vmem %s2, %s446
      %p448 = scmp.lt.s32.totalorder %s26, 1
      %s449 = scalar_select %p448, %s26, 1
      %p450 = scmp.lt.s32.totalorder %s27, 0
      %s451 = scalar_select %p450, %s27, 0
      %s452 = sadd.s32 %s451, %s449
      %s453 = smul.addr %s452, 4
      %s454 = scalar_lea.vmem %s10, %s453
      %p456 = scmp.eq.s32.totalorder %s28, 0
      // Predicated region
      $region61: #{transformer_forward.15} parent=59 // pred_check
        %p457 = pneg %p456
      $region62: #{transformer_forward.15} parent=59 // pred_check_branch
        %459 = sbr.rel (%p457) target = $region64
      $region63: #{transformer_forward.15} parent=59 // pred_region
        %v460 = vld [vmem:[%s439] sm:$0xf]
        %v461 = vld [vmem:[%s439 + $0x4] sm:$0xf]
        %v462 = vld [vmem:[%s439 + $0x8] sm:$0xf]
        %v463 = vld [vmem:[%s439 + $0xc] sm:$0xf]
        %v464 = vld [vmem:[%s5] sm:$0xf]
        %v469 = vunpack.c.l.b16 %v460
        %v470 = vunpack.c.l.b16 %v461
        %v471 = vunpack.c.l.b16 %v462
        %v472 = vunpack.c.l.b16 %v463
        %v473 = vpack.c.b16 %v470, %v469
        %v474 = vpack.c.b16 %v472, %v471
        %vm475 = vcmask 64512
        %v477 = vsel %vm475, %v473, 0
        %v480 = vsel %vm475, %v474, 0
        %vm482 = vcmask 1043456
        %v484 = vsel %vm482, %v464, 0
        %486 = vmatpush.bf16.msra.mxu0 0
        %487 = vmatpush.bf16.msra.mxu0 0
        %488 = vmatpush.bf16.msra.mxu0 0
        %489 = vmatpush.bf16.msra.mxu0 0
        %490 = vmatpush.bf16.msra.mxu0 0
        %491 = vmatpush.bf16.msra.mxu0 0
        %492 = vmatpush.bf16.msra.mxu0 0
        %493 = vmatpush.bf16.msra.mxu0 %v484
        %494 = vmatmul.bf16.gmra.mxu0 %v477
        %v495 = vpop.f32.mrf.mxu0
        %v496 = vadd.f32 0.0, %v495
        %v497 = vpop.f32.mrf.mxu0
        %v498 = vadd.f32 0.0, %v497
        %499 = vmatmul.bf16.gmra.mxu0 %v480
        %v500 = vpop.f32.mrf.mxu0
        %v501 = vadd.f32 0.0, %v500
        %v502 = vpop.f32.mrf.mxu0
        %v503 = vadd.f32 0.0, %v502
        %504 = vdwg.mxu0
        %v505 = vpack.c.bf16 %v496, %v496
        %v506 = vpack.c.bf16 %v498, %v498
        %v507 = vpack.c.bf16 %v501, %v501
        %v508 = vpack.c.bf16 %v503, %v503
        %vm509 = vcmask 60416
        %510 = vst.msk [vmem:[#allocation2] sm:$0xf] %vm509, %v505
        %511 = vst.msk [vmem:[#allocation2 + $0x4] sm:$0xf] %vm509, %v506
        %512 = vst.msk [vmem:[#allocation2 + $0x8] sm:$0xf] %vm509, %v507
        %513 = vst.msk [vmem:[#allocation2 + $0xc] sm:$0xf] %vm509, %v508
        %vm514 = vcmask 7168
        %515 = vst.msk [vmem:[#allocation3] sm:$0xff] %vm514, -inf
        %516 = vst.msk [vmem:[#allocation3 + $0x8] sm:$0xff] %vm514, -inf
        %517 = vst.msk [vmem:[#allocation3 + $0x10] sm:$0xff] %vm514, -inf
        %518 = vst.msk [vmem:[#allocation3 + $0x18] sm:$0xff] %vm514, -inf
        %519 = vst.msk [vmem:[#allocation4] sm:$0xff] %vm514, 0.0
        %520 = vst.msk [vmem:[#allocation4 + $0x8] sm:$0xff] %vm514, 0.0
        %521 = vst.msk [vmem:[#allocation4 + $0x10] sm:$0xff] %vm514, 0.0
        %522 = vst.msk [vmem:[#allocation4 + $0x18] sm:$0xff] %vm514, 0.0
        %523 = vst.msk [vmem:[#allocation5] sm:$0xff] %vm475, 0.0
        %524 = vst.msk [vmem:[#allocation5 + $0x8] sm:$0xff] %vm475, 0.0
        %525 = vst.msk [vmem:[#allocation5 + $0x10] sm:$0xff] %vm475, 0.0
        %526 = vst.msk [vmem:[#allocation5 + $0x18] sm:$0xff] %vm475, 0.0
      $region64: #{transformer_forward.15} parent=59 // pred_fallthru
        _
      %v527 = vld [vmem:[%s447] sm:$0xf]
      %v528 = vld [vmem:[%s447 + $0x4] sm:$0xf]
      %v529 = vld [vmem:[%s447 + $0x8] sm:$0xf]
      %v530 = vld [vmem:[%s447 + $0xc] sm:$0xf]
      %v531 = vld [vmem:[%s4] sm:$0xf]
      %v536 = vunpack.c.l.b16 %v527
      %v537 = vunpack.c.l.b16 %v528
      %v538 = vunpack.c.l.b16 %v529
      %v539 = vunpack.c.l.b16 %v530
      %v540 = vpack.c.b16 %v537, %v536
      %v541 = vpack.c.b16 %v539, %v538
      %vm542 = vcmask 64512
      %v544 = vsel %vm542, %v540, 0
      %v547 = vsel %vm542, %v541, 0
      %vm549 = vcmask 1043456
      %v551 = vsel %vm549, %v531, 0
      %553 = vmatpush.bf16.msra.mxu0 0
      %554 = vmatpush.bf16.msra.mxu0 0
      %555 = vmatpush.bf16.msra.mxu0 0
      %556 = vmatpush.bf16.msra.mxu0 0
      %557 = vmatpush.bf16.msra.mxu0 0
      %558 = vmatpush.bf16.msra.mxu0 0
      %559 = vmatpush.bf16.msra.mxu0 0
      %560 = vmatpush.bf16.msra.mxu0 %v551
      %561 = vmatmul.bf16.gmra.mxu0 %v544
      %v562 = vpop.f32.mrf.mxu0
      %v563 = vadd.f32 0.0, %v562
      %v564 = vpop.f32.mrf.mxu0
      %v565 = vadd.f32 0.0, %v564
      %566 = vmatmul.bf16.gmra.mxu0 %v547
      %v567 = vpop.f32.mrf.mxu0
      %v568 = vadd.f32 0.0, %v567
      %v569 = vpop.f32.mrf.mxu0
      %v570 = vadd.f32 0.0, %v569
      %571 = vdwg.mxu0
      %v572 = vld [vmem:[%s3] sm:$0xf]
      %v574 = vsel %vm549, %v572, 0
      %576 = vmatpush.bf16.msra.mxu0 0
      %577 = vmatpush.bf16.msra.mxu0 0
      %578 = vmatpush.bf16.msra.mxu0 0
      %579 = vmatpush.bf16.msra.mxu0 0
      %580 = vmatpush.bf16.msra.mxu0 0
      %581 = vmatpush.bf16.msra.mxu0 0
      %582 = vmatpush.bf16.msra.mxu0 0
      %583 = vmatpush.bf16.msra.mxu0 %v574
      %584 = vmatmul.bf16.gmra.mxu0 %v544
      %v585 = vpop.f32.mrf.mxu0
      %v586 = vadd.f32 0.0, %v585
      %v587 = vpop.f32.mrf.mxu0
      %v588 = vadd.f32 0.0, %v587
      %589 = vmatmul.bf16.gmra.mxu0 %v547
      %v590 = vpop.f32.mrf.mxu0
      %v591 = vadd.f32 0.0, %v590
      %v592 = vpop.f32.mrf.mxu0
      %v593 = vadd.f32 0.0, %v592
      %594 = vdwg.mxu0
      %v595 = vpack.c.bf16 %v563, %v563
      %v596 = vpack.c.bf16 %v565, %v565
      %v597 = vpack.c.bf16 %v568, %v568
      %v598 = vpack.c.bf16 %v570, %v570
      %v599 = vpack.c.bf16 %v586, %v586
      %v600 = vpack.c.bf16 %v588, %v588
      %v601 = vpack.c.bf16 %v591, %v591
      %v602 = vpack.c.bf16 %v593, %v593
      %v603 = vld [vmem:[#allocation2] sm:$0xf]
      %v604 = vld [vmem:[#allocation2 + $0x4] sm:$0xf]
      %v605 = vld [vmem:[#allocation2 + $0x8] sm:$0xf]
      %v606 = vld [vmem:[#allocation2 + $0xc] sm:$0xf]
      %v608 = vsel %vm542, %v603, 0
      %v611 = vsel %vm542, %v595, 0
      %613 = vmatpush.bf16.xpose.msra.mxu0 0
      %614 = vmatpush.bf16.xpose.msra.mxu0 0
      %615 = vmatpush.bf16.xpose.msra.mxu0 0
      %616 = vmatpush.bf16.xpose.msra.mxu0 0
      %617 = vmatpush.bf16.xpose.msra.mxu0 0
      %618 = vmatpush.bf16.xpose.msra.mxu0 0
      %619 = vmatpush.bf16.xpose.msra.mxu0 0
      %620 = vmatpush.bf16.xpose.msra.mxu0 %v611
      %621 = vmatmul.bf16.gmra.mxu0 %v608
      %v622 = vpop.f32.mrf.mxu0
      %v623 = vadd.f32 0.0, %v622
      %v624 = vpop.f32.mrf.mxu0
      %625 = vdwg.mxu0
      %v627 = vsel %vm542, %v604, 0
      %v630 = vsel %vm542, %v596, 0
      %632 = vmatpush.bf16.xpose.msra.mxu0 0
      %633 = vmatpush.bf16.xpose.msra.mxu0 0
      %634 = vmatpush.bf16.xpose.msra.mxu0 0
      %635 = vmatpush.bf16.xpose.msra.mxu0 0
      %636 = vmatpush.bf16.xpose.msra.mxu0 0
      %637 = vmatpush.bf16.xpose.msra.mxu0 0
      %638 = vmatpush.bf16.xpose.msra.mxu0 0
      %639 = vmatpush.bf16.xpose.msra.mxu0 %v630
      %640 = vmatmul.bf16.gmra.mxu0 %v627
      %v641 = vpop.f32.mrf.mxu0
      %v642 = vadd.f32 0.0, %v641
      %v643 = vpop.f32.mrf.mxu0
      %644 = vdwg.mxu0
      %v646 = vsel %vm542, %v605, 0
      %v649 = vsel %vm542, %v597, 0
      %651 = vmatpush.bf16.xpose.msra.mxu0 0
      %652 = vmatpush.bf16.xpose.msra.mxu0 0
      %653 = vmatpush.bf16.xpose.msra.mxu0 0
      %654 = vmatpush.bf16.xpose.msra.mxu0 0
      %655 = vmatpush.bf16.xpose.msra.mxu0 0
      %656 = vmatpush.bf16.xpose.msra.mxu0 0
      %657 = vmatpush.bf16.xpose.msra.mxu0 0
      %658 = vmatpush.bf16.xpose.msra.mxu0 %v649
      %659 = vmatmul.bf16.gmra.mxu0 %v646
      %v660 = vpop.f32.mrf.mxu0
      %v661 = vadd.f32 0.0, %v660
      %v662 = vpop.f32.mrf.mxu0
      %663 = vdwg.mxu0
      %v665 = vsel %vm542, %v606, 0
      %v668 = vsel %vm542, %v598, 0
      %670 = vmatpush.bf16.xpose.msra.mxu0 0
      %671 = vmatpush.bf16.xpose.msra.mxu0 0
      %672 = vmatpush.bf16.xpose.msra.mxu0 0
      %673 = vmatpush.bf16.xpose.msra.mxu0 0
      %674 = vmatpush.bf16.xpose.msra.mxu0 0
      %675 = vmatpush.bf16.xpose.msra.mxu0 0
      %676 = vmatpush.bf16.xpose.msra.mxu0 0
      %677 = vmatpush.bf16.xpose.msra.mxu0 %v668
      %678 = vmatmul.bf16.gmra.mxu0 %v665
      %v679 = vpop.f32.mrf.mxu0
      %v680 = vadd.f32 0.0, %v679
      %v681 = vpop.f32.mrf.mxu0
      %682 = vdwg.mxu0
      %v683 = vlaneseq
      %v684 = vshrl.u32 %v683, 7
      %s685 = smul.u32 %s27, 8
      %v686 = vstv %s685
      %v687 = vadd.s32 %v684, %v686
      %v688 = vlaneseq
      %v689 = vand.u32 %v688, 127
      %s690 = smul.u32 %s28, 8
      %v691 = vstv %s690
      %v692 = vadd.s32 %v689, %v691
      %vm693 = vcmp.ge.s32.totalorder %v687, %v692
      %v694 = vsel %vm693, 1, 0
      %vm695 = vcmp.eq.s32.totalorder %v694, 1
      %v696 = vsel %vm695, %v623, -1e+20
      %v697 = vsel %vm695, %v642, -1e+20
      %v698 = vsel %vm695, %v661, -1e+20
      %v699 = vsel %vm695, %v680, -1e+20
      %v700 = vld [vmem:[#allocation3] sm:$0xff]
      %v701 = vld [vmem:[#allocation3 + $0x8] sm:$0xff]
      %v702 = vld [vmem:[#allocation3 + $0x10] sm:$0xff]
      %v703 = vld [vmem:[#allocation3 + $0x18] sm:$0xff]
      %v704 = vsel %vm542, %v696, -inf
      %705 = vmax.xlane.f32.xlu0 %v704
      %v706 = vpop.xlane.xlu0 %705
      %v707 = vsel %vm542, %v697, -inf
      %708 = vmax.xlane.f32.xlu0 %v707
      %v709 = vpop.xlane.xlu0 %708
      %v710 = vsel %vm542, %v698, -inf
      %711 = vmax.xlane.f32.xlu0 %v710
      %v712 = vpop.xlane.xlu0 %711
      %v713 = vsel %vm542, %v699, -inf
      %714 = vmax.xlane.f32.xlu0 %v713
      %v715 = vpop.xlane.xlu0 %714
      %v716 = vmax.f32 %v700, %v706
      %v717 = vmax.f32 %v701, %v709
      %v718 = vmax.f32 %v702, %v712
      %v719 = vmax.f32 %v703, %v715
      %v720 = vsub.f32 %v700, %v716
      %v721 = vsub.f32 %v701, %v717
      %v722 = vsub.f32 %v702, %v718
      %v723 = vsub.f32 %v703, %v719
      %v724 = vmul.f32 %v720, 1.442695
      %v725 = vpow.pop %v724
      %v726 = vmul.f32 %v721, 1.442695
      %v727 = vpow.pop %v726
      %v728 = vmul.f32 %v722, 1.442695
      %v729 = vpow.pop %v728
      %v730 = vmul.f32 %v723, 1.442695
      %v731 = vpow.pop %v730
      %733 = vset.pattern.permute.xlu0 0
      %734 = vperm.xlu0 %733, %v716
      %v735 = vpop.permute.xlu0 %734
      %738 = vset.pattern.permute.xlu0 0
      %739 = vperm.xlu0 %738, %v717
      %v740 = vpop.permute.xlu0 %739
      %743 = vset.pattern.permute.xlu0 0
      %744 = vperm.xlu0 %743, %v718
      %v745 = vpop.permute.xlu0 %744
      %748 = vset.pattern.permute.xlu0 0
      %749 = vperm.xlu0 %748, %v719
      %v750 = vpop.permute.xlu0 %749
      %v752 = vsub.f32 %v696, %v735
      %v753 = vsub.f32 %v697, %v740
      %v754 = vsub.f32 %v698, %v745
      %v755 = vsub.f32 %v699, %v750
      %v756 = vmul.f32 %v752, 1.442695
      %v757 = vpow.pop %v756
      %v758 = vmul.f32 %v753, 1.442695
      %v759 = vpow.pop %v758
      %v760 = vmul.f32 %v754, 1.442695
      %v761 = vpow.pop %v760
      %v762 = vmul.f32 %v755, 1.442695
      %v763 = vpow.pop %v762
      %v764 = vld [vmem:[#allocation4] sm:$0xff]
      %v765 = vld [vmem:[#allocation4 + $0x8] sm:$0xff]
      %v766 = vld [vmem:[#allocation4 + $0x10] sm:$0xff]
      %v767 = vld [vmem:[#allocation4 + $0x18] sm:$0xff]
      %v768 = vmul.f32 %v725, %v764
      %v769 = vmul.f32 %v727, %v765
      %v770 = vmul.f32 %v729, %v766
      %v771 = vmul.f32 %v731, %v767
      %v772 = vsel %vm542, %v757, 0.0
      %773 = vadd.xlane.f32.xlu0 %v772
      %v774 = vpop.xlane.xlu0 %773
      %v775 = vsel %vm542, %v759, 0.0
      %776 = vadd.xlane.f32.xlu0 %v775
      %v777 = vpop.xlane.xlu0 %776
      %v778 = vsel %vm542, %v761, 0.0
      %779 = vadd.xlane.f32.xlu0 %v778
      %v780 = vpop.xlane.xlu0 %779
      %v781 = vsel %vm542, %v763, 0.0
      %782 = vadd.xlane.f32.xlu0 %v781
      %v783 = vpop.xlane.xlu0 %782
      %v784 = vadd.f32 %v768, %v774
      %v785 = vadd.f32 %v769, %v777
      %v786 = vadd.f32 %v770, %v780
      %v787 = vadd.f32 %v771, %v783
      %vm788 = vcmask 7168
      %789 = vst.msk [vmem:[#allocation4] sm:$0xff] %vm788, %v784
      %790 = vst.msk [vmem:[#allocation4 + $0x8] sm:$0xff] %vm788, %v785
      %791 = vst.msk [vmem:[#allocation4 + $0x10] sm:$0xff] %vm788, %v786
      %792 = vst.msk [vmem:[#allocation4 + $0x18] sm:$0xff] %vm788, %v787
      %v793 = vld [vmem:[#allocation5] sm:$0xff]
      %v794 = vld [vmem:[#allocation5 + $0x8] sm:$0xff]
      %v795 = vld [vmem:[#allocation5 + $0x10] sm:$0xff]
      %v796 = vld [vmem:[#allocation5 + $0x18] sm:$0xff]
      %798 = vset.pattern.permute.xlu0 0
      %799 = vperm.xlu0 %798, %v725
      %v800 = vpop.permute.xlu0 %799
      %803 = vset.pattern.permute.xlu0 0
      %804 = vperm.xlu0 %803, %v727
      %v805 = vpop.permute.xlu0 %804
      %808 = vset.pattern.permute.xlu0 0
      %809 = vperm.xlu0 %808, %v729
      %v810 = vpop.permute.xlu0 %809
      %813 = vset.pattern.permute.xlu0 0
      %814 = vperm.xlu0 %813, %v731
      %v815 = vpop.permute.xlu0 %814
      %v817 = vmul.f32 %v800, %v793
      %v818 = vmul.f32 %v805, %v794
      %v819 = vmul.f32 %v810, %v795
      %v820 = vmul.f32 %v815, %v796
      %v821 = vpack.c.bf16 %v757, %v757
      %v822 = vpack.c.bf16 %v759, %v759
      %v823 = vpack.c.bf16 %v761, %v761
      %v824 = vpack.c.bf16 %v763, %v763
      %v826 = vsel %vm542, %v821, 0
      %v829 = vsel %vm549, %v599, 0
      %831 = vmatpush.bf16.msra.mxu0 0
      %832 = vmatpush.bf16.msra.mxu0 0
      %833 = vmatpush.bf16.msra.mxu0 0
      %834 = vmatpush.bf16.msra.mxu0 0
      %835 = vmatpush.bf16.msra.mxu0 0
      %836 = vmatpush.bf16.msra.mxu0 0
      %837 = vmatpush.bf16.msra.mxu0 0
      %838 = vmatpush.bf16.msra.mxu0 %v829
      %839 = vmatmul.bf16.gmra.mxu0 %v826
      %v840 = vpop.f32.mrf.mxu0
      %v841 = vadd.f32 0.0, %v840
      %v842 = vpop.f32.mrf.mxu0
      %843 = vdwg.mxu0
      %v845 = vsel %vm542, %v822, 0
      %v848 = vsel %vm549, %v600, 0
      %850 = vmatpush.bf16.msra.mxu0 0
      %851 = vmatpush.bf16.msra.mxu0 0
      %852 = vmatpush.bf16.msra.mxu0 0
      %853 = vmatpush.bf16.msra.mxu0 0
      %854 = vmatpush.bf16.msra.mxu0 0
      %855 = vmatpush.bf16.msra.mxu0 0
      %856 = vmatpush.bf16.msra.mxu0 0
      %857 = vmatpush.bf16.msra.mxu0 %v848
      %858 = vmatmul.bf16.gmra.mxu0 %v845
      %v859 = vpop.f32.mrf.mxu0
      %v860 = vadd.f32 0.0, %v859
      %v861 = vpop.f32.mrf.mxu0
      %862 = vdwg.mxu0
      %v864 = vsel %vm542, %v823, 0
      %v867 = vsel %vm549, %v601, 0
      %869 = vmatpush.bf16.msra.mxu0 0
      %870 = vmatpush.bf16.msra.mxu0 0
      %871 = vmatpush.bf16.msra.mxu0 0
      %872 = vmatpush.bf16.msra.mxu0 0
      %873 = vmatpush.bf16.msra.mxu0 0
      %874 = vmatpush.bf16.msra.mxu0 0
      %875 = vmatpush.bf16.msra.mxu0 0
      %876 = vmatpush.bf16.msra.mxu0 %v867
      %877 = vmatmul.bf16.gmra.mxu0 %v864
      %v878 = vpop.f32.mrf.mxu0
      %v879 = vadd.f32 0.0, %v878
      %v880 = vpop.f32.mrf.mxu0
      %881 = vdwg.mxu0
      %v883 = vsel %vm542, %v824, 0
      %v886 = vsel %vm549, %v602, 0
      %888 = vmatpush.bf16.msra.mxu0 0
      %889 = vmatpush.bf16.msra.mxu0 0
      %890 = vmatpush.bf16.msra.mxu0 0
      %891 = vmatpush.bf16.msra.mxu0 0
      %892 = vmatpush.bf16.msra.mxu0 0
      %893 = vmatpush.bf16.msra.mxu0 0
      %894 = vmatpush.bf16.msra.mxu0 0
      %895 = vmatpush.bf16.msra.mxu0 %v886
      %896 = vmatmul.bf16.gmra.mxu0 %v883
      %v897 = vpop.f32.mrf.mxu0
      %v898 = vadd.f32 0.0, %v897
      %v899 = vpop.f32.mrf.mxu0
      %900 = vdwg.mxu0
      %v901 = vadd.f32 %v817, %v841
      %v902 = vadd.f32 %v818, %v860
      %v903 = vadd.f32 %v819, %v879
      %v904 = vadd.f32 %v820, %v898
      %905 = vst.msk [vmem:[#allocation5] sm:$0xff] %vm542, %v901
      %906 = vst.msk [vmem:[#allocation5 + $0x8] sm:$0xff] %vm542, %v902
      %907 = vst.msk [vmem:[#allocation5 + $0x10] sm:$0xff] %vm542, %v903
      %908 = vst.msk [vmem:[#allocation5 + $0x18] sm:$0xff] %vm542, %v904
      %909 = vst.msk [vmem:[#allocation3] sm:$0xff] %vm788, %v716
      %910 = vst.msk [vmem:[#allocation3 + $0x8] sm:$0xff] %vm788, %v717
      %911 = vst.msk [vmem:[#allocation3 + $0x10] sm:$0xff] %vm788, %v718
      %912 = vst.msk [vmem:[#allocation3 + $0x18] sm:$0xff] %vm788, %v719
      // Predicated region
      $region65: #{transformer_forward.15} parent=59 // pred_check
        %p913 = pneg %p456
      $region66: #{transformer_forward.15} parent=59 // pred_check_branch
        %915 = sbr.rel (%p913) target = $region68
      $region67: #{transformer_forward.15} parent=59 // pred_region
        %v916 = vld [vmem:[#allocation5] sm:$0xff]
        %v917 = vld [vmem:[#allocation5 + $0x8] sm:$0xff]
        %v918 = vld [vmem:[#allocation5 + $0x10] sm:$0xff]
        %v919 = vld [vmem:[#allocation5 + $0x18] sm:$0xff]
        %v920 = vld [vmem:[#allocation4] sm:$0xff]
        %v921 = vld [vmem:[#allocation4 + $0x8] sm:$0xff]
        %v922 = vld [vmem:[#allocation4 + $0x10] sm:$0xff]
        %v923 = vld [vmem:[#allocation4 + $0x18] sm:$0xff]
        %v924 = vrcp.pop %v920
        %v925 = vrcp.pop %v921
        %v926 = vrcp.pop %v922
        %v927 = vrcp.pop %v923
        %929 = vset.pattern.permute.xlu0 0
        %930 = vperm.xlu0 %929, %v924
        %v931 = vpop.permute.xlu0 %930
        %934 = vset.pattern.permute.xlu0 0
        %935 = vperm.xlu0 %934, %v925
        %v936 = vpop.permute.xlu0 %935
        %939 = vset.pattern.permute.xlu0 0
        %940 = vperm.xlu0 %939, %v926
        %v941 = vpop.permute.xlu0 %940
        %944 = vset.pattern.permute.xlu0 0
        %945 = vperm.xlu0 %944, %v927
        %v946 = vpop.permute.xlu0 %945
        %v948 = vmul.f32 %v916, %v931
        %v949 = vmul.f32 %v917, %v936
        %v950 = vmul.f32 %v918, %v941
        %v951 = vmul.f32 %v919, %v946
        %v952 = vpack.c.bf16 %v948, %v948
        %v953 = vpack.c.bf16 %v949, %v949
        %v954 = vpack.c.bf16 %v950, %v950
        %v955 = vpack.c.bf16 %v951, %v951
        %v956 = vld [vmem:[%s6] sm:$0xf]
        %v957 = vld [vmem:[%s6 + $0x4] sm:$0xf]
        %v958 = vld [vmem:[%s6 + $0x8] sm:$0xf]
        %v959 = vld [vmem:[%s6 + $0xc] sm:$0xf]
        %v961 = vsel %vm542, %v952, 0
        %v964 = vsel %vm549, %v956, 0
        %966 = vmatpush.bf16.msra.mxu0 0
        %967 = vmatpush.bf16.msra.mxu0 0
        %968 = vmatpush.bf16.msra.mxu0 0
        %969 = vmatpush.bf16.msra.mxu0 0
        %970 = vmatpush.bf16.msra.mxu0 0
        %971 = vmatpush.bf16.msra.mxu0 0
        %972 = vmatpush.bf16.msra.mxu0 0
        %973 = vmatpush.bf16.msra.mxu0 %v964
        %974 = vmatmul.bf16.gmra.mxu0 %v961
        %v975 = vpop.f32.mrf.mxu0
        %v976 = vadd.f32 0.0, %v975
        %v977 = vpop.f32.mrf.mxu0
        %978 = vdwg.mxu0
        %v980 = vsel %vm542, %v953, 0
        %v983 = vsel %vm549, %v957, 0
        %985 = vmatpush.bf16.msra.mxu0 0
        %986 = vmatpush.bf16.msra.mxu0 0
        %987 = vmatpush.bf16.msra.mxu0 0
        %988 = vmatpush.bf16.msra.mxu0 0
        %989 = vmatpush.bf16.msra.mxu0 0
        %990 = vmatpush.bf16.msra.mxu0 0
        %991 = vmatpush.bf16.msra.mxu0 0
        %992 = vmatpush.bf16.msra.mxu0 %v983
        %993 = vmatmul.bf16.gmra.mxu0 %v980
        %v994 = vpop.f32.mrf.mxu0
        %v995 = vadd.f32 0.0, %v994
        %v996 = vpop.f32.mrf.mxu0
        %997 = vdwg.mxu0
        %v999 = vsel %vm542, %v954, 0
        %v1002 = vsel %vm549, %v958, 0
        %1004 = vmatpush.bf16.msra.mxu0 0
        %1005 = vmatpush.bf16.msra.mxu0 0
        %1006 = vmatpush.bf16.msra.mxu0 0
        %1007 = vmatpush.bf16.msra.mxu0 0
        %1008 = vmatpush.bf16.msra.mxu0 0
        %1009 = vmatpush.bf16.msra.mxu0 0
        %1010 = vmatpush.bf16.msra.mxu0 0
        %1011 = vmatpush.bf16.msra.mxu0 %v1002
        %1012 = vmatmul.bf16.gmra.mxu0 %v999
        %v1013 = vpop.f32.mrf.mxu0
        %v1014 = vadd.f32 0.0, %v1013
        %v1015 = vpop.f32.mrf.mxu0
        %1016 = vdwg.mxu0
        %v1018 = vsel %vm542, %v955, 0
        %v1021 = vsel %vm549, %v959, 0
        %1023 = vmatpush.bf16.msra.mxu0 0
        %1024 = vmatpush.bf16.msra.mxu0 0
        %1025 = vmatpush.bf16.msra.mxu0 0
        %1026 = vmatpush.bf16.msra.mxu0 0
        %1027 = vmatpush.bf16.msra.mxu0 0
        %1028 = vmatpush.bf16.msra.mxu0 0
        %1029 = vmatpush.bf16.msra.mxu0 0
        %1030 = vmatpush.bf16.msra.mxu0 %v1021
        %1031 = vmatmul.bf16.gmra.mxu0 %v1018
        %v1032 = vpop.f32.mrf.mxu0
        %v1033 = vadd.f32 0.0, %v1032
        %v1034 = vpop.f32.mrf.mxu0
        %1035 = vdwg.mxu0
        %vm1036 = vcmask 261120
        %v1037 = vsel %vm1036, %v976, 0.0
        %v1038 = vsel %vm1036, %v995, 0.0
        %v1039 = vadd.f32 %v1037, %v1038
        %v1040 = vsel %vm1036, %v1014, 0.0
        %v1041 = vadd.f32 %v1039, %v1040
        %v1042 = vsel %vm1036, %v1033, 0.0
        %v1043 = vadd.f32 %v1041, %v1042
        %v1044 = vld [vmem:[%s7] sm:$0x1]
        %v1046 = vperm.slane %v1044, 0
        %v1048 = vadd.f32 %v1043, %v1046
        %v1049 = vld [vmem:[%s431] sm:$0xf]
        %v1050 = vunpack.c.l.bf16 %v1049
        %v1051 = vadd.f32 %v1048, %v1050
        %v1052 = vsel %vm1036, %v1051, 0.0
        %1053 = vadd.xlane.f32.xlu0 %v1052
        %v1054 = vpop.xlane.xlu0 %1053
        %v1055 = vrcp.pop 32.0
        %v1056 = vmul.f32 32.0, %v1055
        %v1057 = vsub.f32 1.0, %v1056
        %v1058 = vmul.f32 %v1055, %v1057
        %v1059 = vadd.f32 %v1055, %v1058
        %vm1060 = vweird.f32 %v1055
        %v1061 = vsel %vm1060, %v1055, %v1059
        %v1062 = vmul.f32 %v1054, %v1061
        %v1063 = vsub.f32 %v1051, %v1062
        %v1064 = vmul.f32 %v1063, %v1063
        %v1065 = vsel %vm1036, %v1064, 0.0
        %1066 = vadd.xlane.f32.xlu0 %v1065
        %v1067 = vpop.xlane.xlu0 %1066
        %v1068 = vmul.f32 %v1067, %v1061
        %v1069 = vadd.f32 %v1068, 1e-05
        %v1070 = vrsqrt.pop %v1069
        %v1071 = vmul.f32 %v1070, %v1069
        %v1072 = vmul.f32 %v1071, %v1070
        %v1073 = vmul.f32 0.5, %v1072
        %v1074 = vsub.f32 1.5, %v1073
        %v1075 = vmul.f32 %v1070, %v1074
        %vm1076 = vweird.f32 %v1069
        %vm1077 = vweird.f32 %v1070
        %vm1078 = vmor %vm1076, %vm1077
        %v1079 = vsel %vm1078, %v1070, %v1075
        %v1080 = vmul.f32 %v1063, %v1079
        %v1081 = vld [vmem:[%s8] sm:$0x1]
        %v1083 = vperm.slane %v1081, 0
        %v1085 = vmul.f32 %v1080, %v1083
        %v1086 = vld [vmem:[%s9] sm:$0x1]
        %v1088 = vperm.slane %v1086, 0
        %v1090 = vadd.f32 %v1085, %v1088
        %v1091 = vpack.c.bf16 %v1090, %v1090
        %vm1092 = vcmask 257024
        %1093 = vst.msk [vmem:[%s454] sm:$0xf] %vm1092, %v1091
      $region68: #{transformer_forward.15} parent=59 // pred_fallthru
        _
      %p1094 = scmp.lt.s32.totalorder %s26, 1
      %s1095 = scalar_select %p1094, %s26, 1
      %p1096 = scmp.lt.s32.totalorder %s27, 0
      %s1097 = scalar_select %p1096, %s27, 0
      %s1098 = sadd.s32 %s1097, %s1095
      %s1099 = smul.addr %s1098, 4
      %s1100 = scalar_lea.vmem %s10, %s1099
      // Predicated region
      $region69: #{transformer_forward.15} parent=59 // pred_check
        %p1101 = pneg %p291
      $region70: #{transformer_forward.15} parent=59 // pred_check_branch
        %1103 = sbr.rel (%p1101) target = $region72
      $region71: #{transformer_forward.15} parent=59 // pred_region
        _
      $region72: #{transformer_forward.15} parent=59 // pred_fallthru
        _
    $region60: #{transformer_forward.15} parent=5 // pred_fallthru
      _
    %p1104 = scmp.le.s32.totalorder 2, %s16
    // Predicated region
    $region73: #{transformer_forward.15} parent=5 // pred_check
      %p1105 = pneg %p1104
    $region74: #{transformer_forward.15} parent=5 // pred_check_branch
      %1107 = sbr.rel (%p1105) target = $region76
    $region75: #{transformer_forward.15} parent=5 // pred_region
      %s1108 = ssub.s32 %s16, 2
      // Predicated region
      $region77: #{transformer_forward.15} parent=75 // pred_check
        %p1109 = pneg %p297
      $region78: #{transformer_forward.15} parent=75 // pred_check_branch
        %1111 = sbr.rel (%p1109) target = $region80
      $region79: #{transformer_forward.15} parent=75 // pred_region
        %p1112 = scmp.lt.s32.totalorder %s29, 1
        %s1113 = scalar_select %p1112, %s29, 1
        %p1114 = scmp.lt.s32.totalorder %s30, 0
        %s1115 = scalar_select %p1114, %s30, 0
        %s1116 = sadd.s32 %s1115, %s1113
        %s1117 = smul.addr %s1116, 4
        %s1118 = scalar_lea.vmem %s10, %s1117
      $region80: #{transformer_forward.15} parent=75 // pred_fallthru
        _
    $region76: #{transformer_forward.15} parent=5 // pred_fallthru
      _
  $region6: #{transformer_forward.15} parent=0 // loop_footer
    %s20 = sadd.s32 1, %s16
  $region7: #{transformer_forward.15} parent=0 // loop_footer_branch
    %15 = sbr.rel target = $region3
  $region8: #{transformer_forward.15} parent=0 // loop_exit
    _

// kernel: transformer_forward.11
$region0: #{transformer_forward.11}
  #allocation0 [shape = 'u32[]', space=smem, size = 0x4, offset = 0x4, fixed_abs, tag = 'smem constant byte address 0x4 - core index']
  #allocation1 [shape = 'u32[72,128]{1,0:T(1,128)}', space=vmem, size = 0x9000, scoped, tag = 'internal scratch']
  #allocation2 [shape = 'bf16[4,8,8]{2,1,0:T(8,128)(2,1)}', space=vmem, size = 0x2000, scoped, tag = 'scratch operand']
  #allocation3 [shape = 'f32[4,8,1]{2,1,0:T(8,128)}', space=vmem, size = 0x4000, scoped, tag = 'scratch operand']
  #allocation4 [shape = 'f32[4,8,1]{2,1,0:T(8,128)}', space=vmem, size = 0x4000, scoped, tag = 'scratch operand']
  #allocation5 [shape = 'f32[4,8,8]{2,1,0:T(8,128)}', space=vmem, size = 0x4000, scoped, tag = 'scratch operand']
  %s0 = inlined_call_operand.vmem [shape: bf16[2,8,32], index: 0, kind: input, shape index: {}]
  %s1 = inlined_call_operand.vmem [shape: bf16[2,4,8,8], index: 1, kind: input, shape index: {}, may-alias: {1,2}]
  %s2 = inlined_call_operand.vmem [shape: bf16[2,4,8,8], index: 2, kind: input, shape index: {}, may-alias: {1,2}]
  %s3 = inlined_call_operand.vmem [shape: f32[2,1,8], index: 3, kind: input, shape index: {}]
  %s4 = inlined_call_operand.vmem [shape: bf16[8,8], index: 4, kind: input, shape index: {}]
  %s5 = inlined_call_operand.vmem [shape: bf16[8,8], index: 5, kind: input, shape index: {}]
  %s6 = inlined_call_operand.vmem [shape: bf16[8,8], index: 6, kind: input, shape index: {}]
  %s7 = inlined_call_operand.vmem [shape: bf16[4,8,32], index: 7, kind: input, shape index: {}]
  %s8 = inlined_call_operand.vmem [shape: f32[1,32], index: 8, kind: input, shape index: {}]
  %s9 = inlined_call_operand.vmem [shape: f32[1,32], index: 9, kind: input, shape index: {}]
  %s10 = inlined_call_operand.vmem [shape: f32[1,32], index: 10, kind: input, shape index: {}]
  %s11 = inlined_call_operand.vmem [shape: bf16[2,8,32], index: 11, kind: output, shape index: {}]
  %s12 = sld [smem:[#allocation0]]
  $region85: #{transformer_forward.11} parent=0
    _
  %s14 = ssub.s32 1, %s12
  %s15 = scalar_select 0, %s14, %s12
  loop: start=0, step=1, limit=4
  $region2: #{transformer_forward.11} parent=0 // loop_pre_header
    _
  $region3: #{transformer_forward.11} parent=0 // loop_header
    %s17 = sphi 0, %s21
    %p18 = scmp.ge.s32.totalorder %s17, 4
    %s24 = sphi 0, %s43
    %s25 = sphi 0, %s39
    %s26 = sphi 0, %s35
    %s27 = sphi 0, %s24
    %s28 = sphi 0, %s25
    %s29 = sphi 0, %s26
    %s30 = sphi 0, %s27
    %s31 = sphi 0, %s28
    %s32 = sphi 0, %s29
    %s48 = sphi 0, %s50
    %s51 = sphi 0, %s48
    %s52 = sphi 0, %s51
    %s68 = sphi 0, %s52
    %s76 = sphi 0, %s78
    %s79 = sphi 0, %s76
    %s80 = sphi 0, %s79
    %s96 = sphi 0, %s80
    %s104 = sphi 0, %s106
    %s107 = sphi 0, %s104
    %s108 = sphi 0, %s107
    %s124 = sphi 0, %s108
    %s132 = sphi 0, %s134
    %s135 = sphi 0, %s132
    %s136 = sphi 0, %s135
    %s152 = sphi 0, %s136
    %s156 = sphi 0, %s156
    %s158 = sphi 0, %s156
    %s159 = sphi 0, %s158
    %s173 = sphi 0, %s159
    %s177 = sphi 0, %s177
    %s179 = sphi 0, %s177
    %s180 = sphi 0, %s179
    %s194 = sphi 0, %s180
    %s198 = sphi 0, %s198
    %s200 = sphi 0, %s198
    %s201 = sphi 0, %s200
    %s215 = sphi 0, %s201
    %s219 = sphi 0, %s219
    %s221 = sphi 0, %s219
    %s222 = sphi 0, %s221
    %s236 = sphi 0, %s222
    %s240 = sphi 0, %s240
    %s242 = sphi 0, %s240
    %s243 = sphi 0, %s242
    %s257 = sphi 0, %s243
    %s261 = sphi 0, %s261
    %s263 = sphi 0, %s261
    %s264 = sphi 0, %s263
    %s278 = sphi 0, %s264
    %s282 = sphi 0, %s282
    %s284 = sphi 0, %s282
    %s285 = sphi 0, %s284
    %s299 = sphi 0, %s285
    %s307 = sphi 0, %s309
    %s310 = sphi 0, %s307
    %s311 = sphi 0, %s310
    %s327 = sphi 0, %s311
  $region4: #{transformer_forward.11} parent=0 // loop_header_branch
    %20 = sbr.rel (%p18) target = $region8
  $region5: #{transformer_forward.11} parent=0 // loop_body
    %s22 = ssub.s32 %s17, 1
    %s23 = ssub.s32 %s17, 2
    %s33 = sadd.s32 1, %s26
    %p34 = scmp.ge.s32.totalorder %s33, 1
    %s35 = scalar_select %p34, 0, %s33
    %s36 = sadd.s32 1, %s25
    %s37 = scalar_select %p34, %s36, %s25
    %p38 = scmp.ge.s32.totalorder %s37, 1
    %s39 = scalar_select %p38, 0, %s37
    %s40 = sadd.s32 1, %s24
    %s41 = scalar_select %p38, %s40, %s24
    %p42 = scmp.ge.s32.totalorder %s41, 2
    %s43 = scalar_select %p42, 0, %s41
    %s44 = ssub.s32 %s24, %s43
    %s45 = ssub.s32 %s25, %s39
    %s46 = sor.u32 %s44, %s45
    %p47 = scmp.eq.s32.totalorder %s46, 0
    %s49 = sadd.s32 %s48, 1
    %s50 = scalar_select %p47, %s48, %s49
    %p53 = pneg %p47
    %p54 = scmp.eq.s32.totalorder %s17, 1
    %p55 = por %p53, %p54
    %p56 = scmp.ne.s32.totalorder %s48, %s51
    %p57 = scmp.eq.s32.totalorder %s17, 0
    %p58 = por %p56, %p57
    %p59 = scmp.ne.s32.totalorder %s48, %s51
    %p60 = scmp.eq.s32.totalorder %s22, 1
    %p61 = por %p59, %p60
    %p62 = scmp.ne.s32.totalorder %s51, %s52
    %p63 = scmp.eq.s32.totalorder %s22, 0
    %p64 = por %p62, %p63
    %p65 = scmp.ne.s32.totalorder %s51, %s52
    %p66 = scmp.eq.s32.totalorder %s23, 1
    %p67 = por %p65, %p66
    %p69 = scmp.ne.s32.totalorder %s52, %s68
    %p70 = scmp.eq.s32.totalorder %s23, 0
    %p71 = por %p69, %p70
    %s72 = ssub.s32 %s24, %s43
    %s73 = ssub.s32 %s25, %s39
    %s74 = sor.u32 %s72, %s73
    %p75 = scmp.eq.s32.totalorder %s74, 0
    %s77 = sadd.s32 %s76, 1
    %s78 = scalar_select %p75, %s76, %s77
    %p81 = pneg %p75
    %p82 = scmp.eq.s32.totalorder %s17, 1
    %p83 = por %p81, %p82
    %p84 = scmp.ne.s32.totalorder %s76, %s79
    %p85 = scmp.eq.s32.totalorder %s17, 0
    %p86 = por %p84, %p85
    %p87 = scmp.ne.s32.totalorder %s76, %s79
    %p88 = scmp.eq.s32.totalorder %s22, 1
    %p89 = por %p87, %p88
    %p90 = scmp.ne.s32.totalorder %s79, %s80
    %p91 = scmp.eq.s32.totalorder %s22, 0
    %p92 = por %p90, %p91
    %p93 = scmp.ne.s32.totalorder %s79, %s80
    %p94 = scmp.eq.s32.totalorder %s23, 1
    %p95 = por %p93, %p94
    %p97 = scmp.ne.s32.totalorder %s80, %s96
    %p98 = scmp.eq.s32.totalorder %s23, 0
    %p99 = por %p97, %p98
    %s100 = ssub.s32 %s24, %s43
    %s101 = ssub.s32 %s26, %s35
    %s102 = sor.u32 %s100, %s101
    %p103 = scmp.eq.s32.totalorder %s102, 0
    %s105 = sadd.s32 %s104, 1
    %s106 = scalar_select %p103, %s104, %s105
    %p109 = pneg %p103
    %p110 = scmp.eq.s32.totalorder %s17, 1
    %p111 = por %p109, %p110
    %p112 = scmp.ne.s32.totalorder %s104, %s107
    %p113 = scmp.eq.s32.totalorder %s17, 0
    %p114 = por %p112, %p113
    %p115 = scmp.ne.s32.totalorder %s104, %s107
    %p116 = scmp.eq.s32.totalorder %s22, 1
    %p117 = por %p115, %p116
    %p118 = scmp.ne.s32.totalorder %s107, %s108
    %p119 = scmp.eq.s32.totalorder %s22, 0
    %p120 = por %p118, %p119
    %p121 = scmp.ne.s32.totalorder %s107, %s108
    %p122 = scmp.eq.s32.totalorder %s23, 1
    %p123 = por %p121, %p122
    %p125 = scmp.ne.s32.totalorder %s108, %s124
    %p126 = scmp.eq.s32.totalorder %s23, 0
    %p127 = por %p125, %p126
    %s128 = ssub.s32 %s24, %s43
    %s129 = ssub.s32 %s26, %s35
    %s130 = sor.u32 %s128, %s129
    %p131 = scmp.eq.s32.totalorder %s130, 0
    %s133 = sadd.s32 %s132, 1
    %s134 = scalar_select %p131, %s132, %s133
    %p137 = pneg %p131
    %p138 = scmp.eq.s32.totalorder %s17, 1
    %p139 = por %p137, %p138
    %p140 = scmp.ne.s32.totalorder %s132, %s135
    %p141 = scmp.eq.s32.totalorder %s17, 0
    %p142 = por %p140, %p141
    %p143 = scmp.ne.s32.totalorder %s132, %s135
    %p144 = scmp.eq.s32.totalorder %s22, 1
    %p145 = por %p143, %p144
    %p146 = scmp.ne.s32.totalorder %s135, %s136
    %p147 = scmp.eq.s32.totalorder %s22, 0
    %p148 = por %p146, %p147
    %p149 = scmp.ne.s32.totalorder %s135, %s136
    %p150 = scmp.eq.s32.totalorder %s23, 1
    %p151 = por %p149, %p150
    %p153 = scmp.ne.s32.totalorder %s136, %s152
    %p154 = scmp.eq.s32.totalorder %s23, 0
    %p155 = por %p153, %p154
    %s157 = sadd.s32 %s156, 1
    %p160 = scmp.eq.s32.totalorder %s17, 1
    %p161 = scmp.ne.s32.totalorder %s156, %s158
    %p162 = scmp.eq.s32.totalorder %s17, 0
    %p163 = por %p161, %p162
    %p164 = scmp.ne.s32.totalorder %s156, %s158
    %p165 = scmp.eq.s32.totalorder %s22, 1
    %p166 = por %p164, %p165
    %p167 = scmp.ne.s32.totalorder %s158, %s159
    %p168 = scmp.eq.s32.totalorder %s22, 0
    %p169 = por %p167, %p168
    %p170 = scmp.ne.s32.totalorder %s158, %s159
    %p171 = scmp.eq.s32.totalorder %s23, 1
    %p172 = por %p170, %p171
    %p174 = scmp.ne.s32.totalorder %s159, %s173
    %p175 = scmp.eq.s32.totalorder %s23, 0
    %p176 = por %p174, %p175
    %s178 = sadd.s32 %s177, 1
    %p181 = scmp.eq.s32.totalorder %s17, 1
    %p182 = scmp.ne.s32.totalorder %s177, %s179
    %p183 = scmp.eq.s32.totalorder %s17, 0
    %p184 = por %p182, %p183
    %p185 = scmp.ne.s32.totalorder %s177, %s179
    %p186 = scmp.eq.s32.totalorder %s22, 1
    %p187 = por %p185, %p186
    %p188 = scmp.ne.s32.totalorder %s179, %s180
    %p189 = scmp.eq.s32.totalorder %s22, 0
    %p190 = por %p188, %p189
    %p191 = scmp.ne.s32.totalorder %s179, %s180
    %p192 = scmp.eq.s32.totalorder %s23, 1
    %p193 = por %p191, %p192
    %p195 = scmp.ne.s32.totalorder %s180, %s194
    %p196 = scmp.eq.s32.totalorder %s23, 0
    %p197 = por %p195, %p196
    %s199 = sadd.s32 %s198, 1
    %p202 = scmp.eq.s32.totalorder %s17, 1
    %p203 = scmp.ne.s32.totalorder %s198, %s200
    %p204 = scmp.eq.s32.totalorder %s17, 0
    %p205 = por %p203, %p204
    %p206 = scmp.ne.s32.totalorder %s198, %s200
    %p207 = scmp.eq.s32.totalorder %s22, 1
    %p208 = por %p206, %p207
    %p209 = scmp.ne.s32.totalorder %s200, %s201
    %p210 = scmp.eq.s32.totalorder %s22, 0
    %p211 = por %p209, %p210
    %p212 = scmp.ne.s32.totalorder %s200, %s201
    %p213 = scmp.eq.s32.totalorder %s23, 1
    %p214 = por %p212, %p213
    %p216 = scmp.ne.s32.totalorder %s201, %s215
    %p217 = scmp.eq.s32.totalorder %s23, 0
    %p218 = por %p216, %p217
    %s220 = sadd.s32 %s219, 1
    %p223 = scmp.eq.s32.totalorder %s17, 1
    %p224 = scmp.ne.s32.totalorder %s219, %s221
    %p225 = scmp.eq.s32.totalorder %s17, 0
    %p226 = por %p224, %p225
    %p227 = scmp.ne.s32.totalorder %s219, %s221
    %p228 = scmp.eq.s32.totalorder %s22, 1
    %p229 = por %p227, %p228
    %p230 = scmp.ne.s32.totalorder %s221, %s222
    %p231 = scmp.eq.s32.totalorder %s22, 0
    %p232 = por %p230, %p231
    %p233 = scmp.ne.s32.totalorder %s221, %s222
    %p234 = scmp.eq.s32.totalorder %s23, 1
    %p235 = por %p233, %p234
    %p237 = scmp.ne.s32.totalorder %s222, %s236
    %p238 = scmp.eq.s32.totalorder %s23, 0
    %p239 = por %p237, %p238
    %s241 = sadd.s32 %s240, 1
    %p244 = scmp.eq.s32.totalorder %s17, 1
    %p245 = scmp.ne.s32.totalorder %s240, %s242
    %p246 = scmp.eq.s32.totalorder %s17, 0
    %p247 = por %p245, %p246
    %p248 = scmp.ne.s32.totalorder %s240, %s242
    %p249 = scmp.eq.s32.totalorder %s22, 1
    %p250 = por %p248, %p249
    %p251 = scmp.ne.s32.totalorder %s242, %s243
    %p252 = scmp.eq.s32.totalorder %s22, 0
    %p253 = por %p251, %p252
    %p254 = scmp.ne.s32.totalorder %s242, %s243
    %p255 = scmp.eq.s32.totalorder %s23, 1
    %p256 = por %p254, %p255
    %p258 = scmp.ne.s32.totalorder %s243, %s257
    %p259 = scmp.eq.s32.totalorder %s23, 0
    %p260 = por %p258, %p259
    %s262 = sadd.s32 %s261, 1
    %p265 = scmp.eq.s32.totalorder %s17, 1
    %p266 = scmp.ne.s32.totalorder %s261, %s263
    %p267 = scmp.eq.s32.totalorder %s17, 0
    %p268 = por %p266, %p267
    %p269 = scmp.ne.s32.totalorder %s261, %s263
    %p270 = scmp.eq.s32.totalorder %s22, 1
    %p271 = por %p269, %p270
    %p272 = scmp.ne.s32.totalorder %s263, %s264
    %p273 = scmp.eq.s32.totalorder %s22, 0
    %p274 = por %p272, %p273
    %p275 = scmp.ne.s32.totalorder %s263, %s264
    %p276 = scmp.eq.s32.totalorder %s23, 1
    %p277 = por %p275, %p276
    %p279 = scmp.ne.s32.totalorder %s264, %s278
    %p280 = scmp.eq.s32.totalorder %s23, 0
    %p281 = por %p279, %p280
    %s283 = sadd.s32 %s282, 1
    %p286 = scmp.eq.s32.totalorder %s17, 1
    %p287 = scmp.ne.s32.totalorder %s282, %s284
    %p288 = scmp.eq.s32.totalorder %s17, 0
    %p289 = por %p287, %p288
    %p290 = scmp.ne.s32.totalorder %s282, %s284
    %p291 = scmp.eq.s32.totalorder %s22, 1
    %p292 = por %p290, %p291
    %p293 = scmp.ne.s32.totalorder %s284, %s285
    %p294 = scmp.eq.s32.totalorder %s22, 0
    %p295 = por %p293, %p294
    %p296 = scmp.ne.s32.totalorder %s284, %s285
    %p297 = scmp.eq.s32.totalorder %s23, 1
    %p298 = por %p296, %p297
    %p300 = scmp.ne.s32.totalorder %s285, %s299
    %p301 = scmp.eq.s32.totalorder %s23, 0
    %p302 = por %p300, %p301
    %s303 = ssub.s32 %s24, %s43
    %s304 = ssub.s32 %s25, %s39
    %s305 = sor.u32 %s303, %s304
    %p306 = scmp.eq.s32.totalorder %s305, 0
    %s308 = sadd.s32 %s307, 1
    %s309 = scalar_select %p306, %s307, %s308
    %p312 = pneg %p306
    %p313 = scmp.eq.s32.totalorder %s17, 1
    %p314 = por %p312, %p313
    %p315 = scmp.ne.s32.totalorder %s307, %s310
    %p316 = scmp.eq.s32.totalorder %s17, 0
    %p317 = por %p315, %p316
    %p318 = scmp.ne.s32.totalorder %s307, %s310
    %p319 = scmp.eq.s32.totalorder %s22, 1
    %p320 = por %p318, %p319
    %p321 = scmp.ne.s32.totalorder %s310, %s311
    %p322 = scmp.eq.s32.totalorder %s22, 0
    %p323 = por %p321, %p322
    %p324 = scmp.ne.s32.totalorder %s310, %s311
    %p325 = scmp.eq.s32.totalorder %s23, 1
    %p326 = por %p324, %p325
    %p328 = scmp.ne.s32.totalorder %s311, %s327
    %p329 = scmp.eq.s32.totalorder %s23, 0
    %p330 = por %p328, %p329
    %p331 = scmp.le.s32.totalorder 1, %s17
    %p332 = scmp.lt.s32.totalorder %s17, 3
    %p333 = pnand %p331, %p332
    %p334 = pneg %p333
    // Predicated region
    $region9: #{transformer_forward.11} parent=5 // pred_check
      _
    $region10: #{transformer_forward.11} parent=5 // pred_check_branch
      %336 = sbr.rel (%p333) target = $region12
    $region11: #{transformer_forward.11} parent=5 // pred_region
      %s337 = ssub.s32 %s17, 1
      // Predicated region
      $region13: #{transformer_forward.11} parent=11 // pred_check
        %p338 = pneg %p169
      $region14: #{transformer_forward.11} parent=11 // pred_check_branch
        %340 = sbr.rel (%p338) target = $region16
      $region15: #{transformer_forward.11} parent=11 // pred_region
        _
      $region16: #{transformer_forward.11} parent=11 // pred_fallthru
        _
      // Predicated region
      $region17: #{transformer_forward.11} parent=11 // pred_check
        %p341 = pneg %p190
      $region18: #{transformer_forward.11} parent=11 // pred_check_branch
        %343 = sbr.rel (%p341) target = $region20
      $region19: #{transformer_forward.11} parent=11 // pred_region
        _
      $region20: #{transformer_forward.11} parent=11 // pred_fallthru
        _
      // Predicated region
      $region21: #{transformer_forward.11} parent=11 // pred_check
        %p344 = pneg %p211
      $region22: #{transformer_forward.11} parent=11 // pred_check_branch
        %346 = sbr.rel (%p344) target = $region24
      $region23: #{transformer_forward.11} parent=11 // pred_region
        _
      $region24: #{transformer_forward.11} parent=11 // pred_fallthru
        _
      // Predicated region
      $region25: #{transformer_forward.11} parent=11 // pred_check
        %p347 = pneg %p232
      $region26: #{transformer_forward.11} parent=11 // pred_check_branch
        %349 = sbr.rel (%p347) target = $region28
      $region27: #{transformer_forward.11} parent=11 // pred_region
        _
      $region28: #{transformer_forward.11} parent=11 // pred_fallthru
        _
      // Predicated region
      $region29: #{transformer_forward.11} parent=11 // pred_check
        %p350 = pneg %p253
      $region30: #{transformer_forward.11} parent=11 // pred_check_branch
        %352 = sbr.rel (%p350) target = $region32
      $region31: #{transformer_forward.11} parent=11 // pred_region
        _
      $region32: #{transformer_forward.11} parent=11 // pred_fallthru
        _
      // Predicated region
      $region33: #{transformer_forward.11} parent=11 // pred_check
        %p353 = pneg %p274
      $region34: #{transformer_forward.11} parent=11 // pred_check_branch
        %355 = sbr.rel (%p353) target = $region36
      $region35: #{transformer_forward.11} parent=11 // pred_region
        _
      $region36: #{transformer_forward.11} parent=11 // pred_fallthru
        _
      // Predicated region
      $region37: #{transformer_forward.11} parent=11 // pred_check
        %p356 = pneg %p295
      $region38: #{transformer_forward.11} parent=11 // pred_check_branch
        %358 = sbr.rel (%p356) target = $region40
      $region39: #{transformer_forward.11} parent=11 // pred_region
        _
      $region40: #{transformer_forward.11} parent=11 // pred_fallthru
        _
    $region12: #{transformer_forward.11} parent=5 // pred_fallthru
      _
    %p359 = scmp.lt.s32.totalorder %s17, 2
    // Predicated region
    $region41: #{transformer_forward.11} parent=5 // pred_check
      %p360 = pneg %p359
    $region42: #{transformer_forward.11} parent=5 // pred_check_branch
      %362 = sbr.rel (%p360) target = $region44
    $region43: #{transformer_forward.11} parent=5 // pred_region
      // Predicated region
      $region45: #{transformer_forward.11} parent=43 // pred_check
        %p363 = pneg %p58
      $region46: #{transformer_forward.11} parent=43 // pred_check_branch
        %365 = sbr.rel (%p363) target = $region48
      $region47: #{transformer_forward.11} parent=43 // pred_region
        %p366 = scmp.lt.s32.totalorder %s24, 1
        %s367 = scalar_select %p366, %s24, 1
        %p368 = scmp.lt.s32.totalorder %s25, 0
        %s369 = scalar_select %p368, %s25, 0
        %s370 = sadd.s32 %s369, %s367
        %s371 = smul.addr %s370, 4
        %s372 = scalar_lea.vmem %s0, %s371
      $region48: #{transformer_forward.11} parent=43 // pred_fallthru
        _
      // Predicated region
      $region49: #{transformer_forward.11} parent=43 // pred_check
        %p373 = pneg %p86
      $region50: #{transformer_forward.11} parent=43 // pred_check_branch
        %375 = sbr.rel (%p373) target = $region52
      $region51: #{transformer_forward.11} parent=43 // pred_region
        %p376 = scmp.lt.s32.totalorder %s24, 1
        %s377 = scalar_select %p376, %s24, 1
        %p378 = scmp.lt.s32.totalorder %s25, 0
        %s379 = scalar_select %p378, %s25, 0
        %s380 = smul.addr %s377, 4
        %s381 = sadd.s32 %s379, %s380
        %s382 = smul.addr %s381, 4
        %s383 = scalar_lea.vmem %s1, %s382
      $region52: #{transformer_forward.11} parent=43 // pred_fallthru
        _
      // Predicated region
      $region53: #{transformer_forward.11} parent=43 // pred_check
        %p384 = pneg %p114
      $region54: #{transformer_forward.11} parent=43 // pred_check_branch
        %386 = sbr.rel (%p384) target = $region56
      $region55: #{transformer_forward.11} parent=43 // pred_region
        %p387 = scmp.lt.s32.totalorder %s24, 1
        %s388 = scalar_select %p387, %s24, 1
        %p389 = scmp.lt.s32.totalorder %s26, 0
        %s390 = scalar_select %p389, %s26, 0
        %s391 = smul.addr %s388, 4
        %s392 = sadd.s32 %s390, %s391
        %s393 = smul.addr %s392, 4
        %s394 = scalar_lea.vmem %s2, %s393
      $region56: #{transformer_forward.11} parent=43 // pred_fallthru
        _
      // Predicated region
      $region57: #{transformer_forward.11} parent=43 // pred_check
        %p395 = pneg %p142
      $region58: #{transformer_forward.11} parent=43 // pred_check_branch
        %397 = sbr.rel (%p395) target = $region60
      $region59: #{transformer_forward.11} parent=43 // pred_region
        %p398 = scmp.lt.s32.totalorder %s24, 1
        %s399 = scalar_select %p398, %s24, 1
        %p400 = scmp.lt.s32.totalorder %s26, 0
        %s401 = scalar_select %p400, %s26, 0
        %s402 = sadd.s32 %s401, %s399
        %s403 = scalar_lea.vmem %s3, %s402
      $region60: #{transformer_forward.11} parent=43 // pred_fallthru
        _
    $region44: #{transformer_forward.11} parent=5 // pred_fallthru
      _
    %p404 = scmp.le.s32.totalorder 1, %s17
    %p405 = scmp.lt.s32.totalorder %s17, 3
    %p406 = pnand %p404, %p405
    %p407 = pneg %p406
    // Predicated region
    $region61: #{transformer_forward.11} parent=5 // pred_check
      _
    $region62: #{transformer_forward.11} parent=5 // pred_check_branch
      %409 = sbr.rel (%p406) target = $region64
    $region63: #{transformer_forward.11} parent=5 // pred_region
      %s410 = ssub.s32 %s17, 1
      %p411 = scmp.lt.s32.totalorder %s27, 1
      %s412 = scalar_select %p411, %s27, 1
      %p413 = scmp.lt.s32.totalorder %s28, 0
      %s414 = scalar_select %p413, %s28, 0
      %s415 = sadd.s32 %s414, %s412
      %s416 = smul.addr %s415, 4
      %s417 = scalar_lea.vmem %s0, %s416
      %p418 = pneg %p64
      %p419 = pneg %p61
      %p420 = scmp.lt.s32.totalorder %s27, 1
      %s421 = scalar_select %p420, %s27, 1
      %p422 = scmp.lt.s32.totalorder %s28, 0
      %s423 = scalar_select %p422, %s28, 0
      %s424 = smul.addr %s421, 4
      %s425 = sadd.s32 %s423, %s424
      %s426 = smul.addr %s425, 4
      %s427 = scalar_lea.vmem %s1, %s426
      %p428 = pneg %p92
      %p429 = pneg %p89
      %p430 = scmp.lt.s32.totalorder %s27, 1
      %s431 = scalar_select %p430, %s27, 1
      %p432 = scmp.lt.s32.totalorder %s29, 0
      %s433 = scalar_select %p432, %s29, 0
      %s434 = smul.addr %s431, 4
      %s435 = sadd.s32 %s433, %s434
      %s436 = smul.addr %s435, 4
      %s437 = scalar_lea.vmem %s2, %s436
      %p438 = pneg %p120
      %p439 = pneg %p117
      %p440 = scmp.lt.s32.totalorder %s27, 1
      %s441 = scalar_select %p440, %s27, 1
      %p442 = scmp.lt.s32.totalorder %s29, 0
      %s443 = scalar_select %p442, %s29, 0
      %s444 = sadd.s32 %s443, %s441
      %s445 = scalar_lea.vmem %s3, %s444
      %p446 = pneg %p148
      %p447 = pneg %p145
      %p448 = pneg %p169
      %p449 = pneg %p166
      %p450 = pneg %p190
      %p451 = pneg %p187
      %p452 = pneg %p211
      %p453 = pneg %p208
      %p454 = pneg %p232
      %p455 = pneg %p229
      %p456 = pneg %p253
      %p457 = pneg %p250
      %p458 = pneg %p274
      %p459 = pneg %p271
      %p460 = pneg %p295
      %p461 = pneg %p292
      %p462 = pneg %p323
      %p463 = pneg %p320
      %p464 = scmp.lt.s32.totalorder %s27, 1
      %s465 = scalar_select %p464, %s27, 1
      %p466 = scmp.lt.s32.totalorder %s28, 0
      %s467 = scalar_select %p466, %s28, 0
      %s468 = sadd.s32 %s467, %s465
      %s469 = smul.addr %s468, 4
      %s470 = scalar_lea.vmem %s11, %s469
      %p471 = scmp.lt.s32.totalorder %s27, 1
      %s472 = scalar_select %p471, %s27, 1
      %p473 = scmp.lt.s32.totalorder %s28, 0
      %s474 = scalar_select %p473, %s28, 0
      %s475 = sadd.s32 %s474, %s472
      %s476 = smul.addr %s475, 4
      %s477 = scalar_lea.vmem %s0, %s476
      %p478 = scmp.lt.s32.totalorder %s27, 1
      %s479 = scalar_select %p478, %s27, 1
      %p480 = scmp.lt.s32.totalorder %s28, 0
      %s481 = scalar_select %p480, %s28, 0
      %s482 = smul.addr %s479, 4
      %s483 = sadd.s32 %s481, %s482
      %s484 = smul.addr %s483, 4
      %s485 = scalar_lea.vmem %s1, %s484
      %p486 = scmp.lt.s32.totalorder %s27, 1
      %s487 = scalar_select %p486, %s27, 1
      %p488 = scmp.lt.s32.totalorder %s29, 0
      %s489 = scalar_select %p488, %s29, 0
      %s490 = smul.addr %s487, 4
      %s491 = sadd.s32 %s489, %s490
      %s492 = smul.addr %s491, 4
      %s493 = scalar_lea.vmem %s2, %s492
      %p494 = scmp.lt.s32.totalorder %s27, 1
      %s495 = scalar_select %p494, %s27, 1
      %p496 = scmp.lt.s32.totalorder %s29, 0
      %s497 = scalar_select %p496, %s29, 0
      %s498 = sadd.s32 %s497, %s495
      %s499 = scalar_lea.vmem %s3, %s498
      %p500 = scmp.lt.s32.totalorder %s27, 1
      %s501 = scalar_select %p500, %s27, 1
      %p502 = scmp.lt.s32.totalorder %s28, 0
      %s503 = scalar_select %p502, %s28, 0
      %s504 = sadd.s32 %s503, %s501
      %s505 = smul.addr %s504, 4
      %s506 = scalar_lea.vmem %s11, %s505
      %p508 = scmp.eq.s32.totalorder %s29, 0
      // Predicated region
      $region65: #{transformer_forward.11} parent=63 // pred_check
        %p509 = pneg %p508
      $region66: #{transformer_forward.11} parent=63 // pred_check_branch
        %511 = sbr.rel (%p509) target = $region68
      $region67: #{transformer_forward.11} parent=63 // pred_region
        %v512 = vld [vmem:[%s485] sm:$0xf]
        %v513 = vld [vmem:[%s485 + $0x4] sm:$0xf]
        %v514 = vld [vmem:[%s485 + $0x8] sm:$0xf]
        %v515 = vld [vmem:[%s485 + $0xc] sm:$0xf]
        %v516 = vld [vmem:[%s6] sm:$0xf]
        %v521 = vunpack.c.l.b16 %v512
        %v522 = vunpack.c.l.b16 %v513
        %v523 = vunpack.c.l.b16 %v514
        %v524 = vunpack.c.l.b16 %v515
        %v525 = vpack.c.b16 %v522, %v521
        %v526 = vpack.c.b16 %v524, %v523
        %vm527 = vcmask 64512
        %v529 = vsel %vm527, %v525, 0
        %v532 = vsel %vm527, %v526, 0
        %vm534 = vcmask 1043456
        %v536 = vsel %vm534, %v516, 0
        %538 = vmatpush.bf16.msra.mxu0 0
        %539 = vmatpush.bf16.msra.mxu0 0
        %540 = vmatpush.bf16.msra.mxu0 0
        %541 = vmatpush.bf16.msra.mxu0 0
        %542 = vmatpush.bf16.msra.mxu0 0
        %543 = vmatpush.bf16.msra.mxu0 0
        %544 = vmatpush.bf16.msra.mxu0 0
        %545 = vmatpush.bf16.msra.mxu0 %v536
        %546 = vmatmul.bf16.gmra.mxu0 %v529
        %v547 = vpop.f32.mrf.mxu0
        %v548 = vadd.f32 0.0, %v547
        %v549 = vpop.f32.mrf.mxu0
        %v550 = vadd.f32 0.0, %v549
        %551 = vmatmul.bf16.gmra.mxu0 %v532
        %v552 = vpop.f32.mrf.mxu0
        %v553 = vadd.f32 0.0, %v552
        %v554 = vpop.f32.mrf.mxu0
        %v555 = vadd.f32 0.0, %v554
        %556 = vdwg.mxu0
        %v557 = vpack.c.bf16 %v548, %v548
        %v558 = vpack.c.bf16 %v550, %v550
        %v559 = vpack.c.bf16 %v553, %v553
        %v560 = vpack.c.bf16 %v555, %v555
        %vm561 = vcmask 60416
        %562 = vst.msk [vmem:[#allocation2] sm:$0xf] %vm561, %v557
        %563 = vst.msk [vmem:[#allocation2 + $0x4] sm:$0xf] %vm561, %v558
        %564 = vst.msk [vmem:[#allocation2 + $0x8] sm:$0xf] %vm561, %v559
        %565 = vst.msk [vmem:[#allocation2 + $0xc] sm:$0xf] %vm561, %v560
        %vm566 = vcmask 7168
        %567 = vst.msk [vmem:[#allocation3] sm:$0xff] %vm566, -inf
        %568 = vst.msk [vmem:[#allocation3 + $0x8] sm:$0xff] %vm566, -inf
        %569 = vst.msk [vmem:[#allocation3 + $0x10] sm:$0xff] %vm566, -inf
        %570 = vst.msk [vmem:[#allocation3 + $0x18] sm:$0xff] %vm566, -inf
        %571 = vst.msk [vmem:[#allocation4] sm:$0xff] %vm566, 0.0
        %572 = vst.msk [vmem:[#allocation4 + $0x8] sm:$0xff] %vm566, 0.0
        %573 = vst.msk [vmem:[#allocation4 + $0x10] sm:$0xff] %vm566, 0.0
        %574 = vst.msk [vmem:[#allocation4 + $0x18] sm:$0xff] %vm566, 0.0
        %575 = vst.msk [vmem:[#allocation5] sm:$0xff] %vm527, 0.0
        %576 = vst.msk [vmem:[#allocation5 + $0x8] sm:$0xff] %vm527, 0.0
        %577 = vst.msk [vmem:[#allocation5 + $0x10] sm:$0xff] %vm527, 0.0
        %578 = vst.msk [vmem:[#allocation5 + $0x18] sm:$0xff] %vm527, 0.0
      $region68: #{transformer_forward.11} parent=63 // pred_fallthru
        _
      %v579 = vld [vmem:[%s493] sm:$0xf]
      %v580 = vld [vmem:[%s493 + $0x4] sm:$0xf]
      %v581 = vld [vmem:[%s493 + $0x8] sm:$0xf]
      %v582 = vld [vmem:[%s493 + $0xc] sm:$0xf]
      %v583 = vld [vmem:[%s5] sm:$0xf]
      %v588 = vunpack.c.l.b16 %v579
      %v589 = vunpack.c.l.b16 %v580
      %v590 = vunpack.c.l.b16 %v581
      %v591 = vunpack.c.l.b16 %v582
      %v592 = vpack.c.b16 %v589, %v588
      %v593 = vpack.c.b16 %v591, %v590
      %vm594 = vcmask 64512
      %v596 = vsel %vm594, %v592, 0
      %v599 = vsel %vm594, %v593, 0
      %vm601 = vcmask 1043456
      %v603 = vsel %vm601, %v583, 0
      %605 = vmatpush.bf16.msra.mxu0 0
      %606 = vmatpush.bf16.msra.mxu0 0
      %607 = vmatpush.bf16.msra.mxu0 0
      %608 = vmatpush.bf16.msra.mxu0 0
      %609 = vmatpush.bf16.msra.mxu0 0
      %610 = vmatpush.bf16.msra.mxu0 0
      %611 = vmatpush.bf16.msra.mxu0 0
      %612 = vmatpush.bf16.msra.mxu0 %v603
      %613 = vmatmul.bf16.gmra.mxu0 %v596
      %v614 = vpop.f32.mrf.mxu0
      %v615 = vadd.f32 0.0, %v614
      %v616 = vpop.f32.mrf.mxu0
      %v617 = vadd.f32 0.0, %v616
      %618 = vmatmul.bf16.gmra.mxu0 %v599
      %v619 = vpop.f32.mrf.mxu0
      %v620 = vadd.f32 0.0, %v619
      %v621 = vpop.f32.mrf.mxu0
      %v622 = vadd.f32 0.0, %v621
      %623 = vdwg.mxu0
      %v624 = vld [vmem:[%s4] sm:$0xf]
      %v626 = vsel %vm601, %v624, 0
      %628 = vmatpush.bf16.msra.mxu0 0
      %629 = vmatpush.bf16.msra.mxu0 0
      %630 = vmatpush.bf16.msra.mxu0 0
      %631 = vmatpush.bf16.msra.mxu0 0
      %632 = vmatpush.bf16.msra.mxu0 0
      %633 = vmatpush.bf16.msra.mxu0 0
      %634 = vmatpush.bf16.msra.mxu0 0
      %635 = vmatpush.bf16.msra.mxu0 %v626
      %636 = vmatmul.bf16.gmra.mxu0 %v596
      %v637 = vpop.f32.mrf.mxu0
      %v638 = vadd.f32 0.0, %v637
      %v639 = vpop.f32.mrf.mxu0
      %v640 = vadd.f32 0.0, %v639
      %641 = vmatmul.bf16.gmra.mxu0 %v599
      %v642 = vpop.f32.mrf.mxu0
      %v643 = vadd.f32 0.0, %v642
      %v644 = vpop.f32.mrf.mxu0
      %v645 = vadd.f32 0.0, %v644
      %646 = vdwg.mxu0
      %v647 = vpack.c.bf16 %v615, %v615
      %v648 = vpack.c.bf16 %v617, %v617
      %v649 = vpack.c.bf16 %v620, %v620
      %v650 = vpack.c.bf16 %v622, %v622
      %v651 = vpack.c.bf16 %v638, %v638
      %v652 = vpack.c.bf16 %v640, %v640
      %v653 = vpack.c.bf16 %v643, %v643
      %v654 = vpack.c.bf16 %v645, %v645
      %v655 = vld [vmem:[#allocation2] sm:$0xf]
      %v656 = vld [vmem:[#allocation2 + $0x4] sm:$0xf]
      %v657 = vld [vmem:[#allocation2 + $0x8] sm:$0xf]
      %v658 = vld [vmem:[#allocation2 + $0xc] sm:$0xf]
      %v660 = vsel %vm594, %v655, 0
      %v663 = vsel %vm594, %v647, 0
      %665 = vmatpush.bf16.xpose.msra.mxu0 0
      %666 = vmatpush.bf16.xpose.msra.mxu0 0
      %667 = vmatpush.bf16.xpose.msra.mxu0 0
      %668 = vmatpush.bf16.xpose.msra.mxu0 0
      %669 = vmatpush.bf16.xpose.msra.mxu0 0
      %670 = vmatpush.bf16.xpose.msra.mxu0 0
      %671 = vmatpush.bf16.xpose.msra.mxu0 0
      %672 = vmatpush.bf16.xpose.msra.mxu0 %v663
      %673 = vmatmul.bf16.gmra.mxu0 %v660
      %v674 = vpop.f32.mrf.mxu0
      %v675 = vadd.f32 0.0, %v674
      %v676 = vpop.f32.mrf.mxu0
      %677 = vdwg.mxu0
      %v679 = vsel %vm594, %v656, 0
      %v682 = vsel %vm594, %v648, 0
      %684 = vmatpush.bf16.xpose.msra.mxu0 0
      %685 = vmatpush.bf16.xpose.msra.mxu0 0
      %686 = vmatpush.bf16.xpose.msra.mxu0 0
      %687 = vmatpush.bf16.xpose.msra.mxu0 0
      %688 = vmatpush.bf16.xpose.msra.mxu0 0
      %689 = vmatpush.bf16.xpose.msra.mxu0 0
      %690 = vmatpush.bf16.xpose.msra.mxu0 0
      %691 = vmatpush.bf16.xpose.msra.mxu0 %v682
      %692 = vmatmul.bf16.gmra.mxu0 %v679
      %v693 = vpop.f32.mrf.mxu0
      %v694 = vadd.f32 0.0, %v693
      %v695 = vpop.f32.mrf.mxu0
      %696 = vdwg.mxu0
      %v698 = vsel %vm594, %v657, 0
      %v701 = vsel %vm594, %v649, 0
      %703 = vmatpush.bf16.xpose.msra.mxu0 0
      %704 = vmatpush.bf16.xpose.msra.mxu0 0
      %705 = vmatpush.bf16.xpose.msra.mxu0 0
      %706 = vmatpush.bf16.xpose.msra.mxu0 0
      %707 = vmatpush.bf16.xpose.msra.mxu0 0
      %708 = vmatpush.bf16.xpose.msra.mxu0 0
      %709 = vmatpush.bf16.xpose.msra.mxu0 0
      %710 = vmatpush.bf16.xpose.msra.mxu0 %v701
      %711 = vmatmul.bf16.gmra.mxu0 %v698
      %v712 = vpop.f32.mrf.mxu0
      %v713 = vadd.f32 0.0, %v712
      %v714 = vpop.f32.mrf.mxu0
      %715 = vdwg.mxu0
      %v717 = vsel %vm594, %v658, 0
      %v720 = vsel %vm594, %v650, 0
      %722 = vmatpush.bf16.xpose.msra.mxu0 0
      %723 = vmatpush.bf16.xpose.msra.mxu0 0
      %724 = vmatpush.bf16.xpose.msra.mxu0 0
      %725 = vmatpush.bf16.xpose.msra.mxu0 0
      %726 = vmatpush.bf16.xpose.msra.mxu0 0
      %727 = vmatpush.bf16.xpose.msra.mxu0 0
      %728 = vmatpush.bf16.xpose.msra.mxu0 0
      %729 = vmatpush.bf16.xpose.msra.mxu0 %v720
      %730 = vmatmul.bf16.gmra.mxu0 %v717
      %v731 = vpop.f32.mrf.mxu0
      %v732 = vadd.f32 0.0, %v731
      %v733 = vpop.f32.mrf.mxu0
      %734 = vdwg.mxu0
      %v735 = vld [vmem:[%s499] sm:$0x1]
      %vm736 = vcmp.ne.f32.partialorder %v735, 0.0
      %v737 = vsel %vm736, 1, 0
      %v738 = vperm.slane %v737, 0
      %vm739 = vcmp.eq.s32.totalorder %v738, 1
      %v740 = vsel %vm739, %v675, -1e+20
      %v741 = vsel %vm739, %v694, -1e+20
      %v742 = vsel %vm739, %v713, -1e+20
      %v743 = vsel %vm739, %v732, -1e+20
      %v744 = vld [vmem:[#allocation3] sm:$0xff]
      %v745 = vld [vmem:[#allocation3 + $0x8] sm:$0xff]
      %v746 = vld [vmem:[#allocation3 + $0x10] sm:$0xff]
      %v747 = vld [vmem:[#allocation3 + $0x18] sm:$0xff]
      %v748 = vsel %vm594, %v740, -inf
      %749 = vmax.xlane.f32.xlu0 %v748
      %v750 = vpop.xlane.xlu0 %749
      %v751 = vsel %vm594, %v741, -inf
      %752 = vmax.xlane.f32.xlu0 %v751
      %v753 = vpop.xlane.xlu0 %752
      %v754 = vsel %vm594, %v742, -inf
      %755 = vmax.xlane.f32.xlu0 %v754
      %v756 = vpop.xlane.xlu0 %755
      %v757 = vsel %vm594, %v743, -inf
      %758 = vmax.xlane.f32.xlu0 %v757
      %v759 = vpop.xlane.xlu0 %758
      %v760 = vmax.f32 %v744, %v750
      %v761 = vmax.f32 %v745, %v753
      %v762 = vmax.f32 %v746, %v756
      %v763 = vmax.f32 %v747, %v759
      %v764 = vsub.f32 %v744, %v760
      %v765 = vsub.f32 %v745, %v761
      %v766 = vsub.f32 %v746, %v762
      %v767 = vsub.f32 %v747, %v763
      %v768 = vmul.f32 %v764, 1.442695
      %v769 = vpow.pop %v768
      %v770 = vmul.f32 %v765, 1.442695
      %v771 = vpow.pop %v770
      %v772 = vmul.f32 %v766, 1.442695
      %v773 = vpow.pop %v772
      %v774 = vmul.f32 %v767, 1.442695
      %v775 = vpow.pop %v774
      %777 = vset.pattern.permute.xlu0 0
      %778 = vperm.xlu0 %777, %v760
      %v779 = vpop.permute.xlu0 %778
      %782 = vset.pattern.permute.xlu0 0
      %783 = vperm.xlu0 %782, %v761
      %v784 = vpop.permute.xlu0 %783
      %787 = vset.pattern.permute.xlu0 0
      %788 = vperm.xlu0 %787, %v762
      %v789 = vpop.permute.xlu0 %788
      %792 = vset.pattern.permute.xlu0 0
      %793 = vperm.xlu0 %792, %v763
      %v794 = vpop.permute.xlu0 %793
      %v796 = vsub.f32 %v740, %v779
      %v797 = vsub.f32 %v741, %v784
      %v798 = vsub.f32 %v742, %v789
      %v799 = vsub.f32 %v743, %v794
      %v800 = vmul.f32 %v796, 1.442695
      %v801 = vpow.pop %v800
      %v802 = vmul.f32 %v797, 1.442695
      %v803 = vpow.pop %v802
      %v804 = vmul.f32 %v798, 1.442695
      %v805 = vpow.pop %v804
      %v806 = vmul.f32 %v799, 1.442695
      %v807 = vpow.pop %v806
      %v808 = vld [vmem:[#allocation4] sm:$0xff]
      %v809 = vld [vmem:[#allocation4 + $0x8] sm:$0xff]
      %v810 = vld [vmem:[#allocation4 + $0x10] sm:$0xff]
      %v811 = vld [vmem:[#allocation4 + $0x18] sm:$0xff]
      %v812 = vmul.f32 %v769, %v808
      %v813 = vmul.f32 %v771, %v809
      %v814 = vmul.f32 %v773, %v810
      %v815 = vmul.f32 %v775, %v811
      %v816 = vsel %vm594, %v801, 0.0
      %817 = vadd.xlane.f32.xlu0 %v816
      %v818 = vpop.xlane.xlu0 %817
      %v819 = vsel %vm594, %v803, 0.0
      %820 = vadd.xlane.f32.xlu0 %v819
      %v821 = vpop.xlane.xlu0 %820
      %v822 = vsel %vm594, %v805, 0.0
      %823 = vadd.xlane.f32.xlu0 %v822
      %v824 = vpop.xlane.xlu0 %823
      %v825 = vsel %vm594, %v807, 0.0
      %826 = vadd.xlane.f32.xlu0 %v825
      %v827 = vpop.xlane.xlu0 %826
      %v828 = vadd.f32 %v812, %v818
      %v829 = vadd.f32 %v813, %v821
      %v830 = vadd.f32 %v814, %v824
      %v831 = vadd.f32 %v815, %v827
      %vm832 = vcmask 7168
      %833 = vst.msk [vmem:[#allocation4] sm:$0xff] %vm832, %v828
      %834 = vst.msk [vmem:[#allocation4 + $0x8] sm:$0xff] %vm832, %v829
      %835 = vst.msk [vmem:[#allocation4 + $0x10] sm:$0xff] %vm832, %v830
      %836 = vst.msk [vmem:[#allocation4 + $0x18] sm:$0xff] %vm832, %v831
      %v837 = vld [vmem:[#allocation5] sm:$0xff]
      %v838 = vld [vmem:[#allocation5 + $0x8] sm:$0xff]
      %v839 = vld [vmem:[#allocation5 + $0x10] sm:$0xff]
      %v840 = vld [vmem:[#allocation5 + $0x18] sm:$0xff]
      %842 = vset.pattern.permute.xlu0 0
      %843 = vperm.xlu0 %842, %v769
      %v844 = vpop.permute.xlu0 %843
      %847 = vset.pattern.permute.xlu0 0
      %848 = vperm.xlu0 %847, %v771
      %v849 = vpop.permute.xlu0 %848
      %852 = vset.pattern.permute.xlu0 0
      %853 = vperm.xlu0 %852, %v773
      %v854 = vpop.permute.xlu0 %853
      %857 = vset.pattern.permute.xlu0 0
      %858 = vperm.xlu0 %857, %v775
      %v859 = vpop.permute.xlu0 %858
      %v861 = vmul.f32 %v844, %v837
      %v862 = vmul.f32 %v849, %v838
      %v863 = vmul.f32 %v854, %v839
      %v864 = vmul.f32 %v859, %v840
      %v865 = vpack.c.bf16 %v801, %v801
      %v866 = vpack.c.bf16 %v803, %v803
      %v867 = vpack.c.bf16 %v805, %v805
      %v868 = vpack.c.bf16 %v807, %v807
      %v870 = vsel %vm594, %v865, 0
      %v873 = vsel %vm601, %v651, 0
      %875 = vmatpush.bf16.msra.mxu0 0
      %876 = vmatpush.bf16.msra.mxu0 0
      %877 = vmatpush.bf16.msra.mxu0 0
      %878 = vmatpush.bf16.msra.mxu0 0
      %879 = vmatpush.bf16.msra.mxu0 0
      %880 = vmatpush.bf16.msra.mxu0 0
      %881 = vmatpush.bf16.msra.mxu0 0
      %882 = vmatpush.bf16.msra.mxu0 %v873
      %883 = vmatmul.bf16.gmra.mxu0 %v870
      %v884 = vpop.f32.mrf.mxu0
      %v885 = vadd.f32 0.0, %v884
      %v886 = vpop.f32.mrf.mxu0
      %887 = vdwg.mxu0
      %v889 = vsel %vm594, %v866, 0
      %v892 = vsel %vm601, %v652, 0
      %894 = vmatpush.bf16.msra.mxu0 0
      %895 = vmatpush.bf16.msra.mxu0 0
      %896 = vmatpush.bf16.msra.mxu0 0
      %897 = vmatpush.bf16.msra.mxu0 0
      %898 = vmatpush.bf16.msra.mxu0 0
      %899 = vmatpush.bf16.msra.mxu0 0
      %900 = vmatpush.bf16.msra.mxu0 0
      %901 = vmatpush.bf16.msra.mxu0 %v892
      %902 = vmatmul.bf16.gmra.mxu0 %v889
      %v903 = vpop.f32.mrf.mxu0
      %v904 = vadd.f32 0.0, %v903
      %v905 = vpop.f32.mrf.mxu0
      %906 = vdwg.mxu0
      %v908 = vsel %vm594, %v867, 0
      %v911 = vsel %vm601, %v653, 0
      %913 = vmatpush.bf16.msra.mxu0 0
      %914 = vmatpush.bf16.msra.mxu0 0
      %915 = vmatpush.bf16.msra.mxu0 0
      %916 = vmatpush.bf16.msra.mxu0 0
      %917 = vmatpush.bf16.msra.mxu0 0
      %918 = vmatpush.bf16.msra.mxu0 0
      %919 = vmatpush.bf16.msra.mxu0 0
      %920 = vmatpush.bf16.msra.mxu0 %v911
      %921 = vmatmul.bf16.gmra.mxu0 %v908
      %v922 = vpop.f32.mrf.mxu0
      %v923 = vadd.f32 0.0, %v922
      %v924 = vpop.f32.mrf.mxu0
      %925 = vdwg.mxu0
      %v927 = vsel %vm594, %v868, 0
      %v930 = vsel %vm601, %v654, 0
      %932 = vmatpush.bf16.msra.mxu0 0
      %933 = vmatpush.bf16.msra.mxu0 0
      %934 = vmatpush.bf16.msra.mxu0 0
      %935 = vmatpush.bf16.msra.mxu0 0
      %936 = vmatpush.bf16.msra.mxu0 0
      %937 = vmatpush.bf16.msra.mxu0 0
      %938 = vmatpush.bf16.msra.mxu0 0
      %939 = vmatpush.bf16.msra.mxu0 %v930
      %940 = vmatmul.bf16.gmra.mxu0 %v927
      %v941 = vpop.f32.mrf.mxu0
      %v942 = vadd.f32 0.0, %v941
      %v943 = vpop.f32.mrf.mxu0
      %944 = vdwg.mxu0
      %v945 = vadd.f32 %v861, %v885
      %v946 = vadd.f32 %v862, %v904
      %v947 = vadd.f32 %v863, %v923
      %v948 = vadd.f32 %v864, %v942
      %949 = vst.msk [vmem:[#allocation5] sm:$0xff] %vm594, %v945
      %950 = vst.msk [vmem:[#allocation5 + $0x8] sm:$0xff] %vm594, %v946
      %951 = vst.msk [vmem:[#allocation5 + $0x10] sm:$0xff] %vm594, %v947
      %952 = vst.msk [vmem:[#allocation5 + $0x18] sm:$0xff] %vm594, %v948
      %953 = vst.msk [vmem:[#allocation3] sm:$0xff] %vm832, %v760
      %954 = vst.msk [vmem:[#allocation3 + $0x8] sm:$0xff] %vm832, %v761
      %955 = vst.msk [vmem:[#allocation3 + $0x10] sm:$0xff] %vm832, %v762
      %956 = vst.msk [vmem:[#allocation3 + $0x18] sm:$0xff] %vm832, %v763
      // Predicated region
      $region69: #{transformer_forward.11} parent=63 // pred_check
        %p957 = pneg %p508
      $region70: #{transformer_forward.11} parent=63 // pred_check_branch
        %959 = sbr.rel (%p957) target = $region72
      $region71: #{transformer_forward.11} parent=63 // pred_region
        %v960 = vld [vmem:[#allocation5] sm:$0xff]
        %v961 = vld [vmem:[#allocation5 + $0x8] sm:$0xff]
        %v962 = vld [vmem:[#allocation5 + $0x10] sm:$0xff]
        %v963 = vld [vmem:[#allocation5 + $0x18] sm:$0xff]
        %v964 = vld [vmem:[#allocation4] sm:$0xff]
        %v965 = vld [vmem:[#allocation4 + $0x8] sm:$0xff]
        %v966 = vld [vmem:[#allocation4 + $0x10] sm:$0xff]
        %v967 = vld [vmem:[#allocation4 + $0x18] sm:$0xff]
        %v968 = vrcp.pop %v964
        %v969 = vrcp.pop %v965
        %v970 = vrcp.pop %v966
        %v971 = vrcp.pop %v967
        %973 = vset.pattern.permute.xlu0 0
        %974 = vperm.xlu0 %973, %v968
        %v975 = vpop.permute.xlu0 %974
        %978 = vset.pattern.permute.xlu0 0
        %979 = vperm.xlu0 %978, %v969
        %v980 = vpop.permute.xlu0 %979
        %983 = vset.pattern.permute.xlu0 0
        %984 = vperm.xlu0 %983, %v970
        %v985 = vpop.permute.xlu0 %984
        %988 = vset.pattern.permute.xlu0 0
        %989 = vperm.xlu0 %988, %v971
        %v990 = vpop.permute.xlu0 %989
        %v992 = vmul.f32 %v960, %v975
        %v993 = vmul.f32 %v961, %v980
        %v994 = vmul.f32 %v962, %v985
        %v995 = vmul.f32 %v963, %v990
        %v996 = vpack.c.bf16 %v992, %v992
        %v997 = vpack.c.bf16 %v993, %v993
        %v998 = vpack.c.bf16 %v994, %v994
        %v999 = vpack.c.bf16 %v995, %v995
        %v1000 = vld [vmem:[%s7] sm:$0xf]
        %v1001 = vld [vmem:[%s7 + $0x4] sm:$0xf]
        %v1002 = vld [vmem:[%s7 + $0x8] sm:$0xf]
        %v1003 = vld [vmem:[%s7 + $0xc] sm:$0xf]
        %v1005 = vsel %vm594, %v996, 0
        %v1008 = vsel %vm601, %v1000, 0
        %1010 = vmatpush.bf16.msra.mxu0 0
        %1011 = vmatpush.bf16.msra.mxu0 0
        %1012 = vmatpush.bf16.msra.mxu0 0
        %1013 = vmatpush.bf16.msra.mxu0 0
        %1014 = vmatpush.bf16.msra.mxu0 0
        %1015 = vmatpush.bf16.msra.mxu0 0
        %1016 = vmatpush.bf16.msra.mxu0 0
        %1017 = vmatpush.bf16.msra.mxu0 %v1008
        %1018 = vmatmul.bf16.gmra.mxu0 %v1005
        %v1019 = vpop.f32.mrf.mxu0
        %v1020 = vadd.f32 0.0, %v1019
        %v1021 = vpop.f32.mrf.mxu0
        %1022 = vdwg.mxu0
        %v1024 = vsel %vm594, %v997, 0
        %v1027 = vsel %vm601, %v1001, 0
        %1029 = vmatpush.bf16.msra.mxu0 0
        %1030 = vmatpush.bf16.msra.mxu0 0
        %1031 = vmatpush.bf16.msra.mxu0 0
        %1032 = vmatpush.bf16.msra.mxu0 0
        %1033 = vmatpush.bf16.msra.mxu0 0
        %1034 = vmatpush.bf16.msra.mxu0 0
        %1035 = vmatpush.bf16.msra.mxu0 0
        %1036 = vmatpush.bf16.msra.mxu0 %v1027
        %1037 = vmatmul.bf16.gmra.mxu0 %v1024
        %v1038 = vpop.f32.mrf.mxu0
        %v1039 = vadd.f32 0.0, %v1038
        %v1040 = vpop.f32.mrf.mxu0
        %1041 = vdwg.mxu0
        %v1043 = vsel %vm594, %v998, 0
        %v1046 = vsel %vm601, %v1002, 0
        %1048 = vmatpush.bf16.msra.mxu0 0
        %1049 = vmatpush.bf16.msra.mxu0 0
        %1050 = vmatpush.bf16.msra.mxu0 0
        %1051 = vmatpush.bf16.msra.mxu0 0
        %1052 = vmatpush.bf16.msra.mxu0 0
        %1053 = vmatpush.bf16.msra.mxu0 0
        %1054 = vmatpush.bf16.msra.mxu0 0
        %1055 = vmatpush.bf16.msra.mxu0 %v1046
        %1056 = vmatmul.bf16.gmra.mxu0 %v1043
        %v1057 = vpop.f32.mrf.mxu0
        %v1058 = vadd.f32 0.0, %v1057
        %v1059 = vpop.f32.mrf.mxu0
        %1060 = vdwg.mxu0
        %v1062 = vsel %vm594, %v999, 0
        %v1065 = vsel %vm601, %v1003, 0
        %1067 = vmatpush.bf16.msra.mxu0 0
        %1068 = vmatpush.bf16.msra.mxu0 0
        %1069 = vmatpush.bf16.msra.mxu0 0
        %1070 = vmatpush.bf16.msra.mxu0 0
        %1071 = vmatpush.bf16.msra.mxu0 0
        %1072 = vmatpush.bf16.msra.mxu0 0
        %1073 = vmatpush.bf16.msra.mxu0 0
        %1074 = vmatpush.bf16.msra.mxu0 %v1065
        %1075 = vmatmul.bf16.gmra.mxu0 %v1062
        %v1076 = vpop.f32.mrf.mxu0
        %v1077 = vadd.f32 0.0, %v1076
        %v1078 = vpop.f32.mrf.mxu0
        %1079 = vdwg.mxu0
        %vm1080 = vcmask 261120
        %v1081 = vsel %vm1080, %v1020, 0.0
        %v1082 = vsel %vm1080, %v1039, 0.0
        %v1083 = vadd.f32 %v1081, %v1082
        %v1084 = vsel %vm1080, %v1058, 0.0
        %v1085 = vadd.f32 %v1083, %v1084
        %v1086 = vsel %vm1080, %v1077, 0.0
        %v1087 = vadd.f32 %v1085, %v1086
        %v1088 = vld [vmem:[%s8] sm:$0x1]
        %v1090 = vperm.slane %v1088, 0
        %v1092 = vadd.f32 %v1087, %v1090
        %v1093 = vld [vmem:[%s477] sm:$0xf]
        %v1094 = vunpack.c.l.bf16 %v1093
        %v1095 = vadd.f32 %v1092, %v1094
        %v1096 = vsel %vm1080, %v1095, 0.0
        %1097 = vadd.xlane.f32.xlu0 %v1096
        %v1098 = vpop.xlane.xlu0 %1097
        %v1099 = vrcp.pop 32.0
        %v1100 = vmul.f32 32.0, %v1099
        %v1101 = vsub.f32 1.0, %v1100
        %v1102 = vmul.f32 %v1099, %v1101
        %v1103 = vadd.f32 %v1099, %v1102
        %vm1104 = vweird.f32 %v1099
        %v1105 = vsel %vm1104, %v1099, %v1103
        %v1106 = vmul.f32 %v1098, %v1105
        %v1107 = vsub.f32 %v1095, %v1106
        %v1108 = vmul.f32 %v1107, %v1107
        %v1109 = vsel %vm1080, %v1108, 0.0
        %1110 = vadd.xlane.f32.xlu0 %v1109
        %v1111 = vpop.xlane.xlu0 %1110
        %v1112 = vmul.f32 %v1111, %v1105
        %v1113 = vadd.f32 %v1112, 1e-05
        %v1114 = vrsqrt.pop %v1113
        %v1115 = vmul.f32 %v1114, %v1113
        %v1116 = vmul.f32 %v1115, %v1114
        %v1117 = vmul.f32 0.5, %v1116
        %v1118 = vsub.f32 1.5, %v1117
        %v1119 = vmul.f32 %v1114, %v1118
        %vm1120 = vweird.f32 %v1113
        %vm1121 = vweird.f32 %v1114
        %vm1122 = vmor %vm1120, %vm1121
        %v1123 = vsel %vm1122, %v1114, %v1119
        %v1124 = vmul.f32 %v1107, %v1123
        %v1125 = vld [vmem:[%s9] sm:$0x1]
        %v1127 = vperm.slane %v1125, 0
        %v1129 = vmul.f32 %v1124, %v1127
        %v1130 = vld [vmem:[%s10] sm:$0x1]
        %v1132 = vperm.slane %v1130, 0
        %v1134 = vadd.f32 %v1129, %v1132
        %v1135 = vpack.c.bf16 %v1134, %v1134
        %vm1136 = vcmask 257024
        %1137 = vst.msk [vmem:[%s506] sm:$0xf] %vm1136, %v1135
      $region72: #{transformer_forward.11} parent=63 // pred_fallthru
        _
      %p1138 = scmp.lt.s32.totalorder %s27, 1
      %s1139 = scalar_select %p1138, %s27, 1
      %p1140 = scmp.lt.s32.totalorder %s28, 0
      %s1141 = scalar_select %p1140, %s28, 0
      %s1142 = sadd.s32 %s1141, %s1139
      %s1143 = smul.addr %s1142, 4
      %s1144 = scalar_lea.vmem %s11, %s1143
      // Predicated region
      $region73: #{transformer_forward.11} parent=63 // pred_check
        %p1145 = pneg %p320
      $region74: #{transformer_forward.11} parent=63 // pred_check_branch
        %1147 = sbr.rel (%p1145) target = $region76
      $region75: #{transformer_forward.11} parent=63 // pred_region
        _
      $region76: #{transformer_forward.11} parent=63 // pred_fallthru
        _
    $region64: #{transformer_forward.11} parent=5 // pred_fallthru
      _
    %p1148 = scmp.le.s32.totalorder 2, %s17
    // Predicated region
    $region77: #{transformer_forward.11} parent=5 // pred_check
      %p1149 = pneg %p1148
    $region78: #{transformer_forward.11} parent=5 // pred_check_branch
      %1151 = sbr.rel (%p1149) target = $region80
    $region79: #{transformer_forward.11} parent=5 // pred_region
      %s1152 = ssub.s32 %s17, 2
      // Predicated region
      $region81: #{transformer_forward.11} parent=79 // pred_check
        %p1153 = pneg %p326
      $region82: #{transformer_forward.11} parent=79 // pred_check_branch
        %1155 = sbr.rel (%p1153) target = $region84
      $region83: #{transformer_forward.11} parent=79 // pred_region
        %p1156 = scmp.lt.s32.totalorder %s30, 1
        %s1157 = scalar_select %p1156, %s30, 1
        %p1158 = scmp.lt.s32.totalorder %s31, 0
        %s1159 = scalar_select %p1158, %s31, 0
        %s1160 = sadd.s32 %s1159, %s1157
        %s1161 = smul.addr %s1160, 4
        %s1162 = scalar_lea.vmem %s11, %s1161
      $region84: #{transformer_forward.11} parent=79 // pred_fallthru
        _
    $region80: #{transformer_forward.11} parent=5 // pred_fallthru
      _
  $region6: #{transformer_forward.11} parent=0 // loop_footer
    %s21 = sadd.s32 1, %s17
  $region7: #{transformer_forward.11} parent=0 // loop_footer_branch
    %16 = sbr.rel target = $region3
  $region8: #{transformer_forward.11} parent=0 // loop_exit
    _

</llo_original>
